<compile_context>
chip_gen: v6e
topology: v6e:2x2x1
jax: 0.10.0
libtpu: 0.0.40
codegen_flags: <defaults>
</compile_context>

<pallas_src>
import jax
import jax.numpy as jnp
from jax import lax
from jax.experimental import pallas as pl
from jax.experimental.pallas import tpu as pltpu


# ----------------------------------------------------------------------------
# Pallas kernel: full autoencoder forward for one batch block.
# ----------------------------------------------------------------------------
def _lstm_ae_kernel(x_ref,        # (T, Bb, Dp)   f32 time-major, zero-padded input block
                    wih_e_ref,    # (Dp, 4Hp)     bf16
                    whh_e_ref,    # (Hp, 4Hp)     bf16
                    b_e_ref,      # (1, 4Hp)      f32  = b_ih + b_hh (encoder), gate-padded
                    wlat_ref,     # (Hp, Lp)      bf16
                    blat_ref,     # (1, Lp)       f32
                    wih_d_ref,    # (Lp, 4Hp)     bf16
                    whh_d_ref,    # (Hp, 4Hp)     bf16
                    b_d_ref,      # (1, 4Hp)      f32  = b_ih + b_hh (decoder), gate-padded
                    wout_ref,     # (Hp, Dp)      bf16
                    bout_ref,     # (1, Dp)       f32
                    recon_ref,    # out: (T, Bb, Dp) f32
                    z_ref,        # out: (Bb, Lp)    f32
                    xproj_ref,    # scratch: (T, Bb, 4Hp) f32  hoisted encoder input proj
                    hdec_ref,     # scratch: (T, Bb, Hp)  f32  decoder hidden states
                    zc_ref):      # scratch: (Bb, 4Hp)    f32  decoder constant input contrib
    T, Bb, Dp = x_ref.shape
    Hp = whh_e_ref.shape[0]
    # Full unroll only while T is small; partial unroll keeps LLO scheduling benefits
    # without instruction-memory / live-range blow-up at long sequences.
    unroll = True if T <= 16 else 4

    # ---- encoder input projection, hoisted out of the recurrence:
    #      one big bf16 MXU matmul with f32 accumulation, encoder bias folded in ----
    x2d = x_ref[...].reshape(T * Bb, Dp).astype(jnp.bfloat16)
    xproj = (jnp.dot(x2d, wih_e_ref[...], preferred_element_type=jnp.float32)
             + b_e_ref[...])
    xproj_ref[...] = xproj.reshape(T, Bb, 4 * Hp)

    def sigmoid(v):
        # Exact rewrite of sigmoid via tanh: removes the EUP exp + VPU divide
        # from the serial per-step chain.
        return 0.5 * jnp.tanh(0.5 * v) + 0.5

    def lstm_gates(pre, c):
        # PyTorch gate order i, f, g, o.  Hp == 128 -> each slice is a whole
        # 128-lane vreg block (no cross-lane relayout).
        i = sigmoid(pre[:, 0 * Hp:1 * Hp])
        f = sigmoid(pre[:, 1 * Hp:2 * Hp])
        g = jnp.tanh(pre[:, 2 * Hp:3 * Hp])
        o = sigmoid(pre[:, 3 * Hp:4 * Hp])
        c_new = f * c + i * g
        h_new = o * jnp.tanh(c_new)
        return h_new, c_new

    h0 = jnp.zeros((Bb, Hp), jnp.float32)
    c0 = jnp.zeros((Bb, Hp), jnp.float32)

    # ---------------- encoder LSTM (recurrent part only: h @ Whh) ----------------
    # whh_e_ref is read inside the step so the (Hp,4Hp) weight streams from VMEM
    # into the MXU instead of being pinned live across the unrolled loop.
    def enc_step(t, carry):
        h, c = carry
        pre = xproj_ref[t] + jnp.dot(h.astype(jnp.bfloat16), whh_e_ref[...],
                                     preferred_element_type=jnp.float32)
        return lstm_gates(pre, c)

    h_enc, _ = lax.fori_loop(0, T, enc_step, (h0, c0), unroll=unroll)

    # ---------------- latent projection (lane-dense Lp = 128) ----------------
    z = (jnp.dot(h_enc.astype(jnp.bfloat16), wlat_ref[...],
                 preferred_element_type=jnp.float32) + blat_ref[...])      # (Bb, Lp)
    z_ref[...] = z

    # Decoder input is z at every timestep -> its input contribution (incl. bias)
    # is constant across time; compute it once into a small VMEM scratch so it is
    # not forced live (64 vregs at Bb=128) across the unrolled decoder loop.
    zc_ref[...] = (jnp.dot(z.astype(jnp.bfloat16), wih_d_ref[...],
                           preferred_element_type=jnp.float32) + b_d_ref[...])

    # ---------------- decoder LSTM ----------------
    def dec_step(t, carry):
        h, c = carry
        pre = zc_ref[...] + jnp.dot(h.astype(jnp.bfloat16), whh_d_ref[...],
                                    preferred_element_type=jnp.float32)
        h_new, c_new = lstm_gates(pre, c)
        hdec_ref[t] = h_new
        return h_new, c_new

    lax.fori_loop(0, T, dec_step, (h0, c0), unroll=unroll)

    # ---- output head, hoisted into one big bf16 MXU matmul; lane-dense store ----
    hdec2d = hdec_ref[...].reshape(T * Bb, Hp).astype(jnp.bfloat16)
    recon = (jnp.dot(hdec2d, wout_ref[...], preferred_element_type=jnp.float32)
             + bout_ref[...])
    recon_ref[...] = recon.reshape(T, Bb, Dp)


# ----------------------------------------------------------------------------
# Padding helpers (all zero padding; exactness preserved: padded hidden/cell
# units stay identically 0 through the recurrence, padded rows/cols of the
# weights contribute nothing to the real outputs).
# ----------------------------------------------------------------------------
def _round_up(n, m):
    return ((n + m - 1) // m) * m


def _pad_axis(a, axis, new_size):
    pad = new_size - a.shape[axis]
    if pad == 0:
        return a
    cfg = [(0, 0)] * a.ndim
    cfg[axis] = (0, pad)
    return jnp.pad(a, cfg)


def _pad_gate_mat(w, in_pad, hp):
    """(in, 4H) with gate blocks [i|f|g|o] -> (in_pad, 4*hp), each gate zero-padded."""
    n_in, h4 = w.shape
    h = h4 // 4
    w = w.reshape(n_in, 4, h)
    w = _pad_axis(_pad_axis(w, 0, in_pad), 2, hp)
    return w.reshape(in_pad, 4 * hp)


# ----------------------------------------------------------------------------
# Wrapper
# ----------------------------------------------------------------------------
def lstm_autoencoder_forward(x, params):
    """x: (B, T, input_dim) float32.  Returns (recon (B,T,input_dim), z (B,latent))."""
    B, T, Din = x.shape
    H = params["whh_e"].shape[0]
    L = params["wlat"].shape[1]

    Hp = _round_up(H, 128)            # lane-aligned hidden (gate slices = whole vregs)
    Dp = _round_up(Din, 128)          # lane-dense recon slab
    Lp = _round_up(L, 128)            # lane-dense z / z@Wih_d contraction
    # Batch block: 128 rows per grid step when the batch is large (fills MXU rows,
    # v7x megacore sharding); otherwise a single sublane-aligned block.
    Bb = 128 if B >= 128 else _round_up(max(B, 8), 8)
    Bp = _round_up(max(B, Bb), Bb)
    nb = Bp // Bb

    bf16 = jnp.bfloat16
    # ---- pad parameters (gate blocks padded per-gate); matmul weights -> bf16 ----
    wih_e = _pad_gate_mat(params["wih_e"], Dp, Hp).astype(bf16)
    whh_e = _pad_gate_mat(params["whh_e"], Hp, Hp).astype(bf16)
    b_e = _pad_gate_mat(params["b_e"], 1, Hp)
    wlat = _pad_axis(_pad_axis(params["wlat"], 0, Hp), 1, Lp).astype(bf16)
    blat = _pad_axis(params["blat"], 1, Lp)
    wih_d = _pad_gate_mat(params["wih_d"], Lp, Hp).astype(bf16)
    whh_d = _pad_gate_mat(params["whh_d"], Hp, Hp).astype(bf16)
    b_d = _pad_gate_mat(params["b_d"], 1, Hp)
    wout = _pad_axis(_pad_axis(params["wout"], 0, Hp), 1, Dp).astype(bf16)
    bout = _pad_axis(params["bout"], 1, Dp)

    # ---- x: (B,T,Din) -> time-major, batch/feature zero-padded (kept 3-D) ----
    x_tm = jnp.transpose(x, (1, 0, 2))                     # (T, B, Din)
    x_tm = _pad_axis(_pad_axis(x_tm, 1, Bp), 2, Dp)        # (T, Bp, Dp)

    args = (x_tm, wih_e, whh_e, b_e, wlat, blat, wih_d, whh_d, b_d, wout, bout)

    def whole(a):
        nd = a.ndim
        return pl.BlockSpec(a.shape, lambda j, _nd=nd: (0,) * _nd)

    in_specs = ([pl.BlockSpec((T, Bb, Dp), lambda j: (0, j, 0))]
                + [whole(a) for a in args[1:]])
    out_specs = (pl.BlockSpec((T, Bb, Dp), lambda j: (0, j, 0)),
                 pl.BlockSpec((Bb, Lp), lambda j: (j, 0)))

    recon_pad, z_pad = pl.pallas_call(
        _lstm_ae_kernel,
        grid=(nb,),
        out_shape=(
            jax.ShapeDtypeStruct((T, Bp, Dp), jnp.float32),
            jax.ShapeDtypeStruct((Bp, Lp), jnp.float32),
        ),
        in_specs=in_specs,
        out_specs=out_specs,
        scratch_shapes=[
            pltpu.VMEM((T, Bb, 4 * Hp), jnp.float32),      # hoisted encoder input proj
            pltpu.VMEM((T, Bb, Hp), jnp.float32),          # decoder hidden states
            pltpu.VMEM((Bb, 4 * Hp), jnp.float32),         # decoder constant input contrib
        ],
        compiler_params=pltpu.CompilerParams(
            dimension_semantics=("parallel",),             # batch blocks independent
            vmem_limit_bytes=48 * 1024 * 1024,             # explicit, with v7x headroom
        ),
    )(*args)

    recon = jnp.transpose(recon_pad[:, :B, :Din], (1, 0, 2))   # back to (B, T, Din)
    z = z_pad[:B, :L]
    return recon, z


# ----------------------------------------------------------------------------
# Deterministic parameter construction (mimics PyTorch default U(-1/sqrt(H), 1/sqrt(H)))
# ----------------------------------------------------------------------------
def init_params(key, input_dim, hidden_dim, latent_dim):
    ks = jax.random.split(key, 16)
    kH = 1.0 / jnp.sqrt(hidden_dim)

    def u(k, shape, bound):
        return jax.random.uniform(k, shape, jnp.float32, -bound, bound)

    H4 = 4 * hidden_dim
    # Encoder LSTM (weights stored transposed: (in, 4H)); bias = b_ih + b_hh.
    wih_e = u(ks[0], (input_dim, H4), kH)
    whh_e = u(ks[1], (hidden_dim, H4), kH)
    b_e = u(ks[2], (1, H4), kH) + u(ks[3], (1, H4), kH)
    # Latent linear (H -> L).
    wlat = u(ks[4], (hidden_dim, latent_dim), kH)
    blat = u(ks[5], (1, latent_dim), kH)
    # Decoder LSTM (L -> H).
    wih_d = u(ks[6], (latent_dim, H4), kH)
    whh_d = u(ks[7], (hidden_dim, H4), kH)
    b_d = u(ks[8], (1, H4), kH) + u(ks[9], (1, H4), kH)
    # Output linear (H -> input_dim).
    wout = u(ks[10], (hidden_dim, input_dim), kH)
    bout = u(ks[11], (1, input_dim), kH)
    return dict(wih_e=wih_e, whh_e=whh_e, b_e=b_e, wlat=wlat, blat=blat,
                wih_d=wih_d, whh_d=whh_d, b_d=b_d, wout=wout, bout=bout)


# ----------------------------------------------------------------------------
# Pure-JAX f32 reference (same math, lax.scan) for a correctness check.
# ----------------------------------------------------------------------------
def reference_forward(x, p):
    B, T, Din = x.shape
    H = p["whh_e"].shape[0]

    def cell(w_ih, w_hh, b):
        def step(carry, x_t):
            h, c = carry
            pre = x_t @ w_ih + h @ w_hh + b
            i = jax.nn.sigmoid(pre[:, 0 * H:1 * H])
            f = jax.nn.sigmoid(pre[:, 1 * H:2 * H])
            g = jnp.tanh(pre[:, 2 * H:3 * H])
            o = jax.nn.sigmoid(pre[:, 3 * H:4 * H])
            c = f * c + i * g
            h = o * jnp.tanh(c)
            return (h, c), h
        return step

    h0 = jnp.zeros((B, H), jnp.float32)
    c0 = jnp.zeros((B, H), jnp.float32)
    x_tm = jnp.transpose(x, (1, 0, 2))
    (h_enc, _), _ = lax.scan(cell(p["wih_e"], p["whh_e"], p["b_e"]), (h0, c0), x_tm)
    z = h_enc @ p["wlat"] + p["blat"]
    dec_in = jnp.broadcast_to(z[None, :, :], (T,) + z.shape)
    (_, _), dec_h = lax.scan(cell(p["wih_d"], p["whh_d"], p["b_d"]), (h0, c0), dec_in)
    recon = dec_h @ p["wout"] + p["bout"]                      # (T, B, Din)
    return jnp.transpose(recon, (1, 0, 2)), z


if __name__ == "__main__":
    B, T = 2, 8
    input_dim, hidden_dim, latent_dim = 16, 32, 8

    key = jax.random.PRNGKey(0)
    kx, kp = jax.random.split(key)
    x = jax.random.normal(kx, (B, T, input_dim), jnp.float32)
    params = init_params(kp, input_dim, hidden_dim, latent_dim)

    recon, z = jax.jit(lstm_autoencoder_forward)(x, params)
    jax.block_until_ready((recon, z))

    recon_ref, z_ref = reference_forward(x, params)
    assert recon.shape == (B, T, input_dim) and z.shape == (B, latent_dim)
    # Kernel uses bf16 MXU operands with f32 accumulation -> relaxed tolerance vs
    # the pure-f32 reference.
    assert jnp.allclose(recon, recon_ref, atol=2e-2, rtol=2e-2)
    assert jnp.allclose(z, z_ref, atol=2e-2, rtol=2e-2)

    print("KERNEL_OK")
</pallas_src>

<mosaic_0001>
module attributes {stable_mosaic.version = 11 : i64} {
  func.func @_lstm_ae_kernel(%arg0: i32, %arg1: memref<8x8x128xf32, #tpu.memory_space<vmem>>, %arg2: memref<128x512xbf16, #tpu.memory_space<vmem>>, %arg3: memref<128x512xbf16, #tpu.memory_space<vmem>>, %arg4: memref<1x512xf32, #tpu.memory_space<vmem>>, %arg5: memref<128x128xbf16, #tpu.memory_space<vmem>>, %arg6: memref<1x128xf32, #tpu.memory_space<vmem>>, %arg7: memref<128x512xbf16, #tpu.memory_space<vmem>>, %arg8: memref<128x512xbf16, #tpu.memory_space<vmem>>, %arg9: memref<1x512xf32, #tpu.memory_space<vmem>>, %arg10: memref<128x128xbf16, #tpu.memory_space<vmem>>, %arg11: memref<1x128xf32, #tpu.memory_space<vmem>>, %arg12: memref<8x8x128xf32, #tpu.memory_space<vmem>>, %arg13: memref<8x128xf32, #tpu.memory_space<vmem>>, %arg14: memref<8x8x512xf32, #tpu.memory_space<vmem>>, %arg15: memref<8x8x128xf32, #tpu.memory_space<vmem>>, %arg16: memref<8x512xf32, #tpu.memory_space<vmem>>) attributes {dimension_semantics = [#tpu.dimension_semantics<parallel>], iteration_bounds = array<i64: 1>, scalar_prefetch = 0 : i64, scratch_operands = 3 : i64, tpu.core_type = #tpu.core_type<tc>, window_params = [{transform_indices = @transform_0, window_bounds = array<i64: 8, 8, 128>}, {pipeline_mode = #tpu.pipeline_mode<synchronous>, transform_indices = @transform_1, window_bounds = array<i64: 128, 512>}, {pipeline_mode = #tpu.pipeline_mode<synchronous>, transform_indices = @transform_2, window_bounds = array<i64: 128, 512>}, {pipeline_mode = #tpu.pipeline_mode<synchronous>, transform_indices = @transform_3, window_bounds = array<i64: 1, 512>}, {pipeline_mode = #tpu.pipeline_mode<synchronous>, transform_indices = @transform_4, window_bounds = array<i64: 128, 128>}, {pipeline_mode = #tpu.pipeline_mode<synchronous>, transform_indices = @transform_5, window_bounds = array<i64: 1, 128>}, {pipeline_mode = #tpu.pipeline_mode<synchronous>, transform_indices = @transform_6, window_bounds = array<i64: 128, 512>}, {pipeline_mode = #tpu.pipeline_mode<synchronous>, transform_indices = @transform_7, window_bounds = array<i64: 128, 512>}, {pipeline_mode = #tpu.pipeline_mode<synchronous>, transform_indices = @transform_8, window_bounds = array<i64: 1, 512>}, {pipeline_mode = #tpu.pipeline_mode<synchronous>, transform_indices = @transform_9, window_bounds = array<i64: 128, 128>}, {pipeline_mode = #tpu.pipeline_mode<synchronous>, transform_indices = @transform_10, window_bounds = array<i64: 1, 128>}, {transform_indices = @transform_11, window_bounds = array<i64: 8, 8, 128>}, {transform_indices = @transform_12, window_bounds = array<i64: 8, 128>}]} {
    %c0 = arith.constant 0 : index
    %c0_0 = arith.constant 0 : index
    %c0_1 = arith.constant 0 : index
    %0 = vector.load %arg1[%c0, %c0_0, %c0_1] : memref<8x8x128xf32, #tpu.memory_space<vmem>>, vector<8x8x128xf32>
    %1 = vector.shape_cast %0 : vector<8x8x128xf32> to vector<64x128xf32>
    %2 = arith.truncf %1 : vector<64x128xf32> to vector<64x128xbf16>
    %c0_2 = arith.constant 0 : index
    %c0_3 = arith.constant 0 : index
    %3 = vector.load %arg2[%c0_2, %c0_3] : memref<128x512xbf16, #tpu.memory_space<vmem>>, vector<128x512xbf16>
    %cst = arith.constant dense<0.000000e+00> : vector<64x512xf32>
    %4 = tpu.matmul %2, %3, %cst {dimension_numbers = #tpu.dot_dimension_numbers<[1], [0], [0], [1], [0, 0, 1, 1], [], []>} : vector<64x128xbf16>, vector<128x512xbf16>, vector<64x512xf32> -> vector<64x512xf32>
    %c0_4 = arith.constant 0 : index
    %c0_5 = arith.constant 0 : index
    %5 = vector.load %arg4[%c0_4, %c0_5] : memref<1x512xf32, #tpu.memory_space<vmem>>, vector<1x512xf32>
    %6 = vector.broadcast %5 : vector<1x512xf32> to vector<64x512xf32>
    %7 = arith.addf %4, %6 : vector<64x512xf32>
    %8 = vector.shape_cast %7 : vector<64x512xf32> to vector<8x8x512xf32>
    %c0_6 = arith.constant 0 : index
    %c0_7 = arith.constant 0 : index
    %c0_8 = arith.constant 0 : index
    %9 = vector.load %arg14[%c0_6, %c0_7, %c0_8] : memref<8x8x512xf32, #tpu.memory_space<vmem>>, vector<8x8x512xf32>
    tpu.vector_store %arg14[%c0_6, %c0_7, %c0_8], %8 {strides = array<i32>} : memref<8x8x512xf32, #tpu.memory_space<vmem>>, vector<8x8x512xf32>,
    %cst_9 = arith.constant 0.000000e+00 : f32
    %10 = vector.broadcast %cst_9 : f32 to vector<8x128xf32>
    %cst_10 = arith.constant 0.000000e+00 : f32
    %11 = vector.broadcast %cst_10 : f32 to vector<8x128xf32>
    %c0_i32 = arith.constant 0 : i32
    %12 = arith.index_cast %c0_i32 : i32 to index
    %c0_11 = arith.constant 0 : index
    %c0_12 = arith.constant 0 : index
    %13 = vector.load %arg14[%12, %c0_11, %c0_12] : memref<8x8x512xf32, #tpu.memory_space<vmem>>, vector<1x8x512xf32>
    %14 = vector.shape_cast %13 : vector<1x8x512xf32> to vector<8x512xf32>
    %15 = arith.truncf %10 : vector<8x128xf32> to vector<8x128xbf16>
    %c0_13 = arith.constant 0 : index
    %c0_14 = arith.constant 0 : index
    %16 = vector.load %arg3[%c0_13, %c0_14] : memref<128x512xbf16, #tpu.memory_space<vmem>>, vector<128x512xbf16>
    %cst_15 = arith.constant dense<0.000000e+00> : vector<8x512xf32>
    %17 = tpu.matmul %15, %16, %cst_15 {dimension_numbers = #tpu.dot_dimension_numbers<[1], [0], [0], [1], [0, 0, 1, 1], [], []>} : vector<8x128xbf16>, vector<128x512xbf16>, vector<8x512xf32> -> vector<8x512xf32>
    %18 = arith.addf %14, %17 : vector<8x512xf32>
    %19 = vector.extract_strided_slice %18 {offsets = [0, 0], sizes = [8, 128], strides = [1, 1]} : vector<8x512xf32> to vector<8x128xf32>
    %cst_16 = arith.constant 5.000000e-01 : f32
    %20 = vector.broadcast %cst_16 : f32 to vector<8x128xf32>
    %21 = arith.mulf %20, %19 : vector<8x128xf32>
    %22 = math.tanh %21 : vector<8x128xf32>
    %cst_17 = arith.constant 5.000000e-01 : f32
    %23 = vector.broadcast %cst_17 : f32 to vector<8x128xf32>
    %24 = arith.mulf %23, %22 : vector<8x128xf32>
    %cst_18 = arith.constant 5.000000e-01 : f32
    %25 = vector.broadcast %cst_18 : f32 to vector<8x128xf32>
    %26 = arith.addf %24, %25 : vector<8x128xf32>
    %27 = vector.extract_strided_slice %18 {offsets = [0, 128], sizes = [8, 128], strides = [1, 1]} : vector<8x512xf32> to vector<8x128xf32>
    %cst_19 = arith.constant 5.000000e-01 : f32
    %28 = vector.broadcast %cst_19 : f32 to vector<8x128xf32>
    %29 = arith.mulf %28, %27 : vector<8x128xf32>
    %30 = math.tanh %29 : vector<8x128xf32>
    %cst_20 = arith.constant 5.000000e-01 : f32
    %31 = vector.broadcast %cst_20 : f32 to vector<8x128xf32>
    %32 = arith.mulf %31, %30 : vector<8x128xf32>
    %cst_21 = arith.constant 5.000000e-01 : f32
    %33 = vector.broadcast %cst_21 : f32 to vector<8x128xf32>
    %34 = arith.addf %32, %33 : vector<8x128xf32>
    %35 = vector.extract_strided_slice %18 {offsets = [0, 256], sizes = [8, 128], strides = [1, 1]} : vector<8x512xf32> to vector<8x128xf32>
    %36 = math.tanh %35 : vector<8x128xf32>
    %37 = vector.extract_strided_slice %18 {offsets = [0, 384], sizes = [8, 128], strides = [1, 1]} : vector<8x512xf32> to vector<8x128xf32>
    %cst_22 = arith.constant 5.000000e-01 : f32
    %38 = vector.broadcast %cst_22 : f32 to vector<8x128xf32>
    %39 = arith.mulf %38, %37 : vector<8x128xf32>
    %40 = math.tanh %39 : vector<8x128xf32>
    %cst_23 = arith.constant 5.000000e-01 : f32
    %41 = vector.broadcast %cst_23 : f32 to vector<8x128xf32>
    %42 = arith.mulf %41, %40 : vector<8x128xf32>
    %cst_24 = arith.constant 5.000000e-01 : f32
    %43 = vector.broadcast %cst_24 : f32 to vector<8x128xf32>
    %44 = arith.addf %42, %43 : vector<8x128xf32>
    %45 = arith.mulf %34, %11 : vector<8x128xf32>
    %46 = arith.mulf %26, %36 : vector<8x128xf32>
    %47 = arith.addf %45, %46 : vector<8x128xf32>
    %48 = math.tanh %47 : vector<8x128xf32>
    %49 = arith.mulf %44, %48 : vector<8x128xf32>
    %c1_i32 = arith.constant 1 : i32
    %50 = arith.index_cast %c1_i32 : i32 to index
    %c0_25 = arith.constant 0 : index
    %c0_26 = arith.constant 0 : index
    %51 = vector.load %arg14[%50, %c0_25, %c0_26] : memref<8x8x512xf32, #tpu.memory_space<vmem>>, vector<1x8x512xf32>
    %52 = vector.shape_cast %51 : vector<1x8x512xf32> to vector<8x512xf32>
    %53 = arith.truncf %49 : vector<8x128xf32> to vector<8x128xbf16>
    %c0_27 = arith.constant 0 : index
    %c0_28 = arith.constant 0 : index
    %54 = vector.load %arg3[%c0_27, %c0_28] : memref<128x512xbf16, #tpu.memory_space<vmem>>, vector<128x512xbf16>
    %cst_29 = arith.constant dense<0.000000e+00> : vector<8x512xf32>
    %55 = tpu.matmul %53, %54, %cst_29 {dimension_numbers = #tpu.dot_dimension_numbers<[1], [0], [0], [1], [0, 0, 1, 1], [], []>} : vector<8x128xbf16>, vector<128x512xbf16>, vector<8x512xf32> -> vector<8x512xf32>
    %56 = arith.addf %52, %55 : vector<8x512xf32>
    %57 = vector.extract_strided_slice %56 {offsets = [0, 0], sizes = [8, 128], strides = [1, 1]} : vector<8x512xf32> to vector<8x128xf32>
    %cst_30 = arith.constant 5.000000e-01 : f32
    %58 = vector.broadcast %cst_30 : f32 to vector<8x128xf32>
    %59 = arith.mulf %58, %57 : vector<8x128xf32>
    %60 = math.tanh %59 : vector<8x128xf32>
    %cst_31 = arith.constant 5.000000e-01 : f32
    %61 = vector.broadcast %cst_31 : f32 to vector<8x128xf32>
    %62 = arith.mulf %61, %60 : vector<8x128xf32>
    %cst_32 = arith.constant 5.000000e-01 : f32
    %63 = vector.broadcast %cst_32 : f32 to vector<8x128xf32>
    %64 = arith.addf %62, %63 : vector<8x128xf32>
    %65 = vector.extract_strided_slice %56 {offsets = [0, 128], sizes = [8, 128], strides = [1, 1]} : vector<8x512xf32> to vector<8x128xf32>
    %cst_33 = arith.constant 5.000000e-01 : f32
    %66 = vector.broadcast %cst_33 : f32 to vector<8x128xf32>
    %67 = arith.mulf %66, %65 : vector<8x128xf32>
    %68 = math.tanh %67 : vector<8x128xf32>
    %cst_34 = arith.constant 5.000000e-01 : f32
    %69 = vector.broadcast %cst_34 : f32 to vector<8x128xf32>
    %70 = arith.mulf %69, %68 : vector<8x128xf32>
    %cst_35 = arith.constant 5.000000e-01 : f32
    %71 = vector.broadcast %cst_35 : f32 to vector<8x128xf32>
    %72 = arith.addf %70, %71 : vector<8x128xf32>
    %73 = vector.extract_strided_slice %56 {offsets = [0, 256], sizes = [8, 128], strides = [1, 1]} : vector<8x512xf32> to vector<8x128xf32>
    %74 = math.tanh %73 : vector<8x128xf32>
    %75 = vector.extract_strided_slice %56 {offsets = [0, 384], sizes = [8, 128], strides = [1, 1]} : vector<8x512xf32> to vector<8x128xf32>
    %cst_36 = arith.constant 5.000000e-01 : f32
    %76 = vector.broadcast %cst_36 : f32 to vector<8x128xf32>
    %77 = arith.mulf %76, %75 : vector<8x128xf32>
    %78 = math.tanh %77 : vector<8x128xf32>
    %cst_37 = arith.constant 5.000000e-01 : f32
    %79 = vector.broadcast %cst_37 : f32 to vector<8x128xf32>
    %80 = arith.mulf %79, %78 : vector<8x128xf32>
    %cst_38 = arith.constant 5.000000e-01 : f32
    %81 = vector.broadcast %cst_38 : f32 to vector<8x128xf32>
    %82 = arith.addf %80, %81 : vector<8x128xf32>
    %83 = arith.mulf %72, %47 : vector<8x128xf32>
    %84 = arith.mulf %64, %74 : vector<8x128xf32>
    %85 = arith.addf %83, %84 : vector<8x128xf32>
    %86 = math.tanh %85 : vector<8x128xf32>
    %87 = arith.mulf %82, %86 : vector<8x128xf32>
    %c2_i32 = arith.constant 2 : i32
    %88 = arith.index_cast %c2_i32 : i32 to index
    %c0_39 = arith.constant 0 : index
    %c0_40 = arith.constant 0 : index
    %89 = vector.load %arg14[%88, %c0_39, %c0_40] : memref<8x8x512xf32, #tpu.memory_space<vmem>>, vector<1x8x512xf32>
    %90 = vector.shape_cast %89 : vector<1x8x512xf32> to vector<8x512xf32>
    %91 = arith.truncf %87 : vector<8x128xf32> to vector<8x128xbf16>
    %c0_41 = arith.constant 0 : index
    %c0_42 = arith.constant 0 : index
    %92 = vector.load %arg3[%c0_41, %c0_42] : memref<128x512xbf16, #tpu.memory_space<vmem>>, vector<128x512xbf16>
    %cst_43 = arith.constant dense<0.000000e+00> : vector<8x512xf32>
    %93 = tpu.matmul %91, %92, %cst_43 {dimension_numbers = #tpu.dot_dimension_numbers<[1], [0], [0], [1], [0, 0, 1, 1], [], []>} : vector<8x128xbf16>, vector<128x512xbf16>, vector<8x512xf32> -> vector<8x512xf32>
    %94 = arith.addf %90, %93 : vector<8x512xf32>
    %95 = vector.extract_strided_slice %94 {offsets = [0, 0], sizes = [8, 128], strides = [1, 1]} : vector<8x512xf32> to vector<8x128xf32>
    %cst_44 = arith.constant 5.000000e-01 : f32
    %96 = vector.broadcast %cst_44 : f32 to vector<8x128xf32>
    %97 = arith.mulf %96, %95 : vector<8x128xf32>
    %98 = math.tanh %97 : vector<8x128xf32>
    %cst_45 = arith.constant 5.000000e-01 : f32
    %99 = vector.broadcast %cst_45 : f32 to vector<8x128xf32>
    %100 = arith.mulf %99, %98 : vector<8x128xf32>
    %cst_46 = arith.constant 5.000000e-01 : f32
    %101 = vector.broadcast %cst_46 : f32 to vector<8x128xf32>
    %102 = arith.addf %100, %101 : vector<8x128xf32>
    %103 = vector.extract_strided_slice %94 {offsets = [0, 128], sizes = [8, 128], strides = [1, 1]} : vector<8x512xf32> to vector<8x128xf32>
    %cst_47 = arith.constant 5.000000e-01 : f32
    %104 = vector.broadcast %cst_47 : f32 to vector<8x128xf32>
    %105 = arith.mulf %104, %103 : vector<8x128xf32>
    %106 = math.tanh %105 : vector<8x128xf32>
    %cst_48 = arith.constant 5.000000e-01 : f32
    %107 = vector.broadcast %cst_48 : f32 to vector<8x128xf32>
    %108 = arith.mulf %107, %106 : vector<8x128xf32>
    %cst_49 = arith.constant 5.000000e-01 : f32
    %109 = vector.broadcast %cst_49 : f32 to vector<8x128xf32>
    %110 = arith.addf %108, %109 : vector<8x128xf32>
    %111 = vector.extract_strided_slice %94 {offsets = [0, 256], sizes = [8, 128], strides = [1, 1]} : vector<8x512xf32> to vector<8x128xf32>
    %112 = math.tanh %111 : vector<8x128xf32>
    %113 = vector.extract_strided_slice %94 {offsets = [0, 384], sizes = [8, 128], strides = [1, 1]} : vector<8x512xf32> to vector<8x128xf32>
    %cst_50 = arith.constant 5.000000e-01 : f32
    %114 = vector.broadcast %cst_50 : f32 to vector<8x128xf32>
    %115 = arith.mulf %114, %113 : vector<8x128xf32>
    %116 = math.tanh %115 : vector<8x128xf32>
    %cst_51 = arith.constant 5.000000e-01 : f32
    %117 = vector.broadcast %cst_51 : f32 to vector<8x128xf32>
    %118 = arith.mulf %117, %116 : vector<8x128xf32>
    %cst_52 = arith.constant 5.000000e-01 : f32
    %119 = vector.broadcast %cst_52 : f32 to vector<8x128xf32>
    %120 = arith.addf %118, %119 : vector<8x128xf32>
    %121 = arith.mulf %110, %85 : vector<8x128xf32>
    %122 = arith.mulf %102, %112 : vector<8x128xf32>
    %123 = arith.addf %121, %122 : vector<8x128xf32>
    %124 = math.tanh %123 : vector<8x128xf32>
    %125 = arith.mulf %120, %124 : vector<8x128xf32>
    %c3_i32 = arith.constant 3 : i32
    %126 = arith.index_cast %c3_i32 : i32 to index
    %c0_53 = arith.constant 0 : index
    %c0_54 = arith.constant 0 : index
    %127 = vector.load %arg14[%126, %c0_53, %c0_54] : memref<8x8x512xf32, #tpu.memory_space<vmem>>, vector<1x8x512xf32>
    %128 = vector.shape_cast %127 : vector<1x8x512xf32> to vector<8x512xf32>
    %129 = arith.truncf %125 : vector<8x128xf32> to vector<8x128xbf16>
    %c0_55 = arith.constant 0 : index
    %c0_56 = arith.constant 0 : index
    %130 = vector.load %arg3[%c0_55, %c0_56] : memref<128x512xbf16, #tpu.memory_space<vmem>>, vector<128x512xbf16>
    %cst_57 = arith.constant dense<0.000000e+00> : vector<8x512xf32>
    %131 = tpu.matmul %129, %130, %cst_57 {dimension_numbers = #tpu.dot_dimension_numbers<[1], [0], [0], [1], [0, 0, 1, 1], [], []>} : vector<8x128xbf16>, vector<128x512xbf16>, vector<8x512xf32> -> vector<8x512xf32>
    %132 = arith.addf %128, %131 : vector<8x512xf32>
    %133 = vector.extract_strided_slice %132 {offsets = [0, 0], sizes = [8, 128], strides = [1, 1]} : vector<8x512xf32> to vector<8x128xf32>
    %cst_58 = arith.constant 5.000000e-01 : f32
    %134 = vector.broadcast %cst_58 : f32 to vector<8x128xf32>
    %135 = arith.mulf %134, %133 : vector<8x128xf32>
    %136 = math.tanh %135 : vector<8x128xf32>
    %cst_59 = arith.constant 5.000000e-01 : f32
    %137 = vector.broadcast %cst_59 : f32 to vector<8x128xf32>
    %138 = arith.mulf %137, %136 : vector<8x128xf32>
    %cst_60 = arith.constant 5.000000e-01 : f32
    %139 = vector.broadcast %cst_60 : f32 to vector<8x128xf32>
    %140 = arith.addf %138, %139 : vector<8x128xf32>
    %141 = vector.extract_strided_slice %132 {offsets = [0, 128], sizes = [8, 128], strides = [1, 1]} : vector<8x512xf32> to vector<8x128xf32>
    %cst_61 = arith.constant 5.000000e-01 : f32
    %142 = vector.broadcast %cst_61 : f32 to vector<8x128xf32>
    %143 = arith.mulf %142, %141 : vector<8x128xf32>
    %144 = math.tanh %143 : vector<8x128xf32>
    %cst_62 = arith.constant 5.000000e-01 : f32
    %145 = vector.broadcast %cst_62 : f32 to vector<8x128xf32>
    %146 = arith.mulf %145, %144 : vector<8x128xf32>
    %cst_63 = arith.constant 5.000000e-01 : f32
    %147 = vector.broadcast %cst_63 : f32 to vector<8x128xf32>
    %148 = arith.addf %146, %147 : vector<8x128xf32>
    %149 = vector.extract_strided_slice %132 {offsets = [0, 256], sizes = [8, 128], strides = [1, 1]} : vector<8x512xf32> to vector<8x128xf32>
    %150 = math.tanh %149 : vector<8x128xf32>
    %151 = vector.extract_strided_slice %132 {offsets = [0, 384], sizes = [8, 128], strides = [1, 1]} : vector<8x512xf32> to vector<8x128xf32>
    %cst_64 = arith.constant 5.000000e-01 : f32
    %152 = vector.broadcast %cst_64 : f32 to vector<8x128xf32>
    %153 = arith.mulf %152, %151 : vector<8x128xf32>
    %154 = math.tanh %153 : vector<8x128xf32>
    %cst_65 = arith.constant 5.000000e-01 : f32
    %155 = vector.broadcast %cst_65 : f32 to vector<8x128xf32>
    %156 = arith.mulf %155, %154 : vector<8x128xf32>
    %cst_66 = arith.constant 5.000000e-01 : f32
    %157 = vector.broadcast %cst_66 : f32 to vector<8x128xf32>
    %158 = arith.addf %156, %157 : vector<8x128xf32>
    %159 = arith.mulf %148, %123 : vector<8x128xf32>
    %160 = arith.mulf %140, %150 : vector<8x128xf32>
    %161 = arith.addf %159, %160 : vector<8x128xf32>
    %162 = math.tanh %161 : vector<8x128xf32>
    %163 = arith.mulf %158, %162 : vector<8x128xf32>
    %c4_i32 = arith.constant 4 : i32
    %164 = arith.index_cast %c4_i32 : i32 to index
    %c0_67 = arith.constant 0 : index
    %c0_68 = arith.constant 0 : index
    %165 = vector.load %arg14[%164, %c0_67, %c0_68] : memref<8x8x512xf32, #tpu.memory_space<vmem>>, vector<1x8x512xf32>
    %166 = vector.shape_cast %165 : vector<1x8x512xf32> to vector<8x512xf32>
    %167 = arith.truncf %163 : vector<8x128xf32> to vector<8x128xbf16>
    %c0_69 = arith.constant 0 : index
    %c0_70 = arith.constant 0 : index
    %168 = vector.load %arg3[%c0_69, %c0_70] : memref<128x512xbf16, #tpu.memory_space<vmem>>, vector<128x512xbf16>
    %cst_71 = arith.constant dense<0.000000e+00> : vector<8x512xf32>
    %169 = tpu.matmul %167, %168, %cst_71 {dimension_numbers = #tpu.dot_dimension_numbers<[1], [0], [0], [1], [0, 0, 1, 1], [], []>} : vector<8x128xbf16>, vector<128x512xbf16>, vector<8x512xf32> -> vector<8x512xf32>
    %170 = arith.addf %166, %169 : vector<8x512xf32>
    %171 = vector.extract_strided_slice %170 {offsets = [0, 0], sizes = [8, 128], strides = [1, 1]} : vector<8x512xf32> to vector<8x128xf32>
    %cst_72 = arith.constant 5.000000e-01 : f32
    %172 = vector.broadcast %cst_72 : f32 to vector<8x128xf32>
    %173 = arith.mulf %172, %171 : vector<8x128xf32>
    %174 = math.tanh %173 : vector<8x128xf32>
    %cst_73 = arith.constant 5.000000e-01 : f32
    %175 = vector.broadcast %cst_73 : f32 to vector<8x128xf32>
    %176 = arith.mulf %175, %174 : vector<8x128xf32>
    %cst_74 = arith.constant 5.000000e-01 : f32
    %177 = vector.broadcast %cst_74 : f32 to vector<8x128xf32>
    %178 = arith.addf %176, %177 : vector<8x128xf32>
    %179 = vector.extract_strided_slice %170 {offsets = [0, 128], sizes = [8, 128], strides = [1, 1]} : vector<8x512xf32> to vector<8x128xf32>
    %cst_75 = arith.constant 5.000000e-01 : f32
    %180 = vector.broadcast %cst_75 : f32 to vector<8x128xf32>
    %181 = arith.mulf %180, %179 : vector<8x128xf32>
    %182 = math.tanh %181 : vector<8x128xf32>
    %cst_76 = arith.constant 5.000000e-01 : f32
    %183 = vector.broadcast %cst_76 : f32 to vector<8x128xf32>
    %184 = arith.mulf %183, %182 : vector<8x128xf32>
    %cst_77 = arith.constant 5.000000e-01 : f32
    %185 = vector.broadcast %cst_77 : f32 to vector<8x128xf32>
    %186 = arith.addf %184, %185 : vector<8x128xf32>
    %187 = vector.extract_strided_slice %170 {offsets = [0, 256], sizes = [8, 128], strides = [1, 1]} : vector<8x512xf32> to vector<8x128xf32>
    %188 = math.tanh %187 : vector<8x128xf32>
    %189 = vector.extract_strided_slice %170 {offsets = [0, 384], sizes = [8, 128], strides = [1, 1]} : vector<8x512xf32> to vector<8x128xf32>
    %cst_78 = arith.constant 5.000000e-01 : f32
    %190 = vector.broadcast %cst_78 : f32 to vector<8x128xf32>
    %191 = arith.mulf %190, %189 : vector<8x128xf32>
    %192 = math.tanh %191 : vector<8x128xf32>
    %cst_79 = arith.constant 5.000000e-01 : f32
    %193 = vector.broadcast %cst_79 : f32 to vector<8x128xf32>
    %194 = arith.mulf %193, %192 : vector<8x128xf32>
    %cst_80 = arith.constant 5.000000e-01 : f32
    %195 = vector.broadcast %cst_80 : f32 to vector<8x128xf32>
    %196 = arith.addf %194, %195 : vector<8x128xf32>
    %197 = arith.mulf %186, %161 : vector<8x128xf32>
    %198 = arith.mulf %178, %188 : vector<8x128xf32>
    %199 = arith.addf %197, %198 : vector<8x128xf32>
    %200 = math.tanh %199 : vector<8x128xf32>
    %201 = arith.mulf %196, %200 : vector<8x128xf32>
    %c5_i32 = arith.constant 5 : i32
    %202 = arith.index_cast %c5_i32 : i32 to index
    %c0_81 = arith.constant 0 : index
    %c0_82 = arith.constant 0 : index
    %203 = vector.load %arg14[%202, %c0_81, %c0_82] : memref<8x8x512xf32, #tpu.memory_space<vmem>>, vector<1x8x512xf32>
    %204 = vector.shape_cast %203 : vector<1x8x512xf32> to vector<8x512xf32>
    %205 = arith.truncf %201 : vector<8x128xf32> to vector<8x128xbf16>
    %c0_83 = arith.constant 0 : index
    %c0_84 = arith.constant 0 : index
    %206 = vector.load %arg3[%c0_83, %c0_84] : memref<128x512xbf16, #tpu.memory_space<vmem>>, vector<128x512xbf16>
    %cst_85 = arith.constant dense<0.000000e+00> : vector<8x512xf32>
    %207 = tpu.matmul %205, %206, %cst_85 {dimension_numbers = #tpu.dot_dimension_numbers<[1], [0], [0], [1], [0, 0, 1, 1], [], []>} : vector<8x128xbf16>, vector<128x512xbf16>, vector<8x512xf32> -> vector<8x512xf32>
    %208 = arith.addf %204, %207 : vector<8x512xf32>
    %209 = vector.extract_strided_slice %208 {offsets = [0, 0], sizes = [8, 128], strides = [1, 1]} : vector<8x512xf32> to vector<8x128xf32>
    %cst_86 = arith.constant 5.000000e-01 : f32
    %210 = vector.broadcast %cst_86 : f32 to vector<8x128xf32>
    %211 = arith.mulf %210, %209 : vector<8x128xf32>
    %212 = math.tanh %211 : vector<8x128xf32>
    %cst_87 = arith.constant 5.000000e-01 : f32
    %213 = vector.broadcast %cst_87 : f32 to vector<8x128xf32>
    %214 = arith.mulf %213, %212 : vector<8x128xf32>
    %cst_88 = arith.constant 5.000000e-01 : f32
    %215 = vector.broadcast %cst_88 : f32 to vector<8x128xf32>
    %216 = arith.addf %214, %215 : vector<8x128xf32>
    %217 = vector.extract_strided_slice %208 {offsets = [0, 128], sizes = [8, 128], strides = [1, 1]} : vector<8x512xf32> to vector<8x128xf32>
    %cst_89 = arith.constant 5.000000e-01 : f32
    %218 = vector.broadcast %cst_89 : f32 to vector<8x128xf32>
    %219 = arith.mulf %218, %217 : vector<8x128xf32>
    %220 = math.tanh %219 : vector<8x128xf32>
    %cst_90 = arith.constant 5.000000e-01 : f32
    %221 = vector.broadcast %cst_90 : f32 to vector<8x128xf32>
    %222 = arith.mulf %221, %220 : vector<8x128xf32>
    %cst_91 = arith.constant 5.000000e-01 : f32
    %223 = vector.broadcast %cst_91 : f32 to vector<8x128xf32>
    %224 = arith.addf %222, %223 : vector<8x128xf32>
    %225 = vector.extract_strided_slice %208 {offsets = [0, 256], sizes = [8, 128], strides = [1, 1]} : vector<8x512xf32> to vector<8x128xf32>
    %226 = math.tanh %225 : vector<8x128xf32>
    %227 = vector.extract_strided_slice %208 {offsets = [0, 384], sizes = [8, 128], strides = [1, 1]} : vector<8x512xf32> to vector<8x128xf32>
    %cst_92 = arith.constant 5.000000e-01 : f32
    %228 = vector.broadcast %cst_92 : f32 to vector<8x128xf32>
    %229 = arith.mulf %228, %227 : vector<8x128xf32>
    %230 = math.tanh %229 : vector<8x128xf32>
    %cst_93 = arith.constant 5.000000e-01 : f32
    %231 = vector.broadcast %cst_93 : f32 to vector<8x128xf32>
    %232 = arith.mulf %231, %230 : vector<8x128xf32>
    %cst_94 = arith.constant 5.000000e-01 : f32
    %233 = vector.broadcast %cst_94 : f32 to vector<8x128xf32>
    %234 = arith.addf %232, %233 : vector<8x128xf32>
    %235 = arith.mulf %224, %199 : vector<8x128xf32>
    %236 = arith.mulf %216, %226 : vector<8x128xf32>
    %237 = arith.addf %235, %236 : vector<8x128xf32>
    %238 = math.tanh %237 : vector<8x128xf32>
    %239 = arith.mulf %234, %238 : vector<8x128xf32>
    %c6_i32 = arith.constant 6 : i32
    %240 = arith.index_cast %c6_i32 : i32 to index
    %c0_95 = arith.constant 0 : index
    %c0_96 = arith.constant 0 : index
    %241 = vector.load %arg14[%240, %c0_95, %c0_96] : memref<8x8x512xf32, #tpu.memory_space<vmem>>, vector<1x8x512xf32>
    %242 = vector.shape_cast %241 : vector<1x8x512xf32> to vector<8x512xf32>
    %243 = arith.truncf %239 : vector<8x128xf32> to vector<8x128xbf16>
    %c0_97 = arith.constant 0 : index
    %c0_98 = arith.constant 0 : index
    %244 = vector.load %arg3[%c0_97, %c0_98] : memref<128x512xbf16, #tpu.memory_space<vmem>>, vector<128x512xbf16>
    %cst_99 = arith.constant dense<0.000000e+00> : vector<8x512xf32>
    %245 = tpu.matmul %243, %244, %cst_99 {dimension_numbers = #tpu.dot_dimension_numbers<[1], [0], [0], [1], [0, 0, 1, 1], [], []>} : vector<8x128xbf16>, vector<128x512xbf16>, vector<8x512xf32> -> vector<8x512xf32>
    %246 = arith.addf %242, %245 : vector<8x512xf32>
    %247 = vector.extract_strided_slice %246 {offsets = [0, 0], sizes = [8, 128], strides = [1, 1]} : vector<8x512xf32> to vector<8x128xf32>
    %cst_100 = arith.constant 5.000000e-01 : f32
    %248 = vector.broadcast %cst_100 : f32 to vector<8x128xf32>
    %249 = arith.mulf %248, %247 : vector<8x128xf32>
    %250 = math.tanh %249 : vector<8x128xf32>
    %cst_101 = arith.constant 5.000000e-01 : f32
    %251 = vector.broadcast %cst_101 : f32 to vector<8x128xf32>
    %252 = arith.mulf %251, %250 : vector<8x128xf32>
    %cst_102 = arith.constant 5.000000e-01 : f32
    %253 = vector.broadcast %cst_102 : f32 to vector<8x128xf32>
    %254 = arith.addf %252, %253 : vector<8x128xf32>
    %255 = vector.extract_strided_slice %246 {offsets = [0, 128], sizes = [8, 128], strides = [1, 1]} : vector<8x512xf32> to vector<8x128xf32>
    %cst_103 = arith.constant 5.000000e-01 : f32
    %256 = vector.broadcast %cst_103 : f32 to vector<8x128xf32>
    %257 = arith.mulf %256, %255 : vector<8x128xf32>
    %258 = math.tanh %257 : vector<8x128xf32>
    %cst_104 = arith.constant 5.000000e-01 : f32
    %259 = vector.broadcast %cst_104 : f32 to vector<8x128xf32>
    %260 = arith.mulf %259, %258 : vector<8x128xf32>
    %cst_105 = arith.constant 5.000000e-01 : f32
    %261 = vector.broadcast %cst_105 : f32 to vector<8x128xf32>
    %262 = arith.addf %260, %261 : vector<8x128xf32>
    %263 = vector.extract_strided_slice %246 {offsets = [0, 256], sizes = [8, 128], strides = [1, 1]} : vector<8x512xf32> to vector<8x128xf32>
    %264 = math.tanh %263 : vector<8x128xf32>
    %265 = vector.extract_strided_slice %246 {offsets = [0, 384], sizes = [8, 128], strides = [1, 1]} : vector<8x512xf32> to vector<8x128xf32>
    %cst_106 = arith.constant 5.000000e-01 : f32
    %266 = vector.broadcast %cst_106 : f32 to vector<8x128xf32>
    %267 = arith.mulf %266, %265 : vector<8x128xf32>
    %268 = math.tanh %267 : vector<8x128xf32>
    %cst_107 = arith.constant 5.000000e-01 : f32
    %269 = vector.broadcast %cst_107 : f32 to vector<8x128xf32>
    %270 = arith.mulf %269, %268 : vector<8x128xf32>
    %cst_108 = arith.constant 5.000000e-01 : f32
    %271 = vector.broadcast %cst_108 : f32 to vector<8x128xf32>
    %272 = arith.addf %270, %271 : vector<8x128xf32>
    %273 = arith.mulf %262, %237 : vector<8x128xf32>
    %274 = arith.mulf %254, %264 : vector<8x128xf32>
    %275 = arith.addf %273, %274 : vector<8x128xf32>
    %276 = math.tanh %275 : vector<8x128xf32>
    %277 = arith.mulf %272, %276 : vector<8x128xf32>
    %c7_i32 = arith.constant 7 : i32
    %278 = arith.index_cast %c7_i32 : i32 to index
    %c0_109 = arith.constant 0 : index
    %c0_110 = arith.constant 0 : index
    %279 = vector.load %arg14[%278, %c0_109, %c0_110] : memref<8x8x512xf32, #tpu.memory_space<vmem>>, vector<1x8x512xf32>
    %280 = vector.shape_cast %279 : vector<1x8x512xf32> to vector<8x512xf32>
    %281 = arith.truncf %277 : vector<8x128xf32> to vector<8x128xbf16>
    %c0_111 = arith.constant 0 : index
    %c0_112 = arith.constant 0 : index
    %282 = vector.load %arg3[%c0_111, %c0_112] : memref<128x512xbf16, #tpu.memory_space<vmem>>, vector<128x512xbf16>
    %cst_113 = arith.constant dense<0.000000e+00> : vector<8x512xf32>
    %283 = tpu.matmul %281, %282, %cst_113 {dimension_numbers = #tpu.dot_dimension_numbers<[1], [0], [0], [1], [0, 0, 1, 1], [], []>} : vector<8x128xbf16>, vector<128x512xbf16>, vector<8x512xf32> -> vector<8x512xf32>
    %284 = arith.addf %280, %283 : vector<8x512xf32>
    %285 = vector.extract_strided_slice %284 {offsets = [0, 0], sizes = [8, 128], strides = [1, 1]} : vector<8x512xf32> to vector<8x128xf32>
    %cst_114 = arith.constant 5.000000e-01 : f32
    %286 = vector.broadcast %cst_114 : f32 to vector<8x128xf32>
    %287 = arith.mulf %286, %285 : vector<8x128xf32>
    %288 = math.tanh %287 : vector<8x128xf32>
    %cst_115 = arith.constant 5.000000e-01 : f32
    %289 = vector.broadcast %cst_115 : f32 to vector<8x128xf32>
    %290 = arith.mulf %289, %288 : vector<8x128xf32>
    %cst_116 = arith.constant 5.000000e-01 : f32
    %291 = vector.broadcast %cst_116 : f32 to vector<8x128xf32>
    %292 = arith.addf %290, %291 : vector<8x128xf32>
    %293 = vector.extract_strided_slice %284 {offsets = [0, 128], sizes = [8, 128], strides = [1, 1]} : vector<8x512xf32> to vector<8x128xf32>
    %cst_117 = arith.constant 5.000000e-01 : f32
    %294 = vector.broadcast %cst_117 : f32 to vector<8x128xf32>
    %295 = arith.mulf %294, %293 : vector<8x128xf32>
    %296 = math.tanh %295 : vector<8x128xf32>
    %cst_118 = arith.constant 5.000000e-01 : f32
    %297 = vector.broadcast %cst_118 : f32 to vector<8x128xf32>
    %298 = arith.mulf %297, %296 : vector<8x128xf32>
    %cst_119 = arith.constant 5.000000e-01 : f32
    %299 = vector.broadcast %cst_119 : f32 to vector<8x128xf32>
    %300 = arith.addf %298, %299 : vector<8x128xf32>
    %301 = vector.extract_strided_slice %284 {offsets = [0, 256], sizes = [8, 128], strides = [1, 1]} : vector<8x512xf32> to vector<8x128xf32>
    %302 = math.tanh %301 : vector<8x128xf32>
    %303 = vector.extract_strided_slice %284 {offsets = [0, 384], sizes = [8, 128], strides = [1, 1]} : vector<8x512xf32> to vector<8x128xf32>
    %cst_120 = arith.constant 5.000000e-01 : f32
    %304 = vector.broadcast %cst_120 : f32 to vector<8x128xf32>
    %305 = arith.mulf %304, %303 : vector<8x128xf32>
    %306 = math.tanh %305 : vector<8x128xf32>
    %cst_121 = arith.constant 5.000000e-01 : f32
    %307 = vector.broadcast %cst_121 : f32 to vector<8x128xf32>
    %308 = arith.mulf %307, %306 : vector<8x128xf32>
    %cst_122 = arith.constant 5.000000e-01 : f32
    %309 = vector.broadcast %cst_122 : f32 to vector<8x128xf32>
    %310 = arith.addf %308, %309 : vector<8x128xf32>
    %311 = arith.mulf %300, %275 : vector<8x128xf32>
    %312 = arith.mulf %292, %302 : vector<8x128xf32>
    %313 = arith.addf %311, %312 : vector<8x128xf32>
    %314 = math.tanh %313 : vector<8x128xf32>
    %315 = arith.mulf %310, %314 : vector<8x128xf32>
    %c8_i32 = arith.constant 8 : i32
    %316 = arith.truncf %315 : vector<8x128xf32> to vector<8x128xbf16>
    %c0_123 = arith.constant 0 : index
    %c0_124 = arith.constant 0 : index
    %317 = vector.load %arg5[%c0_123, %c0_124] : memref<128x128xbf16, #tpu.memory_space<vmem>>, vector<128x128xbf16>
    %cst_125 = arith.constant dense<0.000000e+00> : vector<8x128xf32>
    %318 = tpu.matmul %316, %317, %cst_125 {dimension_numbers = #tpu.dot_dimension_numbers<[1], [0], [0], [1], [0, 0, 1, 1], [], []>} : vector<8x128xbf16>, vector<128x128xbf16>, vector<8x128xf32> -> vector<8x128xf32>
    %c0_126 = arith.constant 0 : index
    %c0_127 = arith.constant 0 : index
    %319 = vector.load %arg6[%c0_126, %c0_127] : memref<1x128xf32, #tpu.memory_space<vmem>>, vector<1x128xf32>
    %320 = vector.broadcast %319 : vector<1x128xf32> to vector<8x128xf32>
    %321 = arith.addf %318, %320 : vector<8x128xf32>
    %c0_128 = arith.constant 0 : index
    %c0_129 = arith.constant 0 : index
    %322 = vector.load %arg13[%c0_128, %c0_129] : memref<8x128xf32, #tpu.memory_space<vmem>>, vector<8x128xf32>
    tpu.vector_store %arg13[%c0_128, %c0_129], %321 {strides = array<i32>} : memref<8x128xf32, #tpu.memory_space<vmem>>, vector<8x128xf32>,
    %323 = arith.truncf %321 : vector<8x128xf32> to vector<8x128xbf16>
    %c0_130 = arith.constant 0 : index
    %c0_131 = arith.constant 0 : index
    %324 = vector.load %arg7[%c0_130, %c0_131] : memref<128x512xbf16, #tpu.memory_space<vmem>>, vector<128x512xbf16>
    %cst_132 = arith.constant dense<0.000000e+00> : vector<8x512xf32>
    %325 = tpu.matmul %323, %324, %cst_132 {dimension_numbers = #tpu.dot_dimension_numbers<[1], [0], [0], [1], [0, 0, 1, 1], [], []>} : vector<8x128xbf16>, vector<128x512xbf16>, vector<8x512xf32> -> vector<8x512xf32>
    %c0_133 = arith.constant 0 : index
    %c0_134 = arith.constant 0 : index
    %326 = vector.load %arg9[%c0_133, %c0_134] : memref<1x512xf32, #tpu.memory_space<vmem>>, vector<1x512xf32>
    %327 = vector.broadcast %326 : vector<1x512xf32> to vector<8x512xf32>
    %328 = arith.addf %325, %327 : vector<8x512xf32>
    %c0_135 = arith.constant 0 : index
    %c0_136 = arith.constant 0 : index
    %329 = vector.load %arg16[%c0_135, %c0_136] : memref<8x512xf32, #tpu.memory_space<vmem>>, vector<8x512xf32>
    tpu.vector_store %arg16[%c0_135, %c0_136], %328 {strides = array<i32>} : memref<8x512xf32, #tpu.memory_space<vmem>>, vector<8x512xf32>,
    %c0_i32_137 = arith.constant 0 : i32
    %c0_138 = arith.constant 0 : index
    %c0_139 = arith.constant 0 : index
    %330 = vector.load %arg16[%c0_138, %c0_139] : memref<8x512xf32, #tpu.memory_space<vmem>>, vector<8x512xf32>
    %331 = arith.truncf %10 : vector<8x128xf32> to vector<8x128xbf16>
    %c0_140 = arith.constant 0 : index
    %c0_141 = arith.constant 0 : index
    %332 = vector.load %arg8[%c0_140, %c0_141] : memref<128x512xbf16, #tpu.memory_space<vmem>>, vector<128x512xbf16>
    %cst_142 = arith.constant dense<0.000000e+00> : vector<8x512xf32>
    %333 = tpu.matmul %331, %332, %cst_142 {dimension_numbers = #tpu.dot_dimension_numbers<[1], [0], [0], [1], [0, 0, 1, 1], [], []>} : vector<8x128xbf16>, vector<128x512xbf16>, vector<8x512xf32> -> vector<8x512xf32>
    %334 = arith.addf %330, %333 : vector<8x512xf32>
    %335 = vector.extract_strided_slice %334 {offsets = [0, 0], sizes = [8, 128], strides = [1, 1]} : vector<8x512xf32> to vector<8x128xf32>
    %cst_143 = arith.constant 5.000000e-01 : f32
    %336 = vector.broadcast %cst_143 : f32 to vector<8x128xf32>
    %337 = arith.mulf %336, %335 : vector<8x128xf32>
    %338 = math.tanh %337 : vector<8x128xf32>
    %cst_144 = arith.constant 5.000000e-01 : f32
    %339 = vector.broadcast %cst_144 : f32 to vector<8x128xf32>
    %340 = arith.mulf %339, %338 : vector<8x128xf32>
    %cst_145 = arith.constant 5.000000e-01 : f32
    %341 = vector.broadcast %cst_145 : f32 to vector<8x128xf32>
    %342 = arith.addf %340, %341 : vector<8x128xf32>
    %343 = vector.extract_strided_slice %334 {offsets = [0, 128], sizes = [8, 128], strides = [1, 1]} : vector<8x512xf32> to vector<8x128xf32>
    %cst_146 = arith.constant 5.000000e-01 : f32
    %344 = vector.broadcast %cst_146 : f32 to vector<8x128xf32>
    %345 = arith.mulf %344, %343 : vector<8x128xf32>
    %346 = math.tanh %345 : vector<8x128xf32>
    %cst_147 = arith.constant 5.000000e-01 : f32
    %347 = vector.broadcast %cst_147 : f32 to vector<8x128xf32>
    %348 = arith.mulf %347, %346 : vector<8x128xf32>
    %cst_148 = arith.constant 5.000000e-01 : f32
    %349 = vector.broadcast %cst_148 : f32 to vector<8x128xf32>
    %350 = arith.addf %348, %349 : vector<8x128xf32>
    %351 = vector.extract_strided_slice %334 {offsets = [0, 256], sizes = [8, 128], strides = [1, 1]} : vector<8x512xf32> to vector<8x128xf32>
    %352 = math.tanh %351 : vector<8x128xf32>
    %353 = vector.extract_strided_slice %334 {offsets = [0, 384], sizes = [8, 128], strides = [1, 1]} : vector<8x512xf32> to vector<8x128xf32>
    %cst_149 = arith.constant 5.000000e-01 : f32
    %354 = vector.broadcast %cst_149 : f32 to vector<8x128xf32>
    %355 = arith.mulf %354, %353 : vector<8x128xf32>
    %356 = math.tanh %355 : vector<8x128xf32>
    %cst_150 = arith.constant 5.000000e-01 : f32
    %357 = vector.broadcast %cst_150 : f32 to vector<8x128xf32>
    %358 = arith.mulf %357, %356 : vector<8x128xf32>
    %cst_151 = arith.constant 5.000000e-01 : f32
    %359 = vector.broadcast %cst_151 : f32 to vector<8x128xf32>
    %360 = arith.addf %358, %359 : vector<8x128xf32>
    %361 = arith.mulf %350, %11 : vector<8x128xf32>
    %362 = arith.mulf %342, %352 : vector<8x128xf32>
    %363 = arith.addf %361, %362 : vector<8x128xf32>
    %364 = math.tanh %363 : vector<8x128xf32>
    %365 = arith.mulf %360, %364 : vector<8x128xf32>
    %366 = arith.index_cast %c0_i32_137 : i32 to index
    %c0_152 = arith.constant 0 : index
    %c0_153 = arith.constant 0 : index
    %367 = vector.load %arg15[%366, %c0_152, %c0_153] : memref<8x8x128xf32, #tpu.memory_space<vmem>>, vector<1x8x128xf32>
    %368 = vector.shape_cast %367 : vector<1x8x128xf32> to vector<8x128xf32>
    %369 = vector.shape_cast %365 : vector<8x128xf32> to vector<1x8x128xf32>
    tpu.vector_store %arg15[%366, %c0_152, %c0_153], %369 {strides = array<i32>} : memref<8x8x128xf32, #tpu.memory_space<vmem>>, vector<1x8x128xf32>,
    %c1_i32_154 = arith.constant 1 : i32
    %c0_155 = arith.constant 0 : index
    %c0_156 = arith.constant 0 : index
    %370 = vector.load %arg16[%c0_155, %c0_156] : memref<8x512xf32, #tpu.memory_space<vmem>>, vector<8x512xf32>
    %371 = arith.truncf %365 : vector<8x128xf32> to vector<8x128xbf16>
    %c0_157 = arith.constant 0 : index
    %c0_158 = arith.constant 0 : index
    %372 = vector.load %arg8[%c0_157, %c0_158] : memref<128x512xbf16, #tpu.memory_space<vmem>>, vector<128x512xbf16>
    %cst_159 = arith.constant dense<0.000000e+00> : vector<8x512xf32>
    %373 = tpu.matmul %371, %372, %cst_159 {dimension_numbers = #tpu.dot_dimension_numbers<[1], [0], [0], [1], [0, 0, 1, 1], [], []>} : vector<8x128xbf16>, vector<128x512xbf16>, vector<8x512xf32> -> vector<8x512xf32>
    %374 = arith.addf %370, %373 : vector<8x512xf32>
    %375 = vector.extract_strided_slice %374 {offsets = [0, 0], sizes = [8, 128], strides = [1, 1]} : vector<8x512xf32> to vector<8x128xf32>
    %cst_160 = arith.constant 5.000000e-01 : f32
    %376 = vector.broadcast %cst_160 : f32 to vector<8x128xf32>
    %377 = arith.mulf %376, %375 : vector<8x128xf32>
    %378 = math.tanh %377 : vector<8x128xf32>
    %cst_161 = arith.constant 5.000000e-01 : f32
    %379 = vector.broadcast %cst_161 : f32 to vector<8x128xf32>
    %380 = arith.mulf %379, %378 : vector<8x128xf32>
    %cst_162 = arith.constant 5.000000e-01 : f32
    %381 = vector.broadcast %cst_162 : f32 to vector<8x128xf32>
    %382 = arith.addf %380, %381 : vector<8x128xf32>
    %383 = vector.extract_strided_slice %374 {offsets = [0, 128], sizes = [8, 128], strides = [1, 1]} : vector<8x512xf32> to vector<8x128xf32>
    %cst_163 = arith.constant 5.000000e-01 : f32
    %384 = vector.broadcast %cst_163 : f32 to vector<8x128xf32>
    %385 = arith.mulf %384, %383 : vector<8x128xf32>
    %386 = math.tanh %385 : vector<8x128xf32>
    %cst_164 = arith.constant 5.000000e-01 : f32
    %387 = vector.broadcast %cst_164 : f32 to vector<8x128xf32>
    %388 = arith.mulf %387, %386 : vector<8x128xf32>
    %cst_165 = arith.constant 5.000000e-01 : f32
    %389 = vector.broadcast %cst_165 : f32 to vector<8x128xf32>
    %390 = arith.addf %388, %389 : vector<8x128xf32>
    %391 = vector.extract_strided_slice %374 {offsets = [0, 256], sizes = [8, 128], strides = [1, 1]} : vector<8x512xf32> to vector<8x128xf32>
    %392 = math.tanh %391 : vector<8x128xf32>
    %393 = vector.extract_strided_slice %374 {offsets = [0, 384], sizes = [8, 128], strides = [1, 1]} : vector<8x512xf32> to vector<8x128xf32>
    %cst_166 = arith.constant 5.000000e-01 : f32
    %394 = vector.broadcast %cst_166 : f32 to vector<8x128xf32>
    %395 = arith.mulf %394, %393 : vector<8x128xf32>
    %396 = math.tanh %395 : vector<8x128xf32>
    %cst_167 = arith.constant 5.000000e-01 : f32
    %397 = vector.broadcast %cst_167 : f32 to vector<8x128xf32>
    %398 = arith.mulf %397, %396 : vector<8x128xf32>
    %cst_168 = arith.constant 5.000000e-01 : f32
    %399 = vector.broadcast %cst_168 : f32 to vector<8x128xf32>
    %400 = arith.addf %398, %399 : vector<8x128xf32>
    %401 = arith.mulf %390, %363 : vector<8x128xf32>
    %402 = arith.mulf %382, %392 : vector<8x128xf32>
    %403 = arith.addf %401, %402 : vector<8x128xf32>
    %404 = math.tanh %403 : vector<8x128xf32>
    %405 = arith.mulf %400, %404 : vector<8x128xf32>
    %406 = arith.index_cast %c1_i32_154 : i32 to index
    %c0_169 = arith.constant 0 : index
    %c0_170 = arith.constant 0 : index
    %407 = vector.load %arg15[%406, %c0_169, %c0_170] : memref<8x8x128xf32, #tpu.memory_space<vmem>>, vector<1x8x128xf32>
    %408 = vector.shape_cast %407 : vector<1x8x128xf32> to vector<8x128xf32>
    %409 = vector.shape_cast %405 : vector<8x128xf32> to vector<1x8x128xf32>
    tpu.vector_store %arg15[%406, %c0_169, %c0_170], %409 {strides = array<i32>} : memref<8x8x128xf32, #tpu.memory_space<vmem>>, vector<1x8x128xf32>,
    %c2_i32_171 = arith.constant 2 : i32
    %c0_172 = arith.constant 0 : index
    %c0_173 = arith.constant 0 : index
    %410 = vector.load %arg16[%c0_172, %c0_173] : memref<8x512xf32, #tpu.memory_space<vmem>>, vector<8x512xf32>
    %411 = arith.truncf %405 : vector<8x128xf32> to vector<8x128xbf16>
    %c0_174 = arith.constant 0 : index
    %c0_175 = arith.constant 0 : index
    %412 = vector.load %arg8[%c0_174, %c0_175] : memref<128x512xbf16, #tpu.memory_space<vmem>>, vector<128x512xbf16>
    %cst_176 = arith.constant dense<0.000000e+00> : vector<8x512xf32>
    %413 = tpu.matmul %411, %412, %cst_176 {dimension_numbers = #tpu.dot_dimension_numbers<[1], [0], [0], [1], [0, 0, 1, 1], [], []>} : vector<8x128xbf16>, vector<128x512xbf16>, vector<8x512xf32> -> vector<8x512xf32>
    %414 = arith.addf %410, %413 : vector<8x512xf32>
    %415 = vector.extract_strided_slice %414 {offsets = [0, 0], sizes = [8, 128], strides = [1, 1]} : vector<8x512xf32> to vector<8x128xf32>
    %cst_177 = arith.constant 5.000000e-01 : f32
    %416 = vector.broadcast %cst_177 : f32 to vector<8x128xf32>
    %417 = arith.mulf %416, %415 : vector<8x128xf32>
    %418 = math.tanh %417 : vector<8x128xf32>
    %cst_178 = arith.constant 5.000000e-01 : f32
    %419 = vector.broadcast %cst_178 : f32 to vector<8x128xf32>
    %420 = arith.mulf %419, %418 : vector<8x128xf32>
    %cst_179 = arith.constant 5.000000e-01 : f32
    %421 = vector.broadcast %cst_179 : f32 to vector<8x128xf32>
    %422 = arith.addf %420, %421 : vector<8x128xf32>
    %423 = vector.extract_strided_slice %414 {offsets = [0, 128], sizes = [8, 128], strides = [1, 1]} : vector<8x512xf32> to vector<8x128xf32>
    %cst_180 = arith.constant 5.000000e-01 : f32
    %424 = vector.broadcast %cst_180 : f32 to vector<8x128xf32>
    %425 = arith.mulf %424, %423 : vector<8x128xf32>
    %426 = math.tanh %425 : vector<8x128xf32>
    %cst_181 = arith.constant 5.000000e-01 : f32
    %427 = vector.broadcast %cst_181 : f32 to vector<8x128xf32>
    %428 = arith.mulf %427, %426 : vector<8x128xf32>
    %cst_182 = arith.constant 5.000000e-01 : f32
    %429 = vector.broadcast %cst_182 : f32 to vector<8x128xf32>
    %430 = arith.addf %428, %429 : vector<8x128xf32>
    %431 = vector.extract_strided_slice %414 {offsets = [0, 256], sizes = [8, 128], strides = [1, 1]} : vector<8x512xf32> to vector<8x128xf32>
    %432 = math.tanh %431 : vector<8x128xf32>
    %433 = vector.extract_strided_slice %414 {offsets = [0, 384], sizes = [8, 128], strides = [1, 1]} : vector<8x512xf32> to vector<8x128xf32>
    %cst_183 = arith.constant 5.000000e-01 : f32
    %434 = vector.broadcast %cst_183 : f32 to vector<8x128xf32>
    %435 = arith.mulf %434, %433 : vector<8x128xf32>
    %436 = math.tanh %435 : vector<8x128xf32>
    %cst_184 = arith.constant 5.000000e-01 : f32
    %437 = vector.broadcast %cst_184 : f32 to vector<8x128xf32>
    %438 = arith.mulf %437, %436 : vector<8x128xf32>
    %cst_185 = arith.constant 5.000000e-01 : f32
    %439 = vector.broadcast %cst_185 : f32 to vector<8x128xf32>
    %440 = arith.addf %438, %439 : vector<8x128xf32>
    %441 = arith.mulf %430, %403 : vector<8x128xf32>
    %442 = arith.mulf %422, %432 : vector<8x128xf32>
    %443 = arith.addf %441, %442 : vector<8x128xf32>
    %444 = math.tanh %443 : vector<8x128xf32>
    %445 = arith.mulf %440, %444 : vector<8x128xf32>
    %446 = arith.index_cast %c2_i32_171 : i32 to index
    %c0_186 = arith.constant 0 : index
    %c0_187 = arith.constant 0 : index
    %447 = vector.load %arg15[%446, %c0_186, %c0_187] : memref<8x8x128xf32, #tpu.memory_space<vmem>>, vector<1x8x128xf32>
    %448 = vector.shape_cast %447 : vector<1x8x128xf32> to vector<8x128xf32>
    %449 = vector.shape_cast %445 : vector<8x128xf32> to vector<1x8x128xf32>
    tpu.vector_store %arg15[%446, %c0_186, %c0_187], %449 {strides = array<i32>} : memref<8x8x128xf32, #tpu.memory_space<vmem>>, vector<1x8x128xf32>,
    %c3_i32_188 = arith.constant 3 : i32
    %c0_189 = arith.constant 0 : index
    %c0_190 = arith.constant 0 : index
    %450 = vector.load %arg16[%c0_189, %c0_190] : memref<8x512xf32, #tpu.memory_space<vmem>>, vector<8x512xf32>
    %451 = arith.truncf %445 : vector<8x128xf32> to vector<8x128xbf16>
    %c0_191 = arith.constant 0 : index
    %c0_192 = arith.constant 0 : index
    %452 = vector.load %arg8[%c0_191, %c0_192] : memref<128x512xbf16, #tpu.memory_space<vmem>>, vector<128x512xbf16>
    %cst_193 = arith.constant dense<0.000000e+00> : vector<8x512xf32>
    %453 = tpu.matmul %451, %452, %cst_193 {dimension_numbers = #tpu.dot_dimension_numbers<[1], [0], [0], [1], [0, 0, 1, 1], [], []>} : vector<8x128xbf16>, vector<128x512xbf16>, vector<8x512xf32> -> vector<8x512xf32>
    %454 = arith.addf %450, %453 : vector<8x512xf32>
    %455 = vector.extract_strided_slice %454 {offsets = [0, 0], sizes = [8, 128], strides = [1, 1]} : vector<8x512xf32> to vector<8x128xf32>
    %cst_194 = arith.constant 5.000000e-01 : f32
    %456 = vector.broadcast %cst_194 : f32 to vector<8x128xf32>
    %457 = arith.mulf %456, %455 : vector<8x128xf32>
    %458 = math.tanh %457 : vector<8x128xf32>
    %cst_195 = arith.constant 5.000000e-01 : f32
    %459 = vector.broadcast %cst_195 : f32 to vector<8x128xf32>
    %460 = arith.mulf %459, %458 : vector<8x128xf32>
    %cst_196 = arith.constant 5.000000e-01 : f32
    %461 = vector.broadcast %cst_196 : f32 to vector<8x128xf32>
    %462 = arith.addf %460, %461 : vector<8x128xf32>
    %463 = vector.extract_strided_slice %454 {offsets = [0, 128], sizes = [8, 128], strides = [1, 1]} : vector<8x512xf32> to vector<8x128xf32>
    %cst_197 = arith.constant 5.000000e-01 : f32
    %464 = vector.broadcast %cst_197 : f32 to vector<8x128xf32>
    %465 = arith.mulf %464, %463 : vector<8x128xf32>
    %466 = math.tanh %465 : vector<8x128xf32>
    %cst_198 = arith.constant 5.000000e-01 : f32
    %467 = vector.broadcast %cst_198 : f32 to vector<8x128xf32>
    %468 = arith.mulf %467, %466 : vector<8x128xf32>
    %cst_199 = arith.constant 5.000000e-01 : f32
    %469 = vector.broadcast %cst_199 : f32 to vector<8x128xf32>
    %470 = arith.addf %468, %469 : vector<8x128xf32>
    %471 = vector.extract_strided_slice %454 {offsets = [0, 256], sizes = [8, 128], strides = [1, 1]} : vector<8x512xf32> to vector<8x128xf32>
    %472 = math.tanh %471 : vector<8x128xf32>
    %473 = vector.extract_strided_slice %454 {offsets = [0, 384], sizes = [8, 128], strides = [1, 1]} : vector<8x512xf32> to vector<8x128xf32>
    %cst_200 = arith.constant 5.000000e-01 : f32
    %474 = vector.broadcast %cst_200 : f32 to vector<8x128xf32>
    %475 = arith.mulf %474, %473 : vector<8x128xf32>
    %476 = math.tanh %475 : vector<8x128xf32>
    %cst_201 = arith.constant 5.000000e-01 : f32
    %477 = vector.broadcast %cst_201 : f32 to vector<8x128xf32>
    %478 = arith.mulf %477, %476 : vector<8x128xf32>
    %cst_202 = arith.constant 5.000000e-01 : f32
    %479 = vector.broadcast %cst_202 : f32 to vector<8x128xf32>
    %480 = arith.addf %478, %479 : vector<8x128xf32>
    %481 = arith.mulf %470, %443 : vector<8x128xf32>
    %482 = arith.mulf %462, %472 : vector<8x128xf32>
    %483 = arith.addf %481, %482 : vector<8x128xf32>
    %484 = math.tanh %483 : vector<8x128xf32>
    %485 = arith.mulf %480, %484 : vector<8x128xf32>
    %486 = arith.index_cast %c3_i32_188 : i32 to index
    %c0_203 = arith.constant 0 : index
    %c0_204 = arith.constant 0 : index
    %487 = vector.load %arg15[%486, %c0_203, %c0_204] : memref<8x8x128xf32, #tpu.memory_space<vmem>>, vector<1x8x128xf32>
    %488 = vector.shape_cast %487 : vector<1x8x128xf32> to vector<8x128xf32>
    %489 = vector.shape_cast %485 : vector<8x128xf32> to vector<1x8x128xf32>
    tpu.vector_store %arg15[%486, %c0_203, %c0_204], %489 {strides = array<i32>} : memref<8x8x128xf32, #tpu.memory_space<vmem>>, vector<1x8x128xf32>,
    %c4_i32_205 = arith.constant 4 : i32
    %c0_206 = arith.constant 0 : index
    %c0_207 = arith.constant 0 : index
    %490 = vector.load %arg16[%c0_206, %c0_207] : memref<8x512xf32, #tpu.memory_space<vmem>>, vector<8x512xf32>
    %491 = arith.truncf %485 : vector<8x128xf32> to vector<8x128xbf16>
    %c0_208 = arith.constant 0 : index
    %c0_209 = arith.constant 0 : index
    %492 = vector.load %arg8[%c0_208, %c0_209] : memref<128x512xbf16, #tpu.memory_space<vmem>>, vector<128x512xbf16>
    %cst_210 = arith.constant dense<0.000000e+00> : vector<8x512xf32>
    %493 = tpu.matmul %491, %492, %cst_210 {dimension_numbers = #tpu.dot_dimension_numbers<[1], [0], [0], [1], [0, 0, 1, 1], [], []>} : vector<8x128xbf16>, vector<128x512xbf16>, vector<8x512xf32> -> vector<8x512xf32>
    %494 = arith.addf %490, %493 : vector<8x512xf32>
    %495 = vector.extract_strided_slice %494 {offsets = [0, 0], sizes = [8, 128], strides = [1, 1]} : vector<8x512xf32> to vector<8x128xf32>
    %cst_211 = arith.constant 5.000000e-01 : f32
    %496 = vector.broadcast %cst_211 : f32 to vector<8x128xf32>
    %497 = arith.mulf %496, %495 : vector<8x128xf32>
    %498 = math.tanh %497 : vector<8x128xf32>
    %cst_212 = arith.constant 5.000000e-01 : f32
    %499 = vector.broadcast %cst_212 : f32 to vector<8x128xf32>
    %500 = arith.mulf %499, %498 : vector<8x128xf32>
    %cst_213 = arith.constant 5.000000e-01 : f32
    %501 = vector.broadcast %cst_213 : f32 to vector<8x128xf32>
    %502 = arith.addf %500, %501 : vector<8x128xf32>
    %503 = vector.extract_strided_slice %494 {offsets = [0, 128], sizes = [8, 128], strides = [1, 1]} : vector<8x512xf32> to vector<8x128xf32>
    %cst_214 = arith.constant 5.000000e-01 : f32
    %504 = vector.broadcast %cst_214 : f32 to vector<8x128xf32>
    %505 = arith.mulf %504, %503 : vector<8x128xf32>
    %506 = math.tanh %505 : vector<8x128xf32>
    %cst_215 = arith.constant 5.000000e-01 : f32
    %507 = vector.broadcast %cst_215 : f32 to vector<8x128xf32>
    %508 = arith.mulf %507, %506 : vector<8x128xf32>
    %cst_216 = arith.constant 5.000000e-01 : f32
    %509 = vector.broadcast %cst_216 : f32 to vector<8x128xf32>
    %510 = arith.addf %508, %509 : vector<8x128xf32>
    %511 = vector.extract_strided_slice %494 {offsets = [0, 256], sizes = [8, 128], strides = [1, 1]} : vector<8x512xf32> to vector<8x128xf32>
    %512 = math.tanh %511 : vector<8x128xf32>
    %513 = vector.extract_strided_slice %494 {offsets = [0, 384], sizes = [8, 128], strides = [1, 1]} : vector<8x512xf32> to vector<8x128xf32>
    %cst_217 = arith.constant 5.000000e-01 : f32
    %514 = vector.broadcast %cst_217 : f32 to vector<8x128xf32>
    %515 = arith.mulf %514, %513 : vector<8x128xf32>
    %516 = math.tanh %515 : vector<8x128xf32>
    %cst_218 = arith.constant 5.000000e-01 : f32
    %517 = vector.broadcast %cst_218 : f32 to vector<8x128xf32>
    %518 = arith.mulf %517, %516 : vector<8x128xf32>
    %cst_219 = arith.constant 5.000000e-01 : f32
    %519 = vector.broadcast %cst_219 : f32 to vector<8x128xf32>
    %520 = arith.addf %518, %519 : vector<8x128xf32>
    %521 = arith.mulf %510, %483 : vector<8x128xf32>
    %522 = arith.mulf %502, %512 : vector<8x128xf32>
    %523 = arith.addf %521, %522 : vector<8x128xf32>
    %524 = math.tanh %523 : vector<8x128xf32>
    %525 = arith.mulf %520, %524 : vector<8x128xf32>
    %526 = arith.index_cast %c4_i32_205 : i32 to index
    %c0_220 = arith.constant 0 : index
    %c0_221 = arith.constant 0 : index
    %527 = vector.load %arg15[%526, %c0_220, %c0_221] : memref<8x8x128xf32, #tpu.memory_space<vmem>>, vector<1x8x128xf32>
    %528 = vector.shape_cast %527 : vector<1x8x128xf32> to vector<8x128xf32>
    %529 = vector.shape_cast %525 : vector<8x128xf32> to vector<1x8x128xf32>
    tpu.vector_store %arg15[%526, %c0_220, %c0_221], %529 {strides = array<i32>} : memref<8x8x128xf32, #tpu.memory_space<vmem>>, vector<1x8x128xf32>,
    %c5_i32_222 = arith.constant 5 : i32
    %c0_223 = arith.constant 0 : index
    %c0_224 = arith.constant 0 : index
    %530 = vector.load %arg16[%c0_223, %c0_224] : memref<8x512xf32, #tpu.memory_space<vmem>>, vector<8x512xf32>
    %531 = arith.truncf %525 : vector<8x128xf32> to vector<8x128xbf16>
    %c0_225 = arith.constant 0 : index
    %c0_226 = arith.constant 0 : index
    %532 = vector.load %arg8[%c0_225, %c0_226] : memref<128x512xbf16, #tpu.memory_space<vmem>>, vector<128x512xbf16>
    %cst_227 = arith.constant dense<0.000000e+00> : vector<8x512xf32>
    %533 = tpu.matmul %531, %532, %cst_227 {dimension_numbers = #tpu.dot_dimension_numbers<[1], [0], [0], [1], [0, 0, 1, 1], [], []>} : vector<8x128xbf16>, vector<128x512xbf16>, vector<8x512xf32> -> vector<8x512xf32>
    %534 = arith.addf %530, %533 : vector<8x512xf32>
    %535 = vector.extract_strided_slice %534 {offsets = [0, 0], sizes = [8, 128], strides = [1, 1]} : vector<8x512xf32> to vector<8x128xf32>
    %cst_228 = arith.constant 5.000000e-01 : f32
    %536 = vector.broadcast %cst_228 : f32 to vector<8x128xf32>
    %537 = arith.mulf %536, %535 : vector<8x128xf32>
    %538 = math.tanh %537 : vector<8x128xf32>
    %cst_229 = arith.constant 5.000000e-01 : f32
    %539 = vector.broadcast %cst_229 : f32 to vector<8x128xf32>
    %540 = arith.mulf %539, %538 : vector<8x128xf32>
    %cst_230 = arith.constant 5.000000e-01 : f32
    %541 = vector.broadcast %cst_230 : f32 to vector<8x128xf32>
    %542 = arith.addf %540, %541 : vector<8x128xf32>
    %543 = vector.extract_strided_slice %534 {offsets = [0, 128], sizes = [8, 128], strides = [1, 1]} : vector<8x512xf32> to vector<8x128xf32>
    %cst_231 = arith.constant 5.000000e-01 : f32
    %544 = vector.broadcast %cst_231 : f32 to vector<8x128xf32>
    %545 = arith.mulf %544, %543 : vector<8x128xf32>
    %546 = math.tanh %545 : vector<8x128xf32>
    %cst_232 = arith.constant 5.000000e-01 : f32
    %547 = vector.broadcast %cst_232 : f32 to vector<8x128xf32>
    %548 = arith.mulf %547, %546 : vector<8x128xf32>
    %cst_233 = arith.constant 5.000000e-01 : f32
    %549 = vector.broadcast %cst_233 : f32 to vector<8x128xf32>
    %550 = arith.addf %548, %549 : vector<8x128xf32>
    %551 = vector.extract_strided_slice %534 {offsets = [0, 256], sizes = [8, 128], strides = [1, 1]} : vector<8x512xf32> to vector<8x128xf32>
    %552 = math.tanh %551 : vector<8x128xf32>
    %553 = vector.extract_strided_slice %534 {offsets = [0, 384], sizes = [8, 128], strides = [1, 1]} : vector<8x512xf32> to vector<8x128xf32>
    %cst_234 = arith.constant 5.000000e-01 : f32
    %554 = vector.broadcast %cst_234 : f32 to vector<8x128xf32>
    %555 = arith.mulf %554, %553 : vector<8x128xf32>
    %556 = math.tanh %555 : vector<8x128xf32>
    %cst_235 = arith.constant 5.000000e-01 : f32
    %557 = vector.broadcast %cst_235 : f32 to vector<8x128xf32>
    %558 = arith.mulf %557, %556 : vector<8x128xf32>
    %cst_236 = arith.constant 5.000000e-01 : f32
    %559 = vector.broadcast %cst_236 : f32 to vector<8x128xf32>
    %560 = arith.addf %558, %559 : vector<8x128xf32>
    %561 = arith.mulf %550, %523 : vector<8x128xf32>
    %562 = arith.mulf %542, %552 : vector<8x128xf32>
    %563 = arith.addf %561, %562 : vector<8x128xf32>
    %564 = math.tanh %563 : vector<8x128xf32>
    %565 = arith.mulf %560, %564 : vector<8x128xf32>
    %566 = arith.index_cast %c5_i32_222 : i32 to index
    %c0_237 = arith.constant 0 : index
    %c0_238 = arith.constant 0 : index
    %567 = vector.load %arg15[%566, %c0_237, %c0_238] : memref<8x8x128xf32, #tpu.memory_space<vmem>>, vector<1x8x128xf32>
    %568 = vector.shape_cast %567 : vector<1x8x128xf32> to vector<8x128xf32>
    %569 = vector.shape_cast %565 : vector<8x128xf32> to vector<1x8x128xf32>
    tpu.vector_store %arg15[%566, %c0_237, %c0_238], %569 {strides = array<i32>} : memref<8x8x128xf32, #tpu.memory_space<vmem>>, vector<1x8x128xf32>,
    %c6_i32_239 = arith.constant 6 : i32
    %c0_240 = arith.constant 0 : index
    %c0_241 = arith.constant 0 : index
    %570 = vector.load %arg16[%c0_240, %c0_241] : memref<8x512xf32, #tpu.memory_space<vmem>>, vector<8x512xf32>
    %571 = arith.truncf %565 : vector<8x128xf32> to vector<8x128xbf16>
    %c0_242 = arith.constant 0 : index
    %c0_243 = arith.constant 0 : index
    %572 = vector.load %arg8[%c0_242, %c0_243] : memref<128x512xbf16, #tpu.memory_space<vmem>>, vector<128x512xbf16>
    %cst_244 = arith.constant dense<0.000000e+00> : vector<8x512xf32>
    %573 = tpu.matmul %571, %572, %cst_244 {dimension_numbers = #tpu.dot_dimension_numbers<[1], [0], [0], [1], [0, 0, 1, 1], [], []>} : vector<8x128xbf16>, vector<128x512xbf16>, vector<8x512xf32> -> vector<8x512xf32>
    %574 = arith.addf %570, %573 : vector<8x512xf32>
    %575 = vector.extract_strided_slice %574 {offsets = [0, 0], sizes = [8, 128], strides = [1, 1]} : vector<8x512xf32> to vector<8x128xf32>
    %cst_245 = arith.constant 5.000000e-01 : f32
    %576 = vector.broadcast %cst_245 : f32 to vector<8x128xf32>
    %577 = arith.mulf %576, %575 : vector<8x128xf32>
    %578 = math.tanh %577 : vector<8x128xf32>
    %cst_246 = arith.constant 5.000000e-01 : f32
    %579 = vector.broadcast %cst_246 : f32 to vector<8x128xf32>
    %580 = arith.mulf %579, %578 : vector<8x128xf32>
    %cst_247 = arith.constant 5.000000e-01 : f32
    %581 = vector.broadcast %cst_247 : f32 to vector<8x128xf32>
    %582 = arith.addf %580, %581 : vector<8x128xf32>
    %583 = vector.extract_strided_slice %574 {offsets = [0, 128], sizes = [8, 128], strides = [1, 1]} : vector<8x512xf32> to vector<8x128xf32>
    %cst_248 = arith.constant 5.000000e-01 : f32
    %584 = vector.broadcast %cst_248 : f32 to vector<8x128xf32>
    %585 = arith.mulf %584, %583 : vector<8x128xf32>
    %586 = math.tanh %585 : vector<8x128xf32>
    %cst_249 = arith.constant 5.000000e-01 : f32
    %587 = vector.broadcast %cst_249 : f32 to vector<8x128xf32>
    %588 = arith.mulf %587, %586 : vector<8x128xf32>
    %cst_250 = arith.constant 5.000000e-01 : f32
    %589 = vector.broadcast %cst_250 : f32 to vector<8x128xf32>
    %590 = arith.addf %588, %589 : vector<8x128xf32>
    %591 = vector.extract_strided_slice %574 {offsets = [0, 256], sizes = [8, 128], strides = [1, 1]} : vector<8x512xf32> to vector<8x128xf32>
    %592 = math.tanh %591 : vector<8x128xf32>
    %593 = vector.extract_strided_slice %574 {offsets = [0, 384], sizes = [8, 128], strides = [1, 1]} : vector<8x512xf32> to vector<8x128xf32>
    %cst_251 = arith.constant 5.000000e-01 : f32
    %594 = vector.broadcast %cst_251 : f32 to vector<8x128xf32>
    %595 = arith.mulf %594, %593 : vector<8x128xf32>
    %596 = math.tanh %595 : vector<8x128xf32>
    %cst_252 = arith.constant 5.000000e-01 : f32
    %597 = vector.broadcast %cst_252 : f32 to vector<8x128xf32>
    %598 = arith.mulf %597, %596 : vector<8x128xf32>
    %cst_253 = arith.constant 5.000000e-01 : f32
    %599 = vector.broadcast %cst_253 : f32 to vector<8x128xf32>
    %600 = arith.addf %598, %599 : vector<8x128xf32>
    %601 = arith.mulf %590, %563 : vector<8x128xf32>
    %602 = arith.mulf %582, %592 : vector<8x128xf32>
    %603 = arith.addf %601, %602 : vector<8x128xf32>
    %604 = math.tanh %603 : vector<8x128xf32>
    %605 = arith.mulf %600, %604 : vector<8x128xf32>
    %606 = arith.index_cast %c6_i32_239 : i32 to index
    %c0_254 = arith.constant 0 : index
    %c0_255 = arith.constant 0 : index
    %607 = vector.load %arg15[%606, %c0_254, %c0_255] : memref<8x8x128xf32, #tpu.memory_space<vmem>>, vector<1x8x128xf32>
    %608 = vector.shape_cast %607 : vector<1x8x128xf32> to vector<8x128xf32>
    %609 = vector.shape_cast %605 : vector<8x128xf32> to vector<1x8x128xf32>
    tpu.vector_store %arg15[%606, %c0_254, %c0_255], %609 {strides = array<i32>} : memref<8x8x128xf32, #tpu.memory_space<vmem>>, vector<1x8x128xf32>,
    %c7_i32_256 = arith.constant 7 : i32
    %c0_257 = arith.constant 0 : index
    %c0_258 = arith.constant 0 : index
    %610 = vector.load %arg16[%c0_257, %c0_258] : memref<8x512xf32, #tpu.memory_space<vmem>>, vector<8x512xf32>
    %611 = arith.truncf %605 : vector<8x128xf32> to vector<8x128xbf16>
    %c0_259 = arith.constant 0 : index
    %c0_260 = arith.constant 0 : index
    %612 = vector.load %arg8[%c0_259, %c0_260] : memref<128x512xbf16, #tpu.memory_space<vmem>>, vector<128x512xbf16>
    %cst_261 = arith.constant dense<0.000000e+00> : vector<8x512xf32>
    %613 = tpu.matmul %611, %612, %cst_261 {dimension_numbers = #tpu.dot_dimension_numbers<[1], [0], [0], [1], [0, 0, 1, 1], [], []>} : vector<8x128xbf16>, vector<128x512xbf16>, vector<8x512xf32> -> vector<8x512xf32>
    %614 = arith.addf %610, %613 : vector<8x512xf32>
    %615 = vector.extract_strided_slice %614 {offsets = [0, 0], sizes = [8, 128], strides = [1, 1]} : vector<8x512xf32> to vector<8x128xf32>
    %cst_262 = arith.constant 5.000000e-01 : f32
    %616 = vector.broadcast %cst_262 : f32 to vector<8x128xf32>
    %617 = arith.mulf %616, %615 : vector<8x128xf32>
    %618 = math.tanh %617 : vector<8x128xf32>
    %cst_263 = arith.constant 5.000000e-01 : f32
    %619 = vector.broadcast %cst_263 : f32 to vector<8x128xf32>
    %620 = arith.mulf %619, %618 : vector<8x128xf32>
    %cst_264 = arith.constant 5.000000e-01 : f32
    %621 = vector.broadcast %cst_264 : f32 to vector<8x128xf32>
    %622 = arith.addf %620, %621 : vector<8x128xf32>
    %623 = vector.extract_strided_slice %614 {offsets = [0, 128], sizes = [8, 128], strides = [1, 1]} : vector<8x512xf32> to vector<8x128xf32>
    %cst_265 = arith.constant 5.000000e-01 : f32
    %624 = vector.broadcast %cst_265 : f32 to vector<8x128xf32>
    %625 = arith.mulf %624, %623 : vector<8x128xf32>
    %626 = math.tanh %625 : vector<8x128xf32>
    %cst_266 = arith.constant 5.000000e-01 : f32
    %627 = vector.broadcast %cst_266 : f32 to vector<8x128xf32>
    %628 = arith.mulf %627, %626 : vector<8x128xf32>
    %cst_267 = arith.constant 5.000000e-01 : f32
    %629 = vector.broadcast %cst_267 : f32 to vector<8x128xf32>
    %630 = arith.addf %628, %629 : vector<8x128xf32>
    %631 = vector.extract_strided_slice %614 {offsets = [0, 256], sizes = [8, 128], strides = [1, 1]} : vector<8x512xf32> to vector<8x128xf32>
    %632 = math.tanh %631 : vector<8x128xf32>
    %633 = vector.extract_strided_slice %614 {offsets = [0, 384], sizes = [8, 128], strides = [1, 1]} : vector<8x512xf32> to vector<8x128xf32>
    %cst_268 = arith.constant 5.000000e-01 : f32
    %634 = vector.broadcast %cst_268 : f32 to vector<8x128xf32>
    %635 = arith.mulf %634, %633 : vector<8x128xf32>
    %636 = math.tanh %635 : vector<8x128xf32>
    %cst_269 = arith.constant 5.000000e-01 : f32
    %637 = vector.broadcast %cst_269 : f32 to vector<8x128xf32>
    %638 = arith.mulf %637, %636 : vector<8x128xf32>
    %cst_270 = arith.constant 5.000000e-01 : f32
    %639 = vector.broadcast %cst_270 : f32 to vector<8x128xf32>
    %640 = arith.addf %638, %639 : vector<8x128xf32>
    %641 = arith.mulf %630, %603 : vector<8x128xf32>
    %642 = arith.mulf %622, %632 : vector<8x128xf32>
    %643 = arith.addf %641, %642 : vector<8x128xf32>
    %644 = math.tanh %643 : vector<8x128xf32>
    %645 = arith.mulf %640, %644 : vector<8x128xf32>
    %646 = arith.index_cast %c7_i32_256 : i32 to index
    %c0_271 = arith.constant 0 : index
    %c0_272 = arith.constant 0 : index
    %647 = vector.load %arg15[%646, %c0_271, %c0_272] : memref<8x8x128xf32, #tpu.memory_space<vmem>>, vector<1x8x128xf32>
    %648 = vector.shape_cast %647 : vector<1x8x128xf32> to vector<8x128xf32>
    %649 = vector.shape_cast %645 : vector<8x128xf32> to vector<1x8x128xf32>
    tpu.vector_store %arg15[%646, %c0_271, %c0_272], %649 {strides = array<i32>} : memref<8x8x128xf32, #tpu.memory_space<vmem>>, vector<1x8x128xf32>,
    %c8_i32_273 = arith.constant 8 : i32
    %c0_274 = arith.constant 0 : index
    %c0_275 = arith.constant 0 : index
    %c0_276 = arith.constant 0 : index
    %650 = vector.load %arg15[%c0_274, %c0_275, %c0_276] : memref<8x8x128xf32, #tpu.memory_space<vmem>>, vector<8x8x128xf32>
    %651 = vector.shape_cast %650 : vector<8x8x128xf32> to vector<64x128xf32>
    %652 = arith.truncf %651 : vector<64x128xf32> to vector<64x128xbf16>
    %c0_277 = arith.constant 0 : index
    %c0_278 = arith.constant 0 : index
    %653 = vector.load %arg10[%c0_277, %c0_278] : memref<128x128xbf16, #tpu.memory_space<vmem>>, vector<128x128xbf16>
    %cst_279 = arith.constant dense<0.000000e+00> : vector<64x128xf32>
    %654 = tpu.matmul %652, %653, %cst_279 {dimension_numbers = #tpu.dot_dimension_numbers<[1], [0], [0], [1], [0, 0, 1, 1], [], []>} : vector<64x128xbf16>, vector<128x128xbf16>, vector<64x128xf32> -> vector<64x128xf32>
    %c0_280 = arith.constant 0 : index
    %c0_281 = arith.constant 0 : index
    %655 = vector.load %arg11[%c0_280, %c0_281] : memref<1x128xf32, #tpu.memory_space<vmem>>, vector<1x128xf32>
    %656 = vector.broadcast %655 : vector<1x128xf32> to vector<64x128xf32>
    %657 = arith.addf %654, %656 : vector<64x128xf32>
    %658 = vector.shape_cast %657 : vector<64x128xf32> to vector<8x8x128xf32>
    %c0_282 = arith.constant 0 : index
    %c0_283 = arith.constant 0 : index
    %c0_284 = arith.constant 0 : index
    %659 = vector.load %arg12[%c0_282, %c0_283, %c0_284] : memref<8x8x128xf32, #tpu.memory_space<vmem>>, vector<8x8x128xf32>
    tpu.vector_store %arg12[%c0_282, %c0_283, %c0_284], %658 {strides = array<i32>} : memref<8x8x128xf32, #tpu.memory_space<vmem>>, vector<8x8x128xf32>,
    return
  }
  func.func @transform_0(%arg0: i32) -> (i32, i32, i32) {
    %c0_i32 = arith.constant 0 : i32
    %c0_i32_0 = arith.constant 0 : i32
    %c0_i32_1 = arith.constant 0 : i32
    return %c0_i32, %arg0, %c0_i32_0 : i32, i32, i32
  }
  func.func @transform_1(%arg0: i32) -> (i32, i32) {
    %c0_i32 = arith.constant 0 : i32
    %c0_i32_0 = arith.constant 0 : i32
    %c0_i32_1 = arith.constant 0 : i32
    return %c0_i32, %c0_i32_0 : i32, i32
  }
  func.func @transform_2(%arg0: i32) -> (i32, i32) {
    %c0_i32 = arith.constant 0 : i32
    %c0_i32_0 = arith.constant 0 : i32
    %c0_i32_1 = arith.constant 0 : i32
    return %c0_i32, %c0_i32_0 : i32, i32
  }
  func.func @transform_3(%arg0: i32) -> (i32, i32) {
    %c0_i32 = arith.constant 0 : i32
    %c0_i32_0 = arith.constant 0 : i32
    %c0_i32_1 = arith.constant 0 : i32
    return %c0_i32, %c0_i32_0 : i32, i32
  }
  func.func @transform_4(%arg0: i32) -> (i32, i32) {
    %c0_i32 = arith.constant 0 : i32
    %c0_i32_0 = arith.constant 0 : i32
    %c0_i32_1 = arith.constant 0 : i32
    return %c0_i32, %c0_i32_0 : i32, i32
  }
  func.func @transform_5(%arg0: i32) -> (i32, i32) {
    %c0_i32 = arith.constant 0 : i32
    %c0_i32_0 = arith.constant 0 : i32
    %c0_i32_1 = arith.constant 0 : i32
    return %c0_i32, %c0_i32_0 : i32, i32
  }
  func.func @transform_6(%arg0: i32) -> (i32, i32) {
    %c0_i32 = arith.constant 0 : i32
    %c0_i32_0 = arith.constant 0 : i32
    %c0_i32_1 = arith.constant 0 : i32
    return %c0_i32, %c0_i32_0 : i32, i32
  }
  func.func @transform_7(%arg0: i32) -> (i32, i32) {
    %c0_i32 = arith.constant 0 : i32
    %c0_i32_0 = arith.constant 0 : i32
    %c0_i32_1 = arith.constant 0 : i32
    return %c0_i32, %c0_i32_0 : i32, i32
  }
  func.func @transform_8(%arg0: i32) -> (i32, i32) {
    %c0_i32 = arith.constant 0 : i32
    %c0_i32_0 = arith.constant 0 : i32
    %c0_i32_1 = arith.constant 0 : i32
    return %c0_i32, %c0_i32_0 : i32, i32
  }
  func.func @transform_9(%arg0: i32) -> (i32, i32) {
    %c0_i32 = arith.constant 0 : i32
    %c0_i32_0 = arith.constant 0 : i32
    %c0_i32_1 = arith.constant 0 : i32
    return %c0_i32, %c0_i32_0 : i32, i32
  }
  func.func @transform_10(%arg0: i32) -> (i32, i32) {
    %c0_i32 = arith.constant 0 : i32
    %c0_i32_0 = arith.constant 0 : i32
    %c0_i32_1 = arith.constant 0 : i32
    return %c0_i32, %c0_i32_0 : i32, i32
  }
  func.func @transform_11(%arg0: i32) -> (i32, i32, i32) {
    %c0_i32 = arith.constant 0 : i32
    %c0_i32_0 = arith.constant 0 : i32
    %c0_i32_1 = arith.constant 0 : i32
    return %c0_i32, %arg0, %c0_i32_0 : i32, i32, i32
  }
  func.func @transform_12(%arg0: i32) -> (i32, i32) {
    %c0_i32 = arith.constant 0 : i32
    %c0_i32_0 = arith.constant 0 : i32
    return %arg0, %c0_i32 : i32, i32
  }
}

</mosaic_0001>

<llo_original>
// kernel: lstm_autoencoder_forward.1
$region0: #{lstm_autoencoder_forward.1}
  #allocation0 [shape = 'u32[]', space=smem, size = 0x4, offset = 0x4, fixed_abs, tag = 'smem constant byte address 0x4 - core index']
  #allocation1 [shape = 'u32[144,128]{1,0:T(1,128)}', space=vmem, size = 0x12000, scoped, tag = 'internal scratch']
  #allocation2 [shape = 'f32[8,8,512]{2,1,0:T(8,128)}', space=vmem, size = 0x20000, scoped, tag = 'scratch operand']
  #allocation3 [shape = 'f32[8,8,128]{2,1,0:T(8,128)}', space=vmem, size = 0x8000, scoped, tag = 'scratch operand']
  #allocation4 [shape = 'f32[8,512]{1,0:T(8,128)}', space=vmem, size = 0x4000, scoped, tag = 'scratch operand']
  %s0 = inlined_call_operand.vmem [shape: f32[8,8,128], index: 0, kind: input, shape index: {}]
  %s1 = inlined_call_operand.vmem [shape: bf16[128,512], index: 1, kind: input, shape index: {}]
  %s2 = inlined_call_operand.vmem [shape: bf16[128,512], index: 2, kind: input, shape index: {}]
  %s3 = inlined_call_operand.vmem [shape: f32[1,512], index: 3, kind: input, shape index: {}]
  %s4 = inlined_call_operand.vmem [shape: bf16[128,128], index: 4, kind: input, shape index: {}]
  %s5 = inlined_call_operand.vmem [shape: f32[1,128], index: 5, kind: input, shape index: {}]
  %s6 = inlined_call_operand.vmem [shape: bf16[128,512], index: 6, kind: input, shape index: {}]
  %s7 = inlined_call_operand.vmem [shape: bf16[128,512], index: 7, kind: input, shape index: {}]
  %s8 = inlined_call_operand.vmem [shape: f32[1,512], index: 8, kind: input, shape index: {}]
  %s9 = inlined_call_operand.vmem [shape: bf16[128,128], index: 9, kind: input, shape index: {}]
  %s10 = inlined_call_operand.vmem [shape: f32[1,128], index: 10, kind: input, shape index: {}]
  %s11 = inlined_call_operand.vmem [shape: f32[8,8,128], index: 11, kind: output, shape index: {0}]
  %s12 = inlined_call_operand.vmem [shape: f32[8,128], index: 12, kind: output, shape index: {1}]
  %13 = xla_tuple %s11, %s12
  %s14 = sld [smem:[#allocation0]]
  $region62: #{lstm_autoencoder_forward.1} parent=0
    _
  %s16 = ssub.s32 1, %s14
  %s17 = scalar_select 0, %s16, %s14
  // Predicated region
  $region2: #{lstm_autoencoder_forward.1} parent=0 // pred_check
    _
  $region3: #{lstm_autoencoder_forward.1} parent=0 // pred_check_branch
    %19 = sbr.rel (0) target = $region5
  $region4: #{lstm_autoencoder_forward.1} parent=0 // pred_region
    _
  $region5: #{lstm_autoencoder_forward.1} parent=0 // pred_fallthru
    _
  // Predicated region
  $region6: #{lstm_autoencoder_forward.1} parent=0 // pred_check
    _
  $region7: #{lstm_autoencoder_forward.1} parent=0 // pred_check_branch
    %21 = sbr.rel (0) target = $region9
  $region8: #{lstm_autoencoder_forward.1} parent=0 // pred_region
    _
  $region9: #{lstm_autoencoder_forward.1} parent=0 // pred_fallthru
    _
  // Predicated region
  $region10: #{lstm_autoencoder_forward.1} parent=0 // pred_check
    _
  $region11: #{lstm_autoencoder_forward.1} parent=0 // pred_check_branch
    %23 = sbr.rel (0) target = $region13
  $region12: #{lstm_autoencoder_forward.1} parent=0 // pred_region
    _
  $region13: #{lstm_autoencoder_forward.1} parent=0 // pred_fallthru
    _
  // Predicated region
  $region14: #{lstm_autoencoder_forward.1} parent=0 // pred_check
    _
  $region15: #{lstm_autoencoder_forward.1} parent=0 // pred_check_branch
    %25 = sbr.rel (0) target = $region17
  $region16: #{lstm_autoencoder_forward.1} parent=0 // pred_region
    _
  $region17: #{lstm_autoencoder_forward.1} parent=0 // pred_fallthru
    _
  // Predicated region
  $region18: #{lstm_autoencoder_forward.1} parent=0 // pred_check
    _
  $region19: #{lstm_autoencoder_forward.1} parent=0 // pred_check_branch
    %27 = sbr.rel (0) target = $region21
  $region20: #{lstm_autoencoder_forward.1} parent=0 // pred_region
    _
  $region21: #{lstm_autoencoder_forward.1} parent=0 // pred_fallthru
    _
  // Predicated region
  $region22: #{lstm_autoencoder_forward.1} parent=0 // pred_check
    _
  $region23: #{lstm_autoencoder_forward.1} parent=0 // pred_check_branch
    %29 = sbr.rel (0) target = $region25
  $region24: #{lstm_autoencoder_forward.1} parent=0 // pred_region
    _
  $region25: #{lstm_autoencoder_forward.1} parent=0 // pred_fallthru
    _
  // Predicated region
  $region26: #{lstm_autoencoder_forward.1} parent=0 // pred_check
    _
  $region27: #{lstm_autoencoder_forward.1} parent=0 // pred_check_branch
    %31 = sbr.rel (0) target = $region29
  $region28: #{lstm_autoencoder_forward.1} parent=0 // pred_region
    _
  $region29: #{lstm_autoencoder_forward.1} parent=0 // pred_fallthru
    _
  // Predicated region
  $region30: #{lstm_autoencoder_forward.1} parent=0 // pred_check
    _
  $region31: #{lstm_autoencoder_forward.1} parent=0 // pred_check_branch
    %33 = sbr.rel (0) target = $region33
  $region32: #{lstm_autoencoder_forward.1} parent=0 // pred_region
    _
  $region33: #{lstm_autoencoder_forward.1} parent=0 // pred_fallthru
    _
  // Predicated region
  $region34: #{lstm_autoencoder_forward.1} parent=0 // pred_check
    _
  $region35: #{lstm_autoencoder_forward.1} parent=0 // pred_check_branch
    %35 = sbr.rel (0) target = $region37
  $region36: #{lstm_autoencoder_forward.1} parent=0 // pred_region
    _
  $region37: #{lstm_autoencoder_forward.1} parent=0 // pred_fallthru
    _
  // Predicated region
  $region38: #{lstm_autoencoder_forward.1} parent=0 // pred_check
    _
  $region39: #{lstm_autoencoder_forward.1} parent=0 // pred_check_branch
    %37 = sbr.rel (0) target = $region41
  $region40: #{lstm_autoencoder_forward.1} parent=0 // pred_region
    _
  $region41: #{lstm_autoencoder_forward.1} parent=0 // pred_fallthru
    _
  // Predicated region
  $region42: #{lstm_autoencoder_forward.1} parent=0 // pred_check
    _
  $region43: #{lstm_autoencoder_forward.1} parent=0 // pred_check_branch
    %39 = sbr.rel (0) target = $region45
  $region44: #{lstm_autoencoder_forward.1} parent=0 // pred_region
    _
  $region45: #{lstm_autoencoder_forward.1} parent=0 // pred_fallthru
    _
  %v41 = vld [vmem:[%s0] sm:$0xff]
  %v42 = vld [vmem:[%s0 + $0x8] sm:$0xff]
  %v43 = vld [vmem:[%s0 + $0x10] sm:$0xff]
  %v44 = vld [vmem:[%s0 + $0x18] sm:$0xff]
  %v45 = vld [vmem:[%s0 + $0x20] sm:$0xff]
  %v46 = vld [vmem:[%s0 + $0x28] sm:$0xff]
  %v47 = vld [vmem:[%s0 + $0x30] sm:$0xff]
  %v48 = vld [vmem:[%s0 + $0x38] sm:$0xff]
  %v49 = vpack.c.bf16 %v42, %v41
  %v50 = vpack.c.bf16 %v44, %v43
  %v51 = vpack.c.bf16 %v46, %v45
  %v52 = vpack.c.bf16 %v48, %v47
  %v53 = vld [vmem:[%s1] sm:$0xff]
  %v54 = vld [vmem:[%s1 + $0x8] sm:$0xff]
  %v55 = vld [vmem:[%s1 + $0x10] sm:$0xff]
  %v56 = vld [vmem:[%s1 + $0x18] sm:$0xff]
  %v57 = vld [vmem:[%s1 + $0x20] sm:$0xff]
  %v58 = vld [vmem:[%s1 + $0x28] sm:$0xff]
  %v59 = vld [vmem:[%s1 + $0x30] sm:$0xff]
  %v60 = vld [vmem:[%s1 + $0x38] sm:$0xff]
  %v61 = vld [vmem:[%s1 + $0x40] sm:$0xff]
  %v62 = vld [vmem:[%s1 + $0x48] sm:$0xff]
  %v63 = vld [vmem:[%s1 + $0x50] sm:$0xff]
  %v64 = vld [vmem:[%s1 + $0x58] sm:$0xff]
  %v65 = vld [vmem:[%s1 + $0x60] sm:$0xff]
  %v66 = vld [vmem:[%s1 + $0x68] sm:$0xff]
  %v67 = vld [vmem:[%s1 + $0x70] sm:$0xff]
  %v68 = vld [vmem:[%s1 + $0x78] sm:$0xff]
  %v69 = vld [vmem:[%s1 + $0x80] sm:$0xff]
  %v70 = vld [vmem:[%s1 + $0x88] sm:$0xff]
  %v71 = vld [vmem:[%s1 + $0x90] sm:$0xff]
  %v72 = vld [vmem:[%s1 + $0x98] sm:$0xff]
  %v73 = vld [vmem:[%s1 + $0xa0] sm:$0xff]
  %v74 = vld [vmem:[%s1 + $0xa8] sm:$0xff]
  %v75 = vld [vmem:[%s1 + $0xb0] sm:$0xff]
  %v76 = vld [vmem:[%s1 + $0xb8] sm:$0xff]
  %v77 = vld [vmem:[%s1 + $0xc0] sm:$0xff]
  %v78 = vld [vmem:[%s1 + $0xc8] sm:$0xff]
  %v79 = vld [vmem:[%s1 + $0xd0] sm:$0xff]
  %v80 = vld [vmem:[%s1 + $0xd8] sm:$0xff]
  %v81 = vld [vmem:[%s1 + $0xe0] sm:$0xff]
  %v82 = vld [vmem:[%s1 + $0xe8] sm:$0xff]
  %v83 = vld [vmem:[%s1 + $0xf0] sm:$0xff]
  %v84 = vld [vmem:[%s1 + $0xf8] sm:$0xff]
  %v85 = vld [vmem:[%s3] sm:$0xf]
  %v87 = vlaneseq
  %v88 = vshrl.u32 %v87, 7
  %v89 = vsub.s32 0, %v88
  %v90 = vrot.slane %v85, %v89
  %v91 = vlaneseq
  %v92 = vshrl.u32 %v91, 7
  %v93 = vsub.s32 1, %v92
  %v94 = vrot.slane %v85, %v93
  %v95 = vlaneseq
  %v96 = vshrl.u32 %v95, 7
  %v97 = vsub.s32 2, %v96
  %v98 = vrot.slane %v85, %v97
  %v99 = vlaneseq
  %v100 = vshrl.u32 %v99, 7
  %v101 = vsub.s32 3, %v100
  %v102 = vrot.slane %v85, %v101
  %v139 = vunpack.c.l.b16 %v53
  %v140 = vunpack.c.h.b16 %v53
  %v141 = vunpack.c.l.b16 %v54
  %v142 = vunpack.c.h.b16 %v54
  %v143 = vunpack.c.l.b16 %v55
  %v144 = vunpack.c.h.b16 %v55
  %v145 = vunpack.c.l.b16 %v56
  %v146 = vunpack.c.h.b16 %v56
  %v147 = vunpack.c.l.b16 %v57
  %v148 = vunpack.c.h.b16 %v57
  %v149 = vunpack.c.l.b16 %v58
  %v150 = vunpack.c.h.b16 %v58
  %v151 = vunpack.c.l.b16 %v59
  %v152 = vunpack.c.h.b16 %v59
  %v153 = vunpack.c.l.b16 %v60
  %v154 = vunpack.c.h.b16 %v60
  %v155 = vunpack.c.l.b16 %v61
  %v156 = vunpack.c.h.b16 %v61
  %v157 = vunpack.c.l.b16 %v62
  %v158 = vunpack.c.h.b16 %v62
  %v159 = vunpack.c.l.b16 %v63
  %v160 = vunpack.c.h.b16 %v63
  %v161 = vunpack.c.l.b16 %v64
  %v162 = vunpack.c.h.b16 %v64
  %v163 = vunpack.c.l.b16 %v65
  %v164 = vunpack.c.h.b16 %v65
  %v165 = vunpack.c.l.b16 %v66
  %v166 = vunpack.c.h.b16 %v66
  %v167 = vunpack.c.l.b16 %v67
  %v168 = vunpack.c.h.b16 %v67
  %v169 = vunpack.c.l.b16 %v68
  %v170 = vunpack.c.h.b16 %v68
  %v171 = vunpack.c.l.b16 %v69
  %v172 = vunpack.c.h.b16 %v69
  %v173 = vunpack.c.l.b16 %v70
  %v174 = vunpack.c.h.b16 %v70
  %v175 = vunpack.c.l.b16 %v71
  %v176 = vunpack.c.h.b16 %v71
  %v177 = vunpack.c.l.b16 %v72
  %v178 = vunpack.c.h.b16 %v72
  %v179 = vunpack.c.l.b16 %v73
  %v180 = vunpack.c.h.b16 %v73
  %v181 = vunpack.c.l.b16 %v74
  %v182 = vunpack.c.h.b16 %v74
  %v183 = vunpack.c.l.b16 %v75
  %v184 = vunpack.c.h.b16 %v75
  %v185 = vunpack.c.l.b16 %v76
  %v186 = vunpack.c.h.b16 %v76
  %v187 = vunpack.c.l.b16 %v77
  %v188 = vunpack.c.h.b16 %v77
  %v189 = vunpack.c.l.b16 %v78
  %v190 = vunpack.c.h.b16 %v78
  %v191 = vunpack.c.l.b16 %v79
  %v192 = vunpack.c.h.b16 %v79
  %v193 = vunpack.c.l.b16 %v80
  %v194 = vunpack.c.h.b16 %v80
  %v195 = vunpack.c.l.b16 %v81
  %v196 = vunpack.c.h.b16 %v81
  %v197 = vunpack.c.l.b16 %v82
  %v198 = vunpack.c.h.b16 %v82
  %v199 = vunpack.c.l.b16 %v83
  %v200 = vunpack.c.h.b16 %v83
  %v201 = vunpack.c.l.b16 %v84
  %v202 = vunpack.c.h.b16 %v84
  %v203 = vpack.c.b16 %v143, %v139
  %v204 = vpack.c.b16 %v144, %v140
  %v205 = vpack.c.b16 %v145, %v141
  %v206 = vpack.c.b16 %v146, %v142
  %v207 = vpack.c.b16 %v151, %v147
  %v208 = vpack.c.b16 %v152, %v148
  %v209 = vpack.c.b16 %v153, %v149
  %v210 = vpack.c.b16 %v154, %v150
  %v211 = vpack.c.b16 %v159, %v155
  %v212 = vpack.c.b16 %v160, %v156
  %v213 = vpack.c.b16 %v161, %v157
  %v214 = vpack.c.b16 %v162, %v158
  %v215 = vpack.c.b16 %v167, %v163
  %v216 = vpack.c.b16 %v168, %v164
  %v217 = vpack.c.b16 %v169, %v165
  %v218 = vpack.c.b16 %v170, %v166
  %v219 = vpack.c.b16 %v175, %v171
  %v220 = vpack.c.b16 %v176, %v172
  %v221 = vpack.c.b16 %v177, %v173
  %v222 = vpack.c.b16 %v178, %v174
  %v223 = vpack.c.b16 %v183, %v179
  %v224 = vpack.c.b16 %v184, %v180
  %v225 = vpack.c.b16 %v185, %v181
  %v226 = vpack.c.b16 %v186, %v182
  %v227 = vpack.c.b16 %v191, %v187
  %v228 = vpack.c.b16 %v192, %v188
  %v229 = vpack.c.b16 %v193, %v189
  %v230 = vpack.c.b16 %v194, %v190
  %v231 = vpack.c.b16 %v199, %v195
  %v232 = vpack.c.b16 %v200, %v196
  %v233 = vpack.c.b16 %v201, %v197
  %v234 = vpack.c.b16 %v202, %v198
  %267 = vmatprep.subr.bf16.mxu0 %v232
  %268 = vmatpush1.bf16.msra.mxu0 %v231
  %269 = vmatprep.subr.bf16.mxu0 %v228
  %270 = vmatpush1.bf16.msra.mxu0 %v227
  %271 = vmatprep.subr.bf16.mxu0 %v224
  %272 = vmatpush1.bf16.msra.mxu0 %v223
  %273 = vmatprep.subr.bf16.mxu0 %v220
  %274 = vmatpush1.bf16.msra.mxu0 %v219
  %275 = vmatprep.subr.bf16.mxu0 %v216
  %276 = vmatpush1.bf16.msra.mxu0 %v215
  %277 = vmatprep.subr.bf16.mxu0 %v212
  %278 = vmatpush1.bf16.msra.mxu0 %v211
  %279 = vmatprep.subr.bf16.mxu0 %v208
  %280 = vmatpush1.bf16.msra.mxu0 %v207
  %281 = vmatprep.subr.bf16.mxu0 %v204
  %282 = vmatpush1.bf16.msra.mxu0 %v203
  %283 = vmatprep.subr.bf16.mxu0 0
  %284 = vmatpush2.bf16.msra.mxu0 0
  %285 = vmatprep.subr.bf16.mxu0 0
  %286 = vmatpush2.bf16.msra.mxu0 0
  %287 = vmatprep.subr.bf16.mxu0 0
  %288 = vmatpush2.bf16.msra.mxu0 0
  %289 = vmatprep.subr.bf16.mxu0 0
  %290 = vmatpush2.bf16.msra.mxu0 0
  %291 = vmatprep.subr.bf16.mxu0 0
  %292 = vmatpush2.bf16.msra.mxu0 0
  %293 = vmatprep.subr.bf16.mxu0 0
  %294 = vmatpush2.bf16.msra.mxu0 0
  %295 = vmatprep.subr.bf16.mxu0 0
  %296 = vmatpush2.bf16.msra.mxu0 0
  %297 = vmatprep.subr.bf16.mxu0 0
  %298 = vmatpush2.bf16.msra.mxu0 0
  %299 = vmatprep.mubr.bf16.mxu0 0
  %300 = vmatmul.mubr.bf16.gmra.mxu0 %v49
  %v301 = vpop.f32.mrf.mxu0
  %v302 = vadd.f32 %v90, %v301
  %v303 = vpop.f32.mrf.mxu0
  %v304 = vadd.f32 %v94, %v303
  %v305 = vpop.f32.mrf.mxu0
  %v306 = vadd.f32 %v90, %v305
  %v307 = vpop.f32.mrf.mxu0
  %v308 = vadd.f32 %v94, %v307
  %309 = vmatprep.mubr.bf16.mxu0 0
  %310 = vmatmul.mubr.bf16.gmra.mxu0 %v50
  %v311 = vpop.f32.mrf.mxu0
  %v312 = vadd.f32 %v90, %v311
  %v313 = vpop.f32.mrf.mxu0
  %v314 = vadd.f32 %v94, %v313
  %v315 = vpop.f32.mrf.mxu0
  %v316 = vadd.f32 %v90, %v315
  %v317 = vpop.f32.mrf.mxu0
  %v318 = vadd.f32 %v94, %v317
  %319 = vmatprep.mubr.bf16.mxu0 0
  %320 = vmatmul.mubr.bf16.gmra.mxu0 %v51
  %v321 = vpop.f32.mrf.mxu0
  %v322 = vadd.f32 %v90, %v321
  %v323 = vpop.f32.mrf.mxu0
  %v324 = vadd.f32 %v94, %v323
  %v325 = vpop.f32.mrf.mxu0
  %v326 = vadd.f32 %v90, %v325
  %v327 = vpop.f32.mrf.mxu0
  %v328 = vadd.f32 %v94, %v327
  %329 = vmatprep.mubr.bf16.mxu0 0
  %330 = vmatmul.mubr.bf16.gmra.mxu0 %v52
  %v331 = vpop.f32.mrf.mxu0
  %v332 = vadd.f32 %v90, %v331
  %v333 = vpop.f32.mrf.mxu0
  %v334 = vadd.f32 %v94, %v333
  %v335 = vpop.f32.mrf.mxu0
  %v336 = vadd.f32 %v90, %v335
  %v337 = vpop.f32.mrf.mxu0
  %v338 = vadd.f32 %v94, %v337
  %339 = vdwg.mxu0
  %340 = vmatprep.subr.bf16.mxu0 %v234
  %341 = vmatpush1.bf16.msra.mxu0 %v233
  %342 = vmatprep.subr.bf16.mxu0 %v230
  %343 = vmatpush1.bf16.msra.mxu0 %v229
  %344 = vmatprep.subr.bf16.mxu0 %v226
  %345 = vmatpush1.bf16.msra.mxu0 %v225
  %346 = vmatprep.subr.bf16.mxu0 %v222
  %347 = vmatpush1.bf16.msra.mxu0 %v221
  %348 = vmatprep.subr.bf16.mxu0 %v218
  %349 = vmatpush1.bf16.msra.mxu0 %v217
  %350 = vmatprep.subr.bf16.mxu0 %v214
  %351 = vmatpush1.bf16.msra.mxu0 %v213
  %352 = vmatprep.subr.bf16.mxu0 %v210
  %353 = vmatpush1.bf16.msra.mxu0 %v209
  %354 = vmatprep.subr.bf16.mxu0 %v206
  %355 = vmatpush1.bf16.msra.mxu0 %v205
  %356 = vmatprep.subr.bf16.mxu0 0
  %357 = vmatpush2.bf16.msra.mxu0 0
  %358 = vmatprep.subr.bf16.mxu0 0
  %359 = vmatpush2.bf16.msra.mxu0 0
  %360 = vmatprep.subr.bf16.mxu0 0
  %361 = vmatpush2.bf16.msra.mxu0 0
  %362 = vmatprep.subr.bf16.mxu0 0
  %363 = vmatpush2.bf16.msra.mxu0 0
  %364 = vmatprep.subr.bf16.mxu0 0
  %365 = vmatpush2.bf16.msra.mxu0 0
  %366 = vmatprep.subr.bf16.mxu0 0
  %367 = vmatpush2.bf16.msra.mxu0 0
  %368 = vmatprep.subr.bf16.mxu0 0
  %369 = vmatpush2.bf16.msra.mxu0 0
  %370 = vmatprep.subr.bf16.mxu0 0
  %371 = vmatpush2.bf16.msra.mxu0 0
  %372 = vmatprep.mubr.bf16.mxu0 0
  %373 = vmatmul.mubr.bf16.gmra.mxu0 %v49
  %v374 = vpop.f32.mrf.mxu0
  %v375 = vadd.f32 %v98, %v374
  %v376 = vpop.f32.mrf.mxu0
  %v377 = vadd.f32 %v102, %v376
  %v378 = vpop.f32.mrf.mxu0
  %v379 = vadd.f32 %v98, %v378
  %v380 = vpop.f32.mrf.mxu0
  %v381 = vadd.f32 %v102, %v380
  %382 = vmatprep.mubr.bf16.mxu0 0
  %383 = vmatmul.mubr.bf16.gmra.mxu0 %v50
  %v384 = vpop.f32.mrf.mxu0
  %v385 = vadd.f32 %v98, %v384
  %v386 = vpop.f32.mrf.mxu0
  %v387 = vadd.f32 %v102, %v386
  %v388 = vpop.f32.mrf.mxu0
  %v389 = vadd.f32 %v98, %v388
  %v390 = vpop.f32.mrf.mxu0
  %v391 = vadd.f32 %v102, %v390
  %392 = vmatprep.mubr.bf16.mxu0 0
  %393 = vmatmul.mubr.bf16.gmra.mxu0 %v51
  %v394 = vpop.f32.mrf.mxu0
  %v395 = vadd.f32 %v98, %v394
  %v396 = vpop.f32.mrf.mxu0
  %v397 = vadd.f32 %v102, %v396
  %v398 = vpop.f32.mrf.mxu0
  %v399 = vadd.f32 %v98, %v398
  %v400 = vpop.f32.mrf.mxu0
  %v401 = vadd.f32 %v102, %v400
  %402 = vmatprep.mubr.bf16.mxu0 0
  %403 = vmatmul.mubr.bf16.gmra.mxu0 %v52
  %v404 = vpop.f32.mrf.mxu0
  %v405 = vadd.f32 %v98, %v404
  %v406 = vpop.f32.mrf.mxu0
  %v407 = vadd.f32 %v102, %v406
  %v408 = vpop.f32.mrf.mxu0
  %v409 = vadd.f32 %v98, %v408
  %v410 = vpop.f32.mrf.mxu0
  %v411 = vadd.f32 %v102, %v410
  %412 = vdwg.mxu0
  %413 = vst [vmem:[#allocation2] sm:$0xff] %v302
  %414 = vst [vmem:[#allocation2 + $0x8] sm:$0xff] %v304
  %415 = vst [vmem:[#allocation2 + $0x10] sm:$0xff] %v375
  %416 = vst [vmem:[#allocation2 + $0x18] sm:$0xff] %v377
  %417 = vst [vmem:[#allocation2 + $0x20] sm:$0xff] %v306
  %418 = vst [vmem:[#allocation2 + $0x28] sm:$0xff] %v308
  %419 = vst [vmem:[#allocation2 + $0x30] sm:$0xff] %v379
  %420 = vst [vmem:[#allocation2 + $0x38] sm:$0xff] %v381
  %421 = vst [vmem:[#allocation2 + $0x40] sm:$0xff] %v312
  %422 = vst [vmem:[#allocation2 + $0x48] sm:$0xff] %v314
  %423 = vst [vmem:[#allocation2 + $0x50] sm:$0xff] %v385
  %424 = vst [vmem:[#allocation2 + $0x58] sm:$0xff] %v387
  %425 = vst [vmem:[#allocation2 + $0x60] sm:$0xff] %v316
  %426 = vst [vmem:[#allocation2 + $0x68] sm:$0xff] %v318
  %427 = vst [vmem:[#allocation2 + $0x70] sm:$0xff] %v389
  %428 = vst [vmem:[#allocation2 + $0x78] sm:$0xff] %v391
  %429 = vst [vmem:[#allocation2 + $0x80] sm:$0xff] %v322
  %430 = vst [vmem:[#allocation2 + $0x88] sm:$0xff] %v324
  %431 = vst [vmem:[#allocation2 + $0x90] sm:$0xff] %v395
  %432 = vst [vmem:[#allocation2 + $0x98] sm:$0xff] %v397
  %433 = vst [vmem:[#allocation2 + $0xa0] sm:$0xff] %v326
  %434 = vst [vmem:[#allocation2 + $0xa8] sm:$0xff] %v328
  %435 = vst [vmem:[#allocation2 + $0xb0] sm:$0xff] %v399
  %436 = vst [vmem:[#allocation2 + $0xb8] sm:$0xff] %v401
  %437 = vst [vmem:[#allocation2 + $0xc0] sm:$0xff] %v332
  %438 = vst [vmem:[#allocation2 + $0xc8] sm:$0xff] %v334
  %439 = vst [vmem:[#allocation2 + $0xd0] sm:$0xff] %v405
  %440 = vst [vmem:[#allocation2 + $0xd8] sm:$0xff] %v407
  %441 = vst [vmem:[#allocation2 + $0xe0] sm:$0xff] %v336
  %442 = vst [vmem:[#allocation2 + $0xe8] sm:$0xff] %v338
  %443 = vst [vmem:[#allocation2 + $0xf0] sm:$0xff] %v409
  %444 = vst [vmem:[#allocation2 + $0xf8] sm:$0xff] %v411
  %v445 = vld [vmem:[#allocation2] sm:$0xff]
  %v446 = vld [vmem:[#allocation2 + $0x8] sm:$0xff]
  %v447 = vld [vmem:[#allocation2 + $0x10] sm:$0xff]
  %v448 = vld [vmem:[#allocation2 + $0x18] sm:$0xff]
  %v449 = vld [vmem:[%s2] sm:$0xff]
  %v450 = vld [vmem:[%s2 + $0x8] sm:$0xff]
  %v451 = vld [vmem:[%s2 + $0x10] sm:$0xff]
  %v452 = vld [vmem:[%s2 + $0x18] sm:$0xff]
  %v453 = vld [vmem:[%s2 + $0x20] sm:$0xff]
  %v454 = vld [vmem:[%s2 + $0x28] sm:$0xff]
  %v455 = vld [vmem:[%s2 + $0x30] sm:$0xff]
  %v456 = vld [vmem:[%s2 + $0x38] sm:$0xff]
  %v457 = vld [vmem:[%s2 + $0x40] sm:$0xff]
  %v458 = vld [vmem:[%s2 + $0x48] sm:$0xff]
  %v459 = vld [vmem:[%s2 + $0x50] sm:$0xff]
  %v460 = vld [vmem:[%s2 + $0x58] sm:$0xff]
  %v461 = vld [vmem:[%s2 + $0x60] sm:$0xff]
  %v462 = vld [vmem:[%s2 + $0x68] sm:$0xff]
  %v463 = vld [vmem:[%s2 + $0x70] sm:$0xff]
  %v464 = vld [vmem:[%s2 + $0x78] sm:$0xff]
  %v465 = vld [vmem:[%s2 + $0x80] sm:$0xff]
  %v466 = vld [vmem:[%s2 + $0x88] sm:$0xff]
  %v467 = vld [vmem:[%s2 + $0x90] sm:$0xff]
  %v468 = vld [vmem:[%s2 + $0x98] sm:$0xff]
  %v469 = vld [vmem:[%s2 + $0xa0] sm:$0xff]
  %v470 = vld [vmem:[%s2 + $0xa8] sm:$0xff]
  %v471 = vld [vmem:[%s2 + $0xb0] sm:$0xff]
  %v472 = vld [vmem:[%s2 + $0xb8] sm:$0xff]
  %v473 = vld [vmem:[%s2 + $0xc0] sm:$0xff]
  %v474 = vld [vmem:[%s2 + $0xc8] sm:$0xff]
  %v475 = vld [vmem:[%s2 + $0xd0] sm:$0xff]
  %v476 = vld [vmem:[%s2 + $0xd8] sm:$0xff]
  %v477 = vld [vmem:[%s2 + $0xe0] sm:$0xff]
  %v478 = vld [vmem:[%s2 + $0xe8] sm:$0xff]
  %v479 = vld [vmem:[%s2 + $0xf0] sm:$0xff]
  %v480 = vld [vmem:[%s2 + $0xf8] sm:$0xff]
  %v513 = vunpack.c.l.b16 %v449
  %v514 = vunpack.c.h.b16 %v449
  %v515 = vunpack.c.l.b16 %v450
  %v516 = vunpack.c.h.b16 %v450
  %v517 = vunpack.c.l.b16 %v451
  %v518 = vunpack.c.h.b16 %v451
  %v519 = vunpack.c.l.b16 %v452
  %v520 = vunpack.c.h.b16 %v452
  %v521 = vunpack.c.l.b16 %v453
  %v522 = vunpack.c.h.b16 %v453
  %v523 = vunpack.c.l.b16 %v454
  %v524 = vunpack.c.h.b16 %v454
  %v525 = vunpack.c.l.b16 %v455
  %v526 = vunpack.c.h.b16 %v455
  %v527 = vunpack.c.l.b16 %v456
  %v528 = vunpack.c.h.b16 %v456
  %v529 = vunpack.c.l.b16 %v457
  %v530 = vunpack.c.h.b16 %v457
  %v531 = vunpack.c.l.b16 %v458
  %v532 = vunpack.c.h.b16 %v458
  %v533 = vunpack.c.l.b16 %v459
  %v534 = vunpack.c.h.b16 %v459
  %v535 = vunpack.c.l.b16 %v460
  %v536 = vunpack.c.h.b16 %v460
  %v537 = vunpack.c.l.b16 %v461
  %v538 = vunpack.c.h.b16 %v461
  %v539 = vunpack.c.l.b16 %v462
  %v540 = vunpack.c.h.b16 %v462
  %v541 = vunpack.c.l.b16 %v463
  %v542 = vunpack.c.h.b16 %v463
  %v543 = vunpack.c.l.b16 %v464
  %v544 = vunpack.c.h.b16 %v464
  %v545 = vunpack.c.l.b16 %v465
  %v546 = vunpack.c.h.b16 %v465
  %v547 = vunpack.c.l.b16 %v466
  %v548 = vunpack.c.h.b16 %v466
  %v549 = vunpack.c.l.b16 %v467
  %v550 = vunpack.c.h.b16 %v467
  %v551 = vunpack.c.l.b16 %v468
  %v552 = vunpack.c.h.b16 %v468
  %v553 = vunpack.c.l.b16 %v469
  %v554 = vunpack.c.h.b16 %v469
  %v555 = vunpack.c.l.b16 %v470
  %v556 = vunpack.c.h.b16 %v470
  %v557 = vunpack.c.l.b16 %v471
  %v558 = vunpack.c.h.b16 %v471
  %v559 = vunpack.c.l.b16 %v472
  %v560 = vunpack.c.h.b16 %v472
  %v561 = vunpack.c.l.b16 %v473
  %v562 = vunpack.c.h.b16 %v473
  %v563 = vunpack.c.l.b16 %v474
  %v564 = vunpack.c.h.b16 %v474
  %v565 = vunpack.c.l.b16 %v475
  %v566 = vunpack.c.h.b16 %v475
  %v567 = vunpack.c.l.b16 %v476
  %v568 = vunpack.c.h.b16 %v476
  %v569 = vunpack.c.l.b16 %v477
  %v570 = vunpack.c.h.b16 %v477
  %v571 = vunpack.c.l.b16 %v478
  %v572 = vunpack.c.h.b16 %v478
  %v573 = vunpack.c.l.b16 %v479
  %v574 = vunpack.c.h.b16 %v479
  %v575 = vunpack.c.l.b16 %v480
  %v576 = vunpack.c.h.b16 %v480
  %v577 = vpack.c.b16 %v517, %v513
  %v578 = vpack.c.b16 %v518, %v514
  %v579 = vpack.c.b16 %v519, %v515
  %v580 = vpack.c.b16 %v520, %v516
  %v581 = vpack.c.b16 %v525, %v521
  %v582 = vpack.c.b16 %v526, %v522
  %v583 = vpack.c.b16 %v527, %v523
  %v584 = vpack.c.b16 %v528, %v524
  %v585 = vpack.c.b16 %v533, %v529
  %v586 = vpack.c.b16 %v534, %v530
  %v587 = vpack.c.b16 %v535, %v531
  %v588 = vpack.c.b16 %v536, %v532
  %v589 = vpack.c.b16 %v541, %v537
  %v590 = vpack.c.b16 %v542, %v538
  %v591 = vpack.c.b16 %v543, %v539
  %v592 = vpack.c.b16 %v544, %v540
  %v593 = vpack.c.b16 %v549, %v545
  %v594 = vpack.c.b16 %v550, %v546
  %v595 = vpack.c.b16 %v551, %v547
  %v596 = vpack.c.b16 %v552, %v548
  %v597 = vpack.c.b16 %v557, %v553
  %v598 = vpack.c.b16 %v558, %v554
  %v599 = vpack.c.b16 %v559, %v555
  %v600 = vpack.c.b16 %v560, %v556
  %v601 = vpack.c.b16 %v565, %v561
  %v602 = vpack.c.b16 %v566, %v562
  %v603 = vpack.c.b16 %v567, %v563
  %v604 = vpack.c.b16 %v568, %v564
  %v605 = vpack.c.b16 %v573, %v569
  %v606 = vpack.c.b16 %v574, %v570
  %v607 = vpack.c.b16 %v575, %v571
  %v608 = vpack.c.b16 %v576, %v572
  %641 = vmatprep.subr.bf16.mxu0 %v606
  %642 = vmatpush1.bf16.msra.mxu0 %v605
  %643 = vmatprep.subr.bf16.mxu0 %v602
  %644 = vmatpush1.bf16.msra.mxu0 %v601
  %645 = vmatprep.subr.bf16.mxu0 %v598
  %646 = vmatpush1.bf16.msra.mxu0 %v597
  %647 = vmatprep.subr.bf16.mxu0 %v594
  %648 = vmatpush1.bf16.msra.mxu0 %v593
  %649 = vmatprep.subr.bf16.mxu0 %v590
  %650 = vmatpush1.bf16.msra.mxu0 %v589
  %651 = vmatprep.subr.bf16.mxu0 %v586
  %652 = vmatpush1.bf16.msra.mxu0 %v585
  %653 = vmatprep.subr.bf16.mxu0 %v582
  %654 = vmatpush1.bf16.msra.mxu0 %v581
  %655 = vmatprep.subr.bf16.mxu0 %v578
  %656 = vmatpush1.bf16.msra.mxu0 %v577
  %657 = vmatprep.subr.bf16.mxu0 0
  %658 = vmatpush2.bf16.msra.mxu0 0
  %659 = vmatprep.subr.bf16.mxu0 0
  %660 = vmatpush2.bf16.msra.mxu0 0
  %661 = vmatprep.subr.bf16.mxu0 0
  %662 = vmatpush2.bf16.msra.mxu0 0
  %663 = vmatprep.subr.bf16.mxu0 0
  %664 = vmatpush2.bf16.msra.mxu0 0
  %665 = vmatprep.subr.bf16.mxu0 0
  %666 = vmatpush2.bf16.msra.mxu0 0
  %667 = vmatprep.subr.bf16.mxu0 0
  %668 = vmatpush2.bf16.msra.mxu0 0
  %669 = vmatprep.subr.bf16.mxu0 0
  %670 = vmatpush2.bf16.msra.mxu0 0
  %671 = vmatprep.subr.bf16.mxu0 0
  %672 = vmatpush2.bf16.msra.mxu0 0
  %673 = vmatprep.mubr.bf16.mxu0 0
  %674 = vmatmul.mubr.bf16.gmra.mxu0 0
  %v675 = vpop.f32.mrf.mxu0
  %v676 = vadd.f32 0.0, %v675
  %v677 = vpop.f32.mrf.mxu0
  %v678 = vadd.f32 0.0, %v677
  %v679 = vpop.f32.mrf.mxu0
  %v680 = vpop.f32.mrf.mxu0
  %681 = vdwg.mxu0
  %682 = vmatprep.subr.bf16.mxu0 %v608
  %683 = vmatpush1.bf16.msra.mxu0 %v607
  %684 = vmatprep.subr.bf16.mxu0 %v604
  %685 = vmatpush1.bf16.msra.mxu0 %v603
  %686 = vmatprep.subr.bf16.mxu0 %v600
  %687 = vmatpush1.bf16.msra.mxu0 %v599
  %688 = vmatprep.subr.bf16.mxu0 %v596
  %689 = vmatpush1.bf16.msra.mxu0 %v595
  %690 = vmatprep.subr.bf16.mxu0 %v592
  %691 = vmatpush1.bf16.msra.mxu0 %v591
  %692 = vmatprep.subr.bf16.mxu0 %v588
  %693 = vmatpush1.bf16.msra.mxu0 %v587
  %694 = vmatprep.subr.bf16.mxu0 %v584
  %695 = vmatpush1.bf16.msra.mxu0 %v583
  %696 = vmatprep.subr.bf16.mxu0 %v580
  %697 = vmatpush1.bf16.msra.mxu0 %v579
  %698 = vmatprep.subr.bf16.mxu0 0
  %699 = vmatpush2.bf16.msra.mxu0 0
  %700 = vmatprep.subr.bf16.mxu0 0
  %701 = vmatpush2.bf16.msra.mxu0 0
  %702 = vmatprep.subr.bf16.mxu0 0
  %703 = vmatpush2.bf16.msra.mxu0 0
  %704 = vmatprep.subr.bf16.mxu0 0
  %705 = vmatpush2.bf16.msra.mxu0 0
  %706 = vmatprep.subr.bf16.mxu0 0
  %707 = vmatpush2.bf16.msra.mxu0 0
  %708 = vmatprep.subr.bf16.mxu0 0
  %709 = vmatpush2.bf16.msra.mxu0 0
  %710 = vmatprep.subr.bf16.mxu0 0
  %711 = vmatpush2.bf16.msra.mxu0 0
  %712 = vmatprep.subr.bf16.mxu0 0
  %713 = vmatpush2.bf16.msra.mxu0 0
  %714 = vmatprep.mubr.bf16.mxu0 0
  %715 = vmatmul.mubr.bf16.gmra.mxu0 0
  %v716 = vpop.f32.mrf.mxu0
  %v717 = vadd.f32 0.0, %v716
  %v718 = vpop.f32.mrf.mxu0
  %v719 = vadd.f32 0.0, %v718
  %v720 = vpop.f32.mrf.mxu0
  %v721 = vpop.f32.mrf.mxu0
  %722 = vdwg.mxu0
  %v723 = vadd.f32 %v445, %v676
  %v724 = vadd.f32 %v446, %v678
  %v725 = vadd.f32 %v447, %v717
  %v726 = vadd.f32 %v448, %v719
  %v727 = vmul.f32 %v723, 0.5
  %v728 = vtanh.pop %v727
  %v729 = vmul.f32 %v728, 0.5
  %v730 = vadd.f32 %v729, 0.5
  %v731 = vmul.f32 %v724, 0.5
  %v732 = vtanh.pop %v731
  %v733 = vmul.f32 %v732, 0.5
  %v734 = vadd.f32 %v733, 0.5
  %v735 = vtanh.pop %v725
  %v736 = vmul.f32 %v726, 0.5
  %v737 = vtanh.pop %v736
  %v738 = vmul.f32 %v737, 0.5
  %v739 = vadd.f32 %v738, 0.5
  %v740 = vmul.f32 %v734, 0.0
  %v741 = vmul.f32 %v730, %v735
  %v742 = vadd.f32 %v740, %v741
  %v743 = vtanh.pop %v742
  %v744 = vmul.f32 %v739, %v743
  %s745 = scalar_lea.vmem [#allocation2], 32
  %v746 = vld [vmem:[%s745] sm:$0xff]
  %v747 = vld [vmem:[%s745 + $0x8] sm:$0xff]
  %v748 = vld [vmem:[%s745 + $0x10] sm:$0xff]
  %v749 = vld [vmem:[%s745 + $0x18] sm:$0xff]
  %v750 = vpack.c.bf16 %v744, %v744
  %751 = vmatprep.subr.bf16.mxu0 %v606
  %752 = vmatpush1.bf16.msra.mxu0 %v605
  %753 = vmatprep.subr.bf16.mxu0 %v602
  %754 = vmatpush1.bf16.msra.mxu0 %v601
  %755 = vmatprep.subr.bf16.mxu0 %v598
  %756 = vmatpush1.bf16.msra.mxu0 %v597
  %757 = vmatprep.subr.bf16.mxu0 %v594
  %758 = vmatpush1.bf16.msra.mxu0 %v593
  %759 = vmatprep.subr.bf16.mxu0 %v590
  %760 = vmatpush1.bf16.msra.mxu0 %v589
  %761 = vmatprep.subr.bf16.mxu0 %v586
  %762 = vmatpush1.bf16.msra.mxu0 %v585
  %763 = vmatprep.subr.bf16.mxu0 %v582
  %764 = vmatpush1.bf16.msra.mxu0 %v581
  %765 = vmatprep.subr.bf16.mxu0 %v578
  %766 = vmatpush1.bf16.msra.mxu0 %v577
  %767 = vmatprep.subr.bf16.mxu0 0
  %768 = vmatpush2.bf16.msra.mxu0 0
  %769 = vmatprep.subr.bf16.mxu0 0
  %770 = vmatpush2.bf16.msra.mxu0 0
  %771 = vmatprep.subr.bf16.mxu0 0
  %772 = vmatpush2.bf16.msra.mxu0 0
  %773 = vmatprep.subr.bf16.mxu0 0
  %774 = vmatpush2.bf16.msra.mxu0 0
  %775 = vmatprep.subr.bf16.mxu0 0
  %776 = vmatpush2.bf16.msra.mxu0 0
  %777 = vmatprep.subr.bf16.mxu0 0
  %778 = vmatpush2.bf16.msra.mxu0 0
  %779 = vmatprep.subr.bf16.mxu0 0
  %780 = vmatpush2.bf16.msra.mxu0 0
  %781 = vmatprep.subr.bf16.mxu0 0
  %782 = vmatpush2.bf16.msra.mxu0 0
  %783 = vmatprep.mubr.bf16.mxu0 0
  %784 = vmatmul.mubr.bf16.gmra.mxu0 %v750
  %v785 = vpop.f32.mrf.mxu0
  %v786 = vadd.f32 0.0, %v785
  %v787 = vpop.f32.mrf.mxu0
  %v788 = vadd.f32 0.0, %v787
  %v789 = vpop.f32.mrf.mxu0
  %v790 = vpop.f32.mrf.mxu0
  %791 = vdwg.mxu0
  %792 = vmatprep.subr.bf16.mxu0 %v608
  %793 = vmatpush1.bf16.msra.mxu0 %v607
  %794 = vmatprep.subr.bf16.mxu0 %v604
  %795 = vmatpush1.bf16.msra.mxu0 %v603
  %796 = vmatprep.subr.bf16.mxu0 %v600
  %797 = vmatpush1.bf16.msra.mxu0 %v599
  %798 = vmatprep.subr.bf16.mxu0 %v596
  %799 = vmatpush1.bf16.msra.mxu0 %v595
  %800 = vmatprep.subr.bf16.mxu0 %v592
  %801 = vmatpush1.bf16.msra.mxu0 %v591
  %802 = vmatprep.subr.bf16.mxu0 %v588
  %803 = vmatpush1.bf16.msra.mxu0 %v587
  %804 = vmatprep.subr.bf16.mxu0 %v584
  %805 = vmatpush1.bf16.msra.mxu0 %v583
  %806 = vmatprep.subr.bf16.mxu0 %v580
  %807 = vmatpush1.bf16.msra.mxu0 %v579
  %808 = vmatprep.subr.bf16.mxu0 0
  %809 = vmatpush2.bf16.msra.mxu0 0
  %810 = vmatprep.subr.bf16.mxu0 0
  %811 = vmatpush2.bf16.msra.mxu0 0
  %812 = vmatprep.subr.bf16.mxu0 0
  %813 = vmatpush2.bf16.msra.mxu0 0
  %814 = vmatprep.subr.bf16.mxu0 0
  %815 = vmatpush2.bf16.msra.mxu0 0
  %816 = vmatprep.subr.bf16.mxu0 0
  %817 = vmatpush2.bf16.msra.mxu0 0
  %818 = vmatprep.subr.bf16.mxu0 0
  %819 = vmatpush2.bf16.msra.mxu0 0
  %820 = vmatprep.subr.bf16.mxu0 0
  %821 = vmatpush2.bf16.msra.mxu0 0
  %822 = vmatprep.subr.bf16.mxu0 0
  %823 = vmatpush2.bf16.msra.mxu0 0
  %824 = vmatprep.mubr.bf16.mxu0 0
  %825 = vmatmul.mubr.bf16.gmra.mxu0 %v750
  %v826 = vpop.f32.mrf.mxu0
  %v827 = vadd.f32 0.0, %v826
  %v828 = vpop.f32.mrf.mxu0
  %v829 = vadd.f32 0.0, %v828
  %v830 = vpop.f32.mrf.mxu0
  %v831 = vpop.f32.mrf.mxu0
  %832 = vdwg.mxu0
  %v833 = vadd.f32 %v746, %v786
  %v834 = vadd.f32 %v747, %v788
  %v835 = vadd.f32 %v748, %v827
  %v836 = vadd.f32 %v749, %v829
  %v837 = vmul.f32 %v833, 0.5
  %v838 = vtanh.pop %v837
  %v839 = vmul.f32 %v838, 0.5
  %v840 = vadd.f32 %v839, 0.5
  %v841 = vmul.f32 %v834, 0.5
  %v842 = vtanh.pop %v841
  %v843 = vmul.f32 %v842, 0.5
  %v844 = vadd.f32 %v843, 0.5
  %v845 = vtanh.pop %v835
  %v846 = vmul.f32 %v836, 0.5
  %v847 = vtanh.pop %v846
  %v848 = vmul.f32 %v847, 0.5
  %v849 = vadd.f32 %v848, 0.5
  %v850 = vmul.f32 %v844, %v742
  %v851 = vmul.f32 %v840, %v845
  %v852 = vadd.f32 %v850, %v851
  %v853 = vtanh.pop %v852
  %v854 = vmul.f32 %v849, %v853
  %s855 = scalar_lea.vmem [#allocation2], 64
  %v856 = vld [vmem:[%s855] sm:$0xff]
  %v857 = vld [vmem:[%s855 + $0x8] sm:$0xff]
  %v858 = vld [vmem:[%s855 + $0x10] sm:$0xff]
  %v859 = vld [vmem:[%s855 + $0x18] sm:$0xff]
  %v860 = vpack.c.bf16 %v854, %v854
  %861 = vmatprep.subr.bf16.mxu0 %v606
  %862 = vmatpush1.bf16.msra.mxu0 %v605
  %863 = vmatprep.subr.bf16.mxu0 %v602
  %864 = vmatpush1.bf16.msra.mxu0 %v601
  %865 = vmatprep.subr.bf16.mxu0 %v598
  %866 = vmatpush1.bf16.msra.mxu0 %v597
  %867 = vmatprep.subr.bf16.mxu0 %v594
  %868 = vmatpush1.bf16.msra.mxu0 %v593
  %869 = vmatprep.subr.bf16.mxu0 %v590
  %870 = vmatpush1.bf16.msra.mxu0 %v589
  %871 = vmatprep.subr.bf16.mxu0 %v586
  %872 = vmatpush1.bf16.msra.mxu0 %v585
  %873 = vmatprep.subr.bf16.mxu0 %v582
  %874 = vmatpush1.bf16.msra.mxu0 %v581
  %875 = vmatprep.subr.bf16.mxu0 %v578
  %876 = vmatpush1.bf16.msra.mxu0 %v577
  %877 = vmatprep.subr.bf16.mxu0 0
  %878 = vmatpush2.bf16.msra.mxu0 0
  %879 = vmatprep.subr.bf16.mxu0 0
  %880 = vmatpush2.bf16.msra.mxu0 0
  %881 = vmatprep.subr.bf16.mxu0 0
  %882 = vmatpush2.bf16.msra.mxu0 0
  %883 = vmatprep.subr.bf16.mxu0 0
  %884 = vmatpush2.bf16.msra.mxu0 0
  %885 = vmatprep.subr.bf16.mxu0 0
  %886 = vmatpush2.bf16.msra.mxu0 0
  %887 = vmatprep.subr.bf16.mxu0 0
  %888 = vmatpush2.bf16.msra.mxu0 0
  %889 = vmatprep.subr.bf16.mxu0 0
  %890 = vmatpush2.bf16.msra.mxu0 0
  %891 = vmatprep.subr.bf16.mxu0 0
  %892 = vmatpush2.bf16.msra.mxu0 0
  %893 = vmatprep.mubr.bf16.mxu0 0
  %894 = vmatmul.mubr.bf16.gmra.mxu0 %v860
  %v895 = vpop.f32.mrf.mxu0
  %v896 = vadd.f32 0.0, %v895
  %v897 = vpop.f32.mrf.mxu0
  %v898 = vadd.f32 0.0, %v897
  %v899 = vpop.f32.mrf.mxu0
  %v900 = vpop.f32.mrf.mxu0
  %901 = vdwg.mxu0
  %902 = vmatprep.subr.bf16.mxu0 %v608
  %903 = vmatpush1.bf16.msra.mxu0 %v607
  %904 = vmatprep.subr.bf16.mxu0 %v604
  %905 = vmatpush1.bf16.msra.mxu0 %v603
  %906 = vmatprep.subr.bf16.mxu0 %v600
  %907 = vmatpush1.bf16.msra.mxu0 %v599
  %908 = vmatprep.subr.bf16.mxu0 %v596
  %909 = vmatpush1.bf16.msra.mxu0 %v595
  %910 = vmatprep.subr.bf16.mxu0 %v592
  %911 = vmatpush1.bf16.msra.mxu0 %v591
  %912 = vmatprep.subr.bf16.mxu0 %v588
  %913 = vmatpush1.bf16.msra.mxu0 %v587
  %914 = vmatprep.subr.bf16.mxu0 %v584
  %915 = vmatpush1.bf16.msra.mxu0 %v583
  %916 = vmatprep.subr.bf16.mxu0 %v580
  %917 = vmatpush1.bf16.msra.mxu0 %v579
  %918 = vmatprep.subr.bf16.mxu0 0
  %919 = vmatpush2.bf16.msra.mxu0 0
  %920 = vmatprep.subr.bf16.mxu0 0
  %921 = vmatpush2.bf16.msra.mxu0 0
  %922 = vmatprep.subr.bf16.mxu0 0
  %923 = vmatpush2.bf16.msra.mxu0 0
  %924 = vmatprep.subr.bf16.mxu0 0
  %925 = vmatpush2.bf16.msra.mxu0 0
  %926 = vmatprep.subr.bf16.mxu0 0
  %927 = vmatpush2.bf16.msra.mxu0 0
  %928 = vmatprep.subr.bf16.mxu0 0
  %929 = vmatpush2.bf16.msra.mxu0 0
  %930 = vmatprep.subr.bf16.mxu0 0
  %931 = vmatpush2.bf16.msra.mxu0 0
  %932 = vmatprep.subr.bf16.mxu0 0
  %933 = vmatpush2.bf16.msra.mxu0 0
  %934 = vmatprep.mubr.bf16.mxu0 0
  %935 = vmatmul.mubr.bf16.gmra.mxu0 %v860
  %v936 = vpop.f32.mrf.mxu0
  %v937 = vadd.f32 0.0, %v936
  %v938 = vpop.f32.mrf.mxu0
  %v939 = vadd.f32 0.0, %v938
  %v940 = vpop.f32.mrf.mxu0
  %v941 = vpop.f32.mrf.mxu0
  %942 = vdwg.mxu0
  %v943 = vadd.f32 %v856, %v896
  %v944 = vadd.f32 %v857, %v898
  %v945 = vadd.f32 %v858, %v937
  %v946 = vadd.f32 %v859, %v939
  %v947 = vmul.f32 %v943, 0.5
  %v948 = vtanh.pop %v947
  %v949 = vmul.f32 %v948, 0.5
  %v950 = vadd.f32 %v949, 0.5
  %v951 = vmul.f32 %v944, 0.5
  %v952 = vtanh.pop %v951
  %v953 = vmul.f32 %v952, 0.5
  %v954 = vadd.f32 %v953, 0.5
  %v955 = vtanh.pop %v945
  %v956 = vmul.f32 %v946, 0.5
  %v957 = vtanh.pop %v956
  %v958 = vmul.f32 %v957, 0.5
  %v959 = vadd.f32 %v958, 0.5
  %v960 = vmul.f32 %v954, %v852
  %v961 = vmul.f32 %v950, %v955
  %v962 = vadd.f32 %v960, %v961
  %v963 = vtanh.pop %v962
  %v964 = vmul.f32 %v959, %v963
  %s965 = scalar_lea.vmem [#allocation2], 96
  %v966 = vld [vmem:[%s965] sm:$0xff]
  %v967 = vld [vmem:[%s965 + $0x8] sm:$0xff]
  %v968 = vld [vmem:[%s965 + $0x10] sm:$0xff]
  %v969 = vld [vmem:[%s965 + $0x18] sm:$0xff]
  %v970 = vpack.c.bf16 %v964, %v964
  %971 = vmatprep.subr.bf16.mxu0 %v606
  %972 = vmatpush1.bf16.msra.mxu0 %v605
  %973 = vmatprep.subr.bf16.mxu0 %v602
  %974 = vmatpush1.bf16.msra.mxu0 %v601
  %975 = vmatprep.subr.bf16.mxu0 %v598
  %976 = vmatpush1.bf16.msra.mxu0 %v597
  %977 = vmatprep.subr.bf16.mxu0 %v594
  %978 = vmatpush1.bf16.msra.mxu0 %v593
  %979 = vmatprep.subr.bf16.mxu0 %v590
  %980 = vmatpush1.bf16.msra.mxu0 %v589
  %981 = vmatprep.subr.bf16.mxu0 %v586
  %982 = vmatpush1.bf16.msra.mxu0 %v585
  %983 = vmatprep.subr.bf16.mxu0 %v582
  %984 = vmatpush1.bf16.msra.mxu0 %v581
  %985 = vmatprep.subr.bf16.mxu0 %v578
  %986 = vmatpush1.bf16.msra.mxu0 %v577
  %987 = vmatprep.subr.bf16.mxu0 0
  %988 = vmatpush2.bf16.msra.mxu0 0
  %989 = vmatprep.subr.bf16.mxu0 0
  %990 = vmatpush2.bf16.msra.mxu0 0
  %991 = vmatprep.subr.bf16.mxu0 0
  %992 = vmatpush2.bf16.msra.mxu0 0
  %993 = vmatprep.subr.bf16.mxu0 0
  %994 = vmatpush2.bf16.msra.mxu0 0
  %995 = vmatprep.subr.bf16.mxu0 0
  %996 = vmatpush2.bf16.msra.mxu0 0
  %997 = vmatprep.subr.bf16.mxu0 0
  %998 = vmatpush2.bf16.msra.mxu0 0
  %999 = vmatprep.subr.bf16.mxu0 0
  %1000 = vmatpush2.bf16.msra.mxu0 0
  %1001 = vmatprep.subr.bf16.mxu0 0
  %1002 = vmatpush2.bf16.msra.mxu0 0
  %1003 = vmatprep.mubr.bf16.mxu0 0
  %1004 = vmatmul.mubr.bf16.gmra.mxu0 %v970
  %v1005 = vpop.f32.mrf.mxu0
  %v1006 = vadd.f32 0.0, %v1005
  %v1007 = vpop.f32.mrf.mxu0
  %v1008 = vadd.f32 0.0, %v1007
  %v1009 = vpop.f32.mrf.mxu0
  %v1010 = vpop.f32.mrf.mxu0
  %1011 = vdwg.mxu0
  %1012 = vmatprep.subr.bf16.mxu0 %v608
  %1013 = vmatpush1.bf16.msra.mxu0 %v607
  %1014 = vmatprep.subr.bf16.mxu0 %v604
  %1015 = vmatpush1.bf16.msra.mxu0 %v603
  %1016 = vmatprep.subr.bf16.mxu0 %v600
  %1017 = vmatpush1.bf16.msra.mxu0 %v599
  %1018 = vmatprep.subr.bf16.mxu0 %v596
  %1019 = vmatpush1.bf16.msra.mxu0 %v595
  %1020 = vmatprep.subr.bf16.mxu0 %v592
  %1021 = vmatpush1.bf16.msra.mxu0 %v591
  %1022 = vmatprep.subr.bf16.mxu0 %v588
  %1023 = vmatpush1.bf16.msra.mxu0 %v587
  %1024 = vmatprep.subr.bf16.mxu0 %v584
  %1025 = vmatpush1.bf16.msra.mxu0 %v583
  %1026 = vmatprep.subr.bf16.mxu0 %v580
  %1027 = vmatpush1.bf16.msra.mxu0 %v579
  %1028 = vmatprep.subr.bf16.mxu0 0
  %1029 = vmatpush2.bf16.msra.mxu0 0
  %1030 = vmatprep.subr.bf16.mxu0 0
  %1031 = vmatpush2.bf16.msra.mxu0 0
  %1032 = vmatprep.subr.bf16.mxu0 0
  %1033 = vmatpush2.bf16.msra.mxu0 0
  %1034 = vmatprep.subr.bf16.mxu0 0
  %1035 = vmatpush2.bf16.msra.mxu0 0
  %1036 = vmatprep.subr.bf16.mxu0 0
  %1037 = vmatpush2.bf16.msra.mxu0 0
  %1038 = vmatprep.subr.bf16.mxu0 0
  %1039 = vmatpush2.bf16.msra.mxu0 0
  %1040 = vmatprep.subr.bf16.mxu0 0
  %1041 = vmatpush2.bf16.msra.mxu0 0
  %1042 = vmatprep.subr.bf16.mxu0 0
  %1043 = vmatpush2.bf16.msra.mxu0 0
  %1044 = vmatprep.mubr.bf16.mxu0 0
  %1045 = vmatmul.mubr.bf16.gmra.mxu0 %v970
  %v1046 = vpop.f32.mrf.mxu0
  %v1047 = vadd.f32 0.0, %v1046
  %v1048 = vpop.f32.mrf.mxu0
  %v1049 = vadd.f32 0.0, %v1048
  %v1050 = vpop.f32.mrf.mxu0
  %v1051 = vpop.f32.mrf.mxu0
  %1052 = vdwg.mxu0
  %v1053 = vadd.f32 %v966, %v1006
  %v1054 = vadd.f32 %v967, %v1008
  %v1055 = vadd.f32 %v968, %v1047
  %v1056 = vadd.f32 %v969, %v1049
  %v1057 = vmul.f32 %v1053, 0.5
  %v1058 = vtanh.pop %v1057
  %v1059 = vmul.f32 %v1058, 0.5
  %v1060 = vadd.f32 %v1059, 0.5
  %v1061 = vmul.f32 %v1054, 0.5
  %v1062 = vtanh.pop %v1061
  %v1063 = vmul.f32 %v1062, 0.5
  %v1064 = vadd.f32 %v1063, 0.5
  %v1065 = vtanh.pop %v1055
  %v1066 = vmul.f32 %v1056, 0.5
  %v1067 = vtanh.pop %v1066
  %v1068 = vmul.f32 %v1067, 0.5
  %v1069 = vadd.f32 %v1068, 0.5
  %v1070 = vmul.f32 %v1064, %v962
  %v1071 = vmul.f32 %v1060, %v1065
  %v1072 = vadd.f32 %v1070, %v1071
  %v1073 = vtanh.pop %v1072
  %v1074 = vmul.f32 %v1069, %v1073
  %s1075 = scalar_lea.vmem [#allocation2], 128
  %v1076 = vld [vmem:[%s1075] sm:$0xff]
  %v1077 = vld [vmem:[%s1075 + $0x8] sm:$0xff]
  %v1078 = vld [vmem:[%s1075 + $0x10] sm:$0xff]
  %v1079 = vld [vmem:[%s1075 + $0x18] sm:$0xff]
  %v1080 = vpack.c.bf16 %v1074, %v1074
  %1081 = vmatprep.subr.bf16.mxu0 %v606
  %1082 = vmatpush1.bf16.msra.mxu0 %v605
  %1083 = vmatprep.subr.bf16.mxu0 %v602
  %1084 = vmatpush1.bf16.msra.mxu0 %v601
  %1085 = vmatprep.subr.bf16.mxu0 %v598
  %1086 = vmatpush1.bf16.msra.mxu0 %v597
  %1087 = vmatprep.subr.bf16.mxu0 %v594
  %1088 = vmatpush1.bf16.msra.mxu0 %v593
  %1089 = vmatprep.subr.bf16.mxu0 %v590
  %1090 = vmatpush1.bf16.msra.mxu0 %v589
  %1091 = vmatprep.subr.bf16.mxu0 %v586
  %1092 = vmatpush1.bf16.msra.mxu0 %v585
  %1093 = vmatprep.subr.bf16.mxu0 %v582
  %1094 = vmatpush1.bf16.msra.mxu0 %v581
  %1095 = vmatprep.subr.bf16.mxu0 %v578
  %1096 = vmatpush1.bf16.msra.mxu0 %v577
  %1097 = vmatprep.subr.bf16.mxu0 0
  %1098 = vmatpush2.bf16.msra.mxu0 0
  %1099 = vmatprep.subr.bf16.mxu0 0
  %1100 = vmatpush2.bf16.msra.mxu0 0
  %1101 = vmatprep.subr.bf16.mxu0 0
  %1102 = vmatpush2.bf16.msra.mxu0 0
  %1103 = vmatprep.subr.bf16.mxu0 0
  %1104 = vmatpush2.bf16.msra.mxu0 0
  %1105 = vmatprep.subr.bf16.mxu0 0
  %1106 = vmatpush2.bf16.msra.mxu0 0
  %1107 = vmatprep.subr.bf16.mxu0 0
  %1108 = vmatpush2.bf16.msra.mxu0 0
  %1109 = vmatprep.subr.bf16.mxu0 0
  %1110 = vmatpush2.bf16.msra.mxu0 0
  %1111 = vmatprep.subr.bf16.mxu0 0
  %1112 = vmatpush2.bf16.msra.mxu0 0
  %1113 = vmatprep.mubr.bf16.mxu0 0
  %1114 = vmatmul.mubr.bf16.gmra.mxu0 %v1080
  %v1115 = vpop.f32.mrf.mxu0
  %v1116 = vadd.f32 0.0, %v1115
  %v1117 = vpop.f32.mrf.mxu0
  %v1118 = vadd.f32 0.0, %v1117
  %v1119 = vpop.f32.mrf.mxu0
  %v1120 = vpop.f32.mrf.mxu0
  %1121 = vdwg.mxu0
  %1122 = vmatprep.subr.bf16.mxu0 %v608
  %1123 = vmatpush1.bf16.msra.mxu0 %v607
  %1124 = vmatprep.subr.bf16.mxu0 %v604
  %1125 = vmatpush1.bf16.msra.mxu0 %v603
  %1126 = vmatprep.subr.bf16.mxu0 %v600
  %1127 = vmatpush1.bf16.msra.mxu0 %v599
  %1128 = vmatprep.subr.bf16.mxu0 %v596
  %1129 = vmatpush1.bf16.msra.mxu0 %v595
  %1130 = vmatprep.subr.bf16.mxu0 %v592
  %1131 = vmatpush1.bf16.msra.mxu0 %v591
  %1132 = vmatprep.subr.bf16.mxu0 %v588
  %1133 = vmatpush1.bf16.msra.mxu0 %v587
  %1134 = vmatprep.subr.bf16.mxu0 %v584
  %1135 = vmatpush1.bf16.msra.mxu0 %v583
  %1136 = vmatprep.subr.bf16.mxu0 %v580
  %1137 = vmatpush1.bf16.msra.mxu0 %v579
  %1138 = vmatprep.subr.bf16.mxu0 0
  %1139 = vmatpush2.bf16.msra.mxu0 0
  %1140 = vmatprep.subr.bf16.mxu0 0
  %1141 = vmatpush2.bf16.msra.mxu0 0
  %1142 = vmatprep.subr.bf16.mxu0 0
  %1143 = vmatpush2.bf16.msra.mxu0 0
  %1144 = vmatprep.subr.bf16.mxu0 0
  %1145 = vmatpush2.bf16.msra.mxu0 0
  %1146 = vmatprep.subr.bf16.mxu0 0
  %1147 = vmatpush2.bf16.msra.mxu0 0
  %1148 = vmatprep.subr.bf16.mxu0 0
  %1149 = vmatpush2.bf16.msra.mxu0 0
  %1150 = vmatprep.subr.bf16.mxu0 0
  %1151 = vmatpush2.bf16.msra.mxu0 0
  %1152 = vmatprep.subr.bf16.mxu0 0
  %1153 = vmatpush2.bf16.msra.mxu0 0
  %1154 = vmatprep.mubr.bf16.mxu0 0
  %1155 = vmatmul.mubr.bf16.gmra.mxu0 %v1080
  %v1156 = vpop.f32.mrf.mxu0
  %v1157 = vadd.f32 0.0, %v1156
  %v1158 = vpop.f32.mrf.mxu0
  %v1159 = vadd.f32 0.0, %v1158
  %v1160 = vpop.f32.mrf.mxu0
  %v1161 = vpop.f32.mrf.mxu0
  %1162 = vdwg.mxu0
  %v1163 = vadd.f32 %v1076, %v1116
  %v1164 = vadd.f32 %v1077, %v1118
  %v1165 = vadd.f32 %v1078, %v1157
  %v1166 = vadd.f32 %v1079, %v1159
  %v1167 = vmul.f32 %v1163, 0.5
  %v1168 = vtanh.pop %v1167
  %v1169 = vmul.f32 %v1168, 0.5
  %v1170 = vadd.f32 %v1169, 0.5
  %v1171 = vmul.f32 %v1164, 0.5
  %v1172 = vtanh.pop %v1171
  %v1173 = vmul.f32 %v1172, 0.5
  %v1174 = vadd.f32 %v1173, 0.5
  %v1175 = vtanh.pop %v1165
  %v1176 = vmul.f32 %v1166, 0.5
  %v1177 = vtanh.pop %v1176
  %v1178 = vmul.f32 %v1177, 0.5
  %v1179 = vadd.f32 %v1178, 0.5
  %v1180 = vmul.f32 %v1174, %v1072
  %v1181 = vmul.f32 %v1170, %v1175
  %v1182 = vadd.f32 %v1180, %v1181
  %v1183 = vtanh.pop %v1182
  %v1184 = vmul.f32 %v1179, %v1183
  %s1185 = scalar_lea.vmem [#allocation2], 160
  %v1186 = vld [vmem:[%s1185] sm:$0xff]
  %v1187 = vld [vmem:[%s1185 + $0x8] sm:$0xff]
  %v1188 = vld [vmem:[%s1185 + $0x10] sm:$0xff]
  %v1189 = vld [vmem:[%s1185 + $0x18] sm:$0xff]
  %v1190 = vpack.c.bf16 %v1184, %v1184
  %1191 = vmatprep.subr.bf16.mxu0 %v606
  %1192 = vmatpush1.bf16.msra.mxu0 %v605
  %1193 = vmatprep.subr.bf16.mxu0 %v602
  %1194 = vmatpush1.bf16.msra.mxu0 %v601
  %1195 = vmatprep.subr.bf16.mxu0 %v598
  %1196 = vmatpush1.bf16.msra.mxu0 %v597
  %1197 = vmatprep.subr.bf16.mxu0 %v594
  %1198 = vmatpush1.bf16.msra.mxu0 %v593
  %1199 = vmatprep.subr.bf16.mxu0 %v590
  %1200 = vmatpush1.bf16.msra.mxu0 %v589
  %1201 = vmatprep.subr.bf16.mxu0 %v586
  %1202 = vmatpush1.bf16.msra.mxu0 %v585
  %1203 = vmatprep.subr.bf16.mxu0 %v582
  %1204 = vmatpush1.bf16.msra.mxu0 %v581
  %1205 = vmatprep.subr.bf16.mxu0 %v578
  %1206 = vmatpush1.bf16.msra.mxu0 %v577
  %1207 = vmatprep.subr.bf16.mxu0 0
  %1208 = vmatpush2.bf16.msra.mxu0 0
  %1209 = vmatprep.subr.bf16.mxu0 0
  %1210 = vmatpush2.bf16.msra.mxu0 0
  %1211 = vmatprep.subr.bf16.mxu0 0
  %1212 = vmatpush2.bf16.msra.mxu0 0
  %1213 = vmatprep.subr.bf16.mxu0 0
  %1214 = vmatpush2.bf16.msra.mxu0 0
  %1215 = vmatprep.subr.bf16.mxu0 0
  %1216 = vmatpush2.bf16.msra.mxu0 0
  %1217 = vmatprep.subr.bf16.mxu0 0
  %1218 = vmatpush2.bf16.msra.mxu0 0
  %1219 = vmatprep.subr.bf16.mxu0 0
  %1220 = vmatpush2.bf16.msra.mxu0 0
  %1221 = vmatprep.subr.bf16.mxu0 0
  %1222 = vmatpush2.bf16.msra.mxu0 0
  %1223 = vmatprep.mubr.bf16.mxu0 0
  %1224 = vmatmul.mubr.bf16.gmra.mxu0 %v1190
  %v1225 = vpop.f32.mrf.mxu0
  %v1226 = vadd.f32 0.0, %v1225
  %v1227 = vpop.f32.mrf.mxu0
  %v1228 = vadd.f32 0.0, %v1227
  %v1229 = vpop.f32.mrf.mxu0
  %v1230 = vpop.f32.mrf.mxu0
  %1231 = vdwg.mxu0
  %1232 = vmatprep.subr.bf16.mxu0 %v608
  %1233 = vmatpush1.bf16.msra.mxu0 %v607
  %1234 = vmatprep.subr.bf16.mxu0 %v604
  %1235 = vmatpush1.bf16.msra.mxu0 %v603
  %1236 = vmatprep.subr.bf16.mxu0 %v600
  %1237 = vmatpush1.bf16.msra.mxu0 %v599
  %1238 = vmatprep.subr.bf16.mxu0 %v596
  %1239 = vmatpush1.bf16.msra.mxu0 %v595
  %1240 = vmatprep.subr.bf16.mxu0 %v592
  %1241 = vmatpush1.bf16.msra.mxu0 %v591
  %1242 = vmatprep.subr.bf16.mxu0 %v588
  %1243 = vmatpush1.bf16.msra.mxu0 %v587
  %1244 = vmatprep.subr.bf16.mxu0 %v584
  %1245 = vmatpush1.bf16.msra.mxu0 %v583
  %1246 = vmatprep.subr.bf16.mxu0 %v580
  %1247 = vmatpush1.bf16.msra.mxu0 %v579
  %1248 = vmatprep.subr.bf16.mxu0 0
  %1249 = vmatpush2.bf16.msra.mxu0 0
  %1250 = vmatprep.subr.bf16.mxu0 0
  %1251 = vmatpush2.bf16.msra.mxu0 0
  %1252 = vmatprep.subr.bf16.mxu0 0
  %1253 = vmatpush2.bf16.msra.mxu0 0
  %1254 = vmatprep.subr.bf16.mxu0 0
  %1255 = vmatpush2.bf16.msra.mxu0 0
  %1256 = vmatprep.subr.bf16.mxu0 0
  %1257 = vmatpush2.bf16.msra.mxu0 0
  %1258 = vmatprep.subr.bf16.mxu0 0
  %1259 = vmatpush2.bf16.msra.mxu0 0
  %1260 = vmatprep.subr.bf16.mxu0 0
  %1261 = vmatpush2.bf16.msra.mxu0 0
  %1262 = vmatprep.subr.bf16.mxu0 0
  %1263 = vmatpush2.bf16.msra.mxu0 0
  %1264 = vmatprep.mubr.bf16.mxu0 0
  %1265 = vmatmul.mubr.bf16.gmra.mxu0 %v1190
  %v1266 = vpop.f32.mrf.mxu0
  %v1267 = vadd.f32 0.0, %v1266
  %v1268 = vpop.f32.mrf.mxu0
  %v1269 = vadd.f32 0.0, %v1268
  %v1270 = vpop.f32.mrf.mxu0
  %v1271 = vpop.f32.mrf.mxu0
  %1272 = vdwg.mxu0
  %v1273 = vadd.f32 %v1186, %v1226
  %v1274 = vadd.f32 %v1187, %v1228
  %v1275 = vadd.f32 %v1188, %v1267
  %v1276 = vadd.f32 %v1189, %v1269
  %v1277 = vmul.f32 %v1273, 0.5
  %v1278 = vtanh.pop %v1277
  %v1279 = vmul.f32 %v1278, 0.5
  %v1280 = vadd.f32 %v1279, 0.5
  %v1281 = vmul.f32 %v1274, 0.5
  %v1282 = vtanh.pop %v1281
  %v1283 = vmul.f32 %v1282, 0.5
  %v1284 = vadd.f32 %v1283, 0.5
  %v1285 = vtanh.pop %v1275
  %v1286 = vmul.f32 %v1276, 0.5
  %v1287 = vtanh.pop %v1286
  %v1288 = vmul.f32 %v1287, 0.5
  %v1289 = vadd.f32 %v1288, 0.5
  %v1290 = vmul.f32 %v1284, %v1182
  %v1291 = vmul.f32 %v1280, %v1285
  %v1292 = vadd.f32 %v1290, %v1291
  %v1293 = vtanh.pop %v1292
  %v1294 = vmul.f32 %v1289, %v1293
  %s1295 = scalar_lea.vmem [#allocation2], 192
  %v1296 = vld [vmem:[%s1295] sm:$0xff]
  %v1297 = vld [vmem:[%s1295 + $0x8] sm:$0xff]
  %v1298 = vld [vmem:[%s1295 + $0x10] sm:$0xff]
  %v1299 = vld [vmem:[%s1295 + $0x18] sm:$0xff]
  %v1300 = vpack.c.bf16 %v1294, %v1294
  %1301 = vmatprep.subr.bf16.mxu0 %v606
  %1302 = vmatpush1.bf16.msra.mxu0 %v605
  %1303 = vmatprep.subr.bf16.mxu0 %v602
  %1304 = vmatpush1.bf16.msra.mxu0 %v601
  %1305 = vmatprep.subr.bf16.mxu0 %v598
  %1306 = vmatpush1.bf16.msra.mxu0 %v597
  %1307 = vmatprep.subr.bf16.mxu0 %v594
  %1308 = vmatpush1.bf16.msra.mxu0 %v593
  %1309 = vmatprep.subr.bf16.mxu0 %v590
  %1310 = vmatpush1.bf16.msra.mxu0 %v589
  %1311 = vmatprep.subr.bf16.mxu0 %v586
  %1312 = vmatpush1.bf16.msra.mxu0 %v585
  %1313 = vmatprep.subr.bf16.mxu0 %v582
  %1314 = vmatpush1.bf16.msra.mxu0 %v581
  %1315 = vmatprep.subr.bf16.mxu0 %v578
  %1316 = vmatpush1.bf16.msra.mxu0 %v577
  %1317 = vmatprep.subr.bf16.mxu0 0
  %1318 = vmatpush2.bf16.msra.mxu0 0
  %1319 = vmatprep.subr.bf16.mxu0 0
  %1320 = vmatpush2.bf16.msra.mxu0 0
  %1321 = vmatprep.subr.bf16.mxu0 0
  %1322 = vmatpush2.bf16.msra.mxu0 0
  %1323 = vmatprep.subr.bf16.mxu0 0
  %1324 = vmatpush2.bf16.msra.mxu0 0
  %1325 = vmatprep.subr.bf16.mxu0 0
  %1326 = vmatpush2.bf16.msra.mxu0 0
  %1327 = vmatprep.subr.bf16.mxu0 0
  %1328 = vmatpush2.bf16.msra.mxu0 0
  %1329 = vmatprep.subr.bf16.mxu0 0
  %1330 = vmatpush2.bf16.msra.mxu0 0
  %1331 = vmatprep.subr.bf16.mxu0 0
  %1332 = vmatpush2.bf16.msra.mxu0 0
  %1333 = vmatprep.mubr.bf16.mxu0 0
  %1334 = vmatmul.mubr.bf16.gmra.mxu0 %v1300
  %v1335 = vpop.f32.mrf.mxu0
  %v1336 = vadd.f32 0.0, %v1335
  %v1337 = vpop.f32.mrf.mxu0
  %v1338 = vadd.f32 0.0, %v1337
  %v1339 = vpop.f32.mrf.mxu0
  %v1340 = vpop.f32.mrf.mxu0
  %1341 = vdwg.mxu0
  %1342 = vmatprep.subr.bf16.mxu0 %v608
  %1343 = vmatpush1.bf16.msra.mxu0 %v607
  %1344 = vmatprep.subr.bf16.mxu0 %v604
  %1345 = vmatpush1.bf16.msra.mxu0 %v603
  %1346 = vmatprep.subr.bf16.mxu0 %v600
  %1347 = vmatpush1.bf16.msra.mxu0 %v599
  %1348 = vmatprep.subr.bf16.mxu0 %v596
  %1349 = vmatpush1.bf16.msra.mxu0 %v595
  %1350 = vmatprep.subr.bf16.mxu0 %v592
  %1351 = vmatpush1.bf16.msra.mxu0 %v591
  %1352 = vmatprep.subr.bf16.mxu0 %v588
  %1353 = vmatpush1.bf16.msra.mxu0 %v587
  %1354 = vmatprep.subr.bf16.mxu0 %v584
  %1355 = vmatpush1.bf16.msra.mxu0 %v583
  %1356 = vmatprep.subr.bf16.mxu0 %v580
  %1357 = vmatpush1.bf16.msra.mxu0 %v579
  %1358 = vmatprep.subr.bf16.mxu0 0
  %1359 = vmatpush2.bf16.msra.mxu0 0
  %1360 = vmatprep.subr.bf16.mxu0 0
  %1361 = vmatpush2.bf16.msra.mxu0 0
  %1362 = vmatprep.subr.bf16.mxu0 0
  %1363 = vmatpush2.bf16.msra.mxu0 0
  %1364 = vmatprep.subr.bf16.mxu0 0
  %1365 = vmatpush2.bf16.msra.mxu0 0
  %1366 = vmatprep.subr.bf16.mxu0 0
  %1367 = vmatpush2.bf16.msra.mxu0 0
  %1368 = vmatprep.subr.bf16.mxu0 0
  %1369 = vmatpush2.bf16.msra.mxu0 0
  %1370 = vmatprep.subr.bf16.mxu0 0
  %1371 = vmatpush2.bf16.msra.mxu0 0
  %1372 = vmatprep.subr.bf16.mxu0 0
  %1373 = vmatpush2.bf16.msra.mxu0 0
  %1374 = vmatprep.mubr.bf16.mxu0 0
  %1375 = vmatmul.mubr.bf16.gmra.mxu0 %v1300
  %v1376 = vpop.f32.mrf.mxu0
  %v1377 = vadd.f32 0.0, %v1376
  %v1378 = vpop.f32.mrf.mxu0
  %v1379 = vadd.f32 0.0, %v1378
  %v1380 = vpop.f32.mrf.mxu0
  %v1381 = vpop.f32.mrf.mxu0
  %1382 = vdwg.mxu0
  %v1383 = vadd.f32 %v1296, %v1336
  %v1384 = vadd.f32 %v1297, %v1338
  %v1385 = vadd.f32 %v1298, %v1377
  %v1386 = vadd.f32 %v1299, %v1379
  %v1387 = vmul.f32 %v1383, 0.5
  %v1388 = vtanh.pop %v1387
  %v1389 = vmul.f32 %v1388, 0.5
  %v1390 = vadd.f32 %v1389, 0.5
  %v1391 = vmul.f32 %v1384, 0.5
  %v1392 = vtanh.pop %v1391
  %v1393 = vmul.f32 %v1392, 0.5
  %v1394 = vadd.f32 %v1393, 0.5
  %v1395 = vtanh.pop %v1385
  %v1396 = vmul.f32 %v1386, 0.5
  %v1397 = vtanh.pop %v1396
  %v1398 = vmul.f32 %v1397, 0.5
  %v1399 = vadd.f32 %v1398, 0.5
  %v1400 = vmul.f32 %v1394, %v1292
  %v1401 = vmul.f32 %v1390, %v1395
  %v1402 = vadd.f32 %v1400, %v1401
  %v1403 = vtanh.pop %v1402
  %v1404 = vmul.f32 %v1399, %v1403
  %s1405 = scalar_lea.vmem [#allocation2], 224
  %v1406 = vld [vmem:[%s1405] sm:$0xff]
  %v1407 = vld [vmem:[%s1405 + $0x8] sm:$0xff]
  %v1408 = vld [vmem:[%s1405 + $0x10] sm:$0xff]
  %v1409 = vld [vmem:[%s1405 + $0x18] sm:$0xff]
  %v1410 = vpack.c.bf16 %v1404, %v1404
  %1411 = vmatprep.subr.bf16.mxu0 %v606
  %1412 = vmatpush1.bf16.msra.mxu0 %v605
  %1413 = vmatprep.subr.bf16.mxu0 %v602
  %1414 = vmatpush1.bf16.msra.mxu0 %v601
  %1415 = vmatprep.subr.bf16.mxu0 %v598
  %1416 = vmatpush1.bf16.msra.mxu0 %v597
  %1417 = vmatprep.subr.bf16.mxu0 %v594
  %1418 = vmatpush1.bf16.msra.mxu0 %v593
  %1419 = vmatprep.subr.bf16.mxu0 %v590
  %1420 = vmatpush1.bf16.msra.mxu0 %v589
  %1421 = vmatprep.subr.bf16.mxu0 %v586
  %1422 = vmatpush1.bf16.msra.mxu0 %v585
  %1423 = vmatprep.subr.bf16.mxu0 %v582
  %1424 = vmatpush1.bf16.msra.mxu0 %v581
  %1425 = vmatprep.subr.bf16.mxu0 %v578
  %1426 = vmatpush1.bf16.msra.mxu0 %v577
  %1427 = vmatprep.subr.bf16.mxu0 0
  %1428 = vmatpush2.bf16.msra.mxu0 0
  %1429 = vmatprep.subr.bf16.mxu0 0
  %1430 = vmatpush2.bf16.msra.mxu0 0
  %1431 = vmatprep.subr.bf16.mxu0 0
  %1432 = vmatpush2.bf16.msra.mxu0 0
  %1433 = vmatprep.subr.bf16.mxu0 0
  %1434 = vmatpush2.bf16.msra.mxu0 0
  %1435 = vmatprep.subr.bf16.mxu0 0
  %1436 = vmatpush2.bf16.msra.mxu0 0
  %1437 = vmatprep.subr.bf16.mxu0 0
  %1438 = vmatpush2.bf16.msra.mxu0 0
  %1439 = vmatprep.subr.bf16.mxu0 0
  %1440 = vmatpush2.bf16.msra.mxu0 0
  %1441 = vmatprep.subr.bf16.mxu0 0
  %1442 = vmatpush2.bf16.msra.mxu0 0
  %1443 = vmatprep.mubr.bf16.mxu0 0
  %1444 = vmatmul.mubr.bf16.gmra.mxu0 %v1410
  %v1445 = vpop.f32.mrf.mxu0
  %v1446 = vadd.f32 0.0, %v1445
  %v1447 = vpop.f32.mrf.mxu0
  %v1448 = vadd.f32 0.0, %v1447
  %v1449 = vpop.f32.mrf.mxu0
  %v1450 = vpop.f32.mrf.mxu0
  %1451 = vdwg.mxu0
  %1452 = vmatprep.subr.bf16.mxu0 %v608
  %1453 = vmatpush1.bf16.msra.mxu0 %v607
  %1454 = vmatprep.subr.bf16.mxu0 %v604
  %1455 = vmatpush1.bf16.msra.mxu0 %v603
  %1456 = vmatprep.subr.bf16.mxu0 %v600
  %1457 = vmatpush1.bf16.msra.mxu0 %v599
  %1458 = vmatprep.subr.bf16.mxu0 %v596
  %1459 = vmatpush1.bf16.msra.mxu0 %v595
  %1460 = vmatprep.subr.bf16.mxu0 %v592
  %1461 = vmatpush1.bf16.msra.mxu0 %v591
  %1462 = vmatprep.subr.bf16.mxu0 %v588
  %1463 = vmatpush1.bf16.msra.mxu0 %v587
  %1464 = vmatprep.subr.bf16.mxu0 %v584
  %1465 = vmatpush1.bf16.msra.mxu0 %v583
  %1466 = vmatprep.subr.bf16.mxu0 %v580
  %1467 = vmatpush1.bf16.msra.mxu0 %v579
  %1468 = vmatprep.subr.bf16.mxu0 0
  %1469 = vmatpush2.bf16.msra.mxu0 0
  %1470 = vmatprep.subr.bf16.mxu0 0
  %1471 = vmatpush2.bf16.msra.mxu0 0
  %1472 = vmatprep.subr.bf16.mxu0 0
  %1473 = vmatpush2.bf16.msra.mxu0 0
  %1474 = vmatprep.subr.bf16.mxu0 0
  %1475 = vmatpush2.bf16.msra.mxu0 0
  %1476 = vmatprep.subr.bf16.mxu0 0
  %1477 = vmatpush2.bf16.msra.mxu0 0
  %1478 = vmatprep.subr.bf16.mxu0 0
  %1479 = vmatpush2.bf16.msra.mxu0 0
  %1480 = vmatprep.subr.bf16.mxu0 0
  %1481 = vmatpush2.bf16.msra.mxu0 0
  %1482 = vmatprep.subr.bf16.mxu0 0
  %1483 = vmatpush2.bf16.msra.mxu0 0
  %1484 = vmatprep.mubr.bf16.mxu0 0
  %1485 = vmatmul.mubr.bf16.gmra.mxu0 %v1410
  %v1486 = vpop.f32.mrf.mxu0
  %v1487 = vadd.f32 0.0, %v1486
  %v1488 = vpop.f32.mrf.mxu0
  %v1489 = vadd.f32 0.0, %v1488
  %v1490 = vpop.f32.mrf.mxu0
  %v1491 = vpop.f32.mrf.mxu0
  %1492 = vdwg.mxu0
  %v1493 = vadd.f32 %v1406, %v1446
  %v1494 = vadd.f32 %v1407, %v1448
  %v1495 = vadd.f32 %v1408, %v1487
  %v1496 = vadd.f32 %v1409, %v1489
  %v1497 = vmul.f32 %v1493, 0.5
  %v1498 = vtanh.pop %v1497
  %v1499 = vmul.f32 %v1498, 0.5
  %v1500 = vadd.f32 %v1499, 0.5
  %v1501 = vmul.f32 %v1494, 0.5
  %v1502 = vtanh.pop %v1501
  %v1503 = vmul.f32 %v1502, 0.5
  %v1504 = vadd.f32 %v1503, 0.5
  %v1505 = vtanh.pop %v1495
  %v1506 = vmul.f32 %v1496, 0.5
  %v1507 = vtanh.pop %v1506
  %v1508 = vmul.f32 %v1507, 0.5
  %v1509 = vadd.f32 %v1508, 0.5
  %v1510 = vmul.f32 %v1504, %v1402
  %v1511 = vmul.f32 %v1500, %v1505
  %v1512 = vadd.f32 %v1510, %v1511
  %v1513 = vtanh.pop %v1512
  %v1514 = vmul.f32 %v1509, %v1513
  %v1515 = vpack.c.bf16 %v1514, %v1514
  %v1516 = vld [vmem:[%s4] sm:$0xf]
  %v1517 = vld [vmem:[%s4 + $0x4] sm:$0xf]
  %v1518 = vld [vmem:[%s4 + $0x8] sm:$0xf]
  %v1519 = vld [vmem:[%s4 + $0xc] sm:$0xf]
  %v1520 = vld [vmem:[%s4 + $0x10] sm:$0xf]
  %v1521 = vld [vmem:[%s4 + $0x14] sm:$0xf]
  %v1522 = vld [vmem:[%s4 + $0x18] sm:$0xf]
  %v1523 = vld [vmem:[%s4 + $0x1c] sm:$0xf]
  %v1524 = vld [vmem:[%s4 + $0x20] sm:$0xf]
  %v1525 = vld [vmem:[%s4 + $0x24] sm:$0xf]
  %v1526 = vld [vmem:[%s4 + $0x28] sm:$0xf]
  %v1527 = vld [vmem:[%s4 + $0x2c] sm:$0xf]
  %v1528 = vld [vmem:[%s4 + $0x30] sm:$0xf]
  %v1529 = vld [vmem:[%s4 + $0x34] sm:$0xf]
  %v1530 = vld [vmem:[%s4 + $0x38] sm:$0xf]
  %v1531 = vld [vmem:[%s4 + $0x3c] sm:$0xf]
  %v1532 = vld [vmem:[%s5] sm:$0x1]
  %v1534 = vlaneseq
  %v1535 = vshrl.u32 %v1534, 7
  %v1536 = vsub.s32 0, %v1535
  %v1537 = vrot.slane %v1532, %v1536
  %v1555 = vunpack.c.l.b16 %v1516
  %v1556 = vunpack.c.l.b16 %v1517
  %v1557 = vunpack.c.l.b16 %v1518
  %v1558 = vunpack.c.l.b16 %v1519
  %v1559 = vunpack.c.l.b16 %v1520
  %v1560 = vunpack.c.l.b16 %v1521
  %v1561 = vunpack.c.l.b16 %v1522
  %v1562 = vunpack.c.l.b16 %v1523
  %v1563 = vunpack.c.l.b16 %v1524
  %v1564 = vunpack.c.l.b16 %v1525
  %v1565 = vunpack.c.l.b16 %v1526
  %v1566 = vunpack.c.l.b16 %v1527
  %v1567 = vunpack.c.l.b16 %v1528
  %v1568 = vunpack.c.l.b16 %v1529
  %v1569 = vunpack.c.l.b16 %v1530
  %v1570 = vunpack.c.l.b16 %v1531
  %v1571 = vpack.c.b16 %v1556, %v1555
  %v1572 = vpack.c.b16 %v1558, %v1557
  %v1573 = vpack.c.b16 %v1560, %v1559
  %v1574 = vpack.c.b16 %v1562, %v1561
  %v1575 = vpack.c.b16 %v1564, %v1563
  %v1576 = vpack.c.b16 %v1566, %v1565
  %v1577 = vpack.c.b16 %v1568, %v1567
  %v1578 = vpack.c.b16 %v1570, %v1569
  %1587 = vmatprep.subr.bf16.mxu0 0
  %1588 = vmatpush1.bf16.msra.mxu0 %v1578
  %1589 = vmatprep.subr.bf16.mxu0 0
  %1590 = vmatpush1.bf16.msra.mxu0 %v1577
  %1591 = vmatprep.subr.bf16.mxu0 0
  %1592 = vmatpush1.bf16.msra.mxu0 %v1576
  %1593 = vmatprep.subr.bf16.mxu0 0
  %1594 = vmatpush1.bf16.msra.mxu0 %v1575
  %1595 = vmatprep.subr.bf16.mxu0 0
  %1596 = vmatpush1.bf16.msra.mxu0 %v1574
  %1597 = vmatprep.subr.bf16.mxu0 0
  %1598 = vmatpush1.bf16.msra.mxu0 %v1573
  %1599 = vmatprep.subr.bf16.mxu0 0
  %1600 = vmatpush1.bf16.msra.mxu0 %v1572
  %1601 = vmatprep.subr.bf16.mxu0 0
  %1602 = vmatpush1.bf16.msra.mxu0 %v1571
  %1603 = vmatprep.subr.bf16.mxu0 0
  %1604 = vmatpush2.bf16.msra.mxu0 0
  %1605 = vmatprep.subr.bf16.mxu0 0
  %1606 = vmatpush2.bf16.msra.mxu0 0
  %1607 = vmatprep.subr.bf16.mxu0 0
  %1608 = vmatpush2.bf16.msra.mxu0 0
  %1609 = vmatprep.subr.bf16.mxu0 0
  %1610 = vmatpush2.bf16.msra.mxu0 0
  %1611 = vmatprep.subr.bf16.mxu0 0
  %1612 = vmatpush2.bf16.msra.mxu0 0
  %1613 = vmatprep.subr.bf16.mxu0 0
  %1614 = vmatpush2.bf16.msra.mxu0 0
  %1615 = vmatprep.subr.bf16.mxu0 0
  %1616 = vmatpush2.bf16.msra.mxu0 0
  %1617 = vmatprep.subr.bf16.mxu0 0
  %1618 = vmatpush2.bf16.msra.mxu0 0
  %1619 = vmatprep.mubr.bf16.mxu0 0
  %1620 = vmatmul.mubr.bf16.gmra.mxu0 %v1515
  %v1621 = vpop.f32.mrf.mxu0
  %v1622 = vadd.f32 %v1537, %v1621
  %v1623 = vpop.f32.mrf.mxu0
  %v1624 = vpop.f32.mrf.mxu0
  %v1625 = vpop.f32.mrf.mxu0
  %1626 = vdwg.mxu0
  %1627 = vst [vmem:[%s12] sm:$0xff] %v1622
  %v1628 = vpack.c.bf16 %v1622, %v1622
  %v1629 = vld [vmem:[%s6] sm:$0xff]
  %v1630 = vld [vmem:[%s6 + $0x8] sm:$0xff]
  %v1631 = vld [vmem:[%s6 + $0x10] sm:$0xff]
  %v1632 = vld [vmem:[%s6 + $0x18] sm:$0xff]
  %v1633 = vld [vmem:[%s6 + $0x20] sm:$0xff]
  %v1634 = vld [vmem:[%s6 + $0x28] sm:$0xff]
  %v1635 = vld [vmem:[%s6 + $0x30] sm:$0xff]
  %v1636 = vld [vmem:[%s6 + $0x38] sm:$0xff]
  %v1637 = vld [vmem:[%s6 + $0x40] sm:$0xff]
  %v1638 = vld [vmem:[%s6 + $0x48] sm:$0xff]
  %v1639 = vld [vmem:[%s6 + $0x50] sm:$0xff]
  %v1640 = vld [vmem:[%s6 + $0x58] sm:$0xff]
  %v1641 = vld [vmem:[%s6 + $0x60] sm:$0xff]
  %v1642 = vld [vmem:[%s6 + $0x68] sm:$0xff]
  %v1643 = vld [vmem:[%s6 + $0x70] sm:$0xff]
  %v1644 = vld [vmem:[%s6 + $0x78] sm:$0xff]
  %v1645 = vld [vmem:[%s6 + $0x80] sm:$0xff]
  %v1646 = vld [vmem:[%s6 + $0x88] sm:$0xff]
  %v1647 = vld [vmem:[%s6 + $0x90] sm:$0xff]
  %v1648 = vld [vmem:[%s6 + $0x98] sm:$0xff]
  %v1649 = vld [vmem:[%s6 + $0xa0] sm:$0xff]
  %v1650 = vld [vmem:[%s6 + $0xa8] sm:$0xff]
  %v1651 = vld [vmem:[%s6 + $0xb0] sm:$0xff]
  %v1652 = vld [vmem:[%s6 + $0xb8] sm:$0xff]
  %v1653 = vld [vmem:[%s6 + $0xc0] sm:$0xff]
  %v1654 = vld [vmem:[%s6 + $0xc8] sm:$0xff]
  %v1655 = vld [vmem:[%s6 + $0xd0] sm:$0xff]
  %v1656 = vld [vmem:[%s6 + $0xd8] sm:$0xff]
  %v1657 = vld [vmem:[%s6 + $0xe0] sm:$0xff]
  %v1658 = vld [vmem:[%s6 + $0xe8] sm:$0xff]
  %v1659 = vld [vmem:[%s6 + $0xf0] sm:$0xff]
  %v1660 = vld [vmem:[%s6 + $0xf8] sm:$0xff]
  %v1661 = vld [vmem:[%s8] sm:$0xf]
  %v1663 = vlaneseq
  %v1664 = vshrl.u32 %v1663, 7
  %v1665 = vsub.s32 0, %v1664
  %v1666 = vrot.slane %v1661, %v1665
  %v1667 = vlaneseq
  %v1668 = vshrl.u32 %v1667, 7
  %v1669 = vsub.s32 1, %v1668
  %v1670 = vrot.slane %v1661, %v1669
  %v1671 = vlaneseq
  %v1672 = vshrl.u32 %v1671, 7
  %v1673 = vsub.s32 2, %v1672
  %v1674 = vrot.slane %v1661, %v1673
  %v1675 = vlaneseq
  %v1676 = vshrl.u32 %v1675, 7
  %v1677 = vsub.s32 3, %v1676
  %v1678 = vrot.slane %v1661, %v1677
  %v1715 = vunpack.c.l.b16 %v1629
  %v1716 = vunpack.c.h.b16 %v1629
  %v1717 = vunpack.c.l.b16 %v1630
  %v1718 = vunpack.c.h.b16 %v1630
  %v1719 = vunpack.c.l.b16 %v1631
  %v1720 = vunpack.c.h.b16 %v1631
  %v1721 = vunpack.c.l.b16 %v1632
  %v1722 = vunpack.c.h.b16 %v1632
  %v1723 = vunpack.c.l.b16 %v1633
  %v1724 = vunpack.c.h.b16 %v1633
  %v1725 = vunpack.c.l.b16 %v1634
  %v1726 = vunpack.c.h.b16 %v1634
  %v1727 = vunpack.c.l.b16 %v1635
  %v1728 = vunpack.c.h.b16 %v1635
  %v1729 = vunpack.c.l.b16 %v1636
  %v1730 = vunpack.c.h.b16 %v1636
  %v1731 = vunpack.c.l.b16 %v1637
  %v1732 = vunpack.c.h.b16 %v1637
  %v1733 = vunpack.c.l.b16 %v1638
  %v1734 = vunpack.c.h.b16 %v1638
  %v1735 = vunpack.c.l.b16 %v1639
  %v1736 = vunpack.c.h.b16 %v1639
  %v1737 = vunpack.c.l.b16 %v1640
  %v1738 = vunpack.c.h.b16 %v1640
  %v1739 = vunpack.c.l.b16 %v1641
  %v1740 = vunpack.c.h.b16 %v1641
  %v1741 = vunpack.c.l.b16 %v1642
  %v1742 = vunpack.c.h.b16 %v1642
  %v1743 = vunpack.c.l.b16 %v1643
  %v1744 = vunpack.c.h.b16 %v1643
  %v1745 = vunpack.c.l.b16 %v1644
  %v1746 = vunpack.c.h.b16 %v1644
  %v1747 = vunpack.c.l.b16 %v1645
  %v1748 = vunpack.c.h.b16 %v1645
  %v1749 = vunpack.c.l.b16 %v1646
  %v1750 = vunpack.c.h.b16 %v1646
  %v1751 = vunpack.c.l.b16 %v1647
  %v1752 = vunpack.c.h.b16 %v1647
  %v1753 = vunpack.c.l.b16 %v1648
  %v1754 = vunpack.c.h.b16 %v1648
  %v1755 = vunpack.c.l.b16 %v1649
  %v1756 = vunpack.c.h.b16 %v1649
  %v1757 = vunpack.c.l.b16 %v1650
  %v1758 = vunpack.c.h.b16 %v1650
  %v1759 = vunpack.c.l.b16 %v1651
  %v1760 = vunpack.c.h.b16 %v1651
  %v1761 = vunpack.c.l.b16 %v1652
  %v1762 = vunpack.c.h.b16 %v1652
  %v1763 = vunpack.c.l.b16 %v1653
  %v1764 = vunpack.c.h.b16 %v1653
  %v1765 = vunpack.c.l.b16 %v1654
  %v1766 = vunpack.c.h.b16 %v1654
  %v1767 = vunpack.c.l.b16 %v1655
  %v1768 = vunpack.c.h.b16 %v1655
  %v1769 = vunpack.c.l.b16 %v1656
  %v1770 = vunpack.c.h.b16 %v1656
  %v1771 = vunpack.c.l.b16 %v1657
  %v1772 = vunpack.c.h.b16 %v1657
  %v1773 = vunpack.c.l.b16 %v1658
  %v1774 = vunpack.c.h.b16 %v1658
  %v1775 = vunpack.c.l.b16 %v1659
  %v1776 = vunpack.c.h.b16 %v1659
  %v1777 = vunpack.c.l.b16 %v1660
  %v1778 = vunpack.c.h.b16 %v1660
  %v1779 = vpack.c.b16 %v1719, %v1715
  %v1780 = vpack.c.b16 %v1720, %v1716
  %v1781 = vpack.c.b16 %v1721, %v1717
  %v1782 = vpack.c.b16 %v1722, %v1718
  %v1783 = vpack.c.b16 %v1727, %v1723
  %v1784 = vpack.c.b16 %v1728, %v1724
  %v1785 = vpack.c.b16 %v1729, %v1725
  %v1786 = vpack.c.b16 %v1730, %v1726
  %v1787 = vpack.c.b16 %v1735, %v1731
  %v1788 = vpack.c.b16 %v1736, %v1732
  %v1789 = vpack.c.b16 %v1737, %v1733
  %v1790 = vpack.c.b16 %v1738, %v1734
  %v1791 = vpack.c.b16 %v1743, %v1739
  %v1792 = vpack.c.b16 %v1744, %v1740
  %v1793 = vpack.c.b16 %v1745, %v1741
  %v1794 = vpack.c.b16 %v1746, %v1742
  %v1795 = vpack.c.b16 %v1751, %v1747
  %v1796 = vpack.c.b16 %v1752, %v1748
  %v1797 = vpack.c.b16 %v1753, %v1749
  %v1798 = vpack.c.b16 %v1754, %v1750
  %v1799 = vpack.c.b16 %v1759, %v1755
  %v1800 = vpack.c.b16 %v1760, %v1756
  %v1801 = vpack.c.b16 %v1761, %v1757
  %v1802 = vpack.c.b16 %v1762, %v1758
  %v1803 = vpack.c.b16 %v1767, %v1763
  %v1804 = vpack.c.b16 %v1768, %v1764
  %v1805 = vpack.c.b16 %v1769, %v1765
  %v1806 = vpack.c.b16 %v1770, %v1766
  %v1807 = vpack.c.b16 %v1775, %v1771
  %v1808 = vpack.c.b16 %v1776, %v1772
  %v1809 = vpack.c.b16 %v1777, %v1773
  %v1810 = vpack.c.b16 %v1778, %v1774
  %1843 = vmatprep.subr.bf16.mxu0 %v1808
  %1844 = vmatpush1.bf16.msra.mxu0 %v1807
  %1845 = vmatprep.subr.bf16.mxu0 %v1804
  %1846 = vmatpush1.bf16.msra.mxu0 %v1803
  %1847 = vmatprep.subr.bf16.mxu0 %v1800
  %1848 = vmatpush1.bf16.msra.mxu0 %v1799
  %1849 = vmatprep.subr.bf16.mxu0 %v1796
  %1850 = vmatpush1.bf16.msra.mxu0 %v1795
  %1851 = vmatprep.subr.bf16.mxu0 %v1792
  %1852 = vmatpush1.bf16.msra.mxu0 %v1791
  %1853 = vmatprep.subr.bf16.mxu0 %v1788
  %1854 = vmatpush1.bf16.msra.mxu0 %v1787
  %1855 = vmatprep.subr.bf16.mxu0 %v1784
  %1856 = vmatpush1.bf16.msra.mxu0 %v1783
  %1857 = vmatprep.subr.bf16.mxu0 %v1780
  %1858 = vmatpush1.bf16.msra.mxu0 %v1779
  %1859 = vmatprep.subr.bf16.mxu0 0
  %1860 = vmatpush2.bf16.msra.mxu0 0
  %1861 = vmatprep.subr.bf16.mxu0 0
  %1862 = vmatpush2.bf16.msra.mxu0 0
  %1863 = vmatprep.subr.bf16.mxu0 0
  %1864 = vmatpush2.bf16.msra.mxu0 0
  %1865 = vmatprep.subr.bf16.mxu0 0
  %1866 = vmatpush2.bf16.msra.mxu0 0
  %1867 = vmatprep.subr.bf16.mxu0 0
  %1868 = vmatpush2.bf16.msra.mxu0 0
  %1869 = vmatprep.subr.bf16.mxu0 0
  %1870 = vmatpush2.bf16.msra.mxu0 0
  %1871 = vmatprep.subr.bf16.mxu0 0
  %1872 = vmatpush2.bf16.msra.mxu0 0
  %1873 = vmatprep.subr.bf16.mxu0 0
  %1874 = vmatpush2.bf16.msra.mxu0 0
  %1875 = vmatprep.mubr.bf16.mxu0 0
  %1876 = vmatmul.mubr.bf16.gmra.mxu0 %v1628
  %v1877 = vpop.f32.mrf.mxu0
  %v1878 = vadd.f32 %v1666, %v1877
  %v1879 = vpop.f32.mrf.mxu0
  %v1880 = vadd.f32 %v1670, %v1879
  %v1881 = vpop.f32.mrf.mxu0
  %v1882 = vpop.f32.mrf.mxu0
  %1883 = vdwg.mxu0
  %1884 = vmatprep.subr.bf16.mxu0 %v1810
  %1885 = vmatpush1.bf16.msra.mxu0 %v1809
  %1886 = vmatprep.subr.bf16.mxu0 %v1806
  %1887 = vmatpush1.bf16.msra.mxu0 %v1805
  %1888 = vmatprep.subr.bf16.mxu0 %v1802
  %1889 = vmatpush1.bf16.msra.mxu0 %v1801
  %1890 = vmatprep.subr.bf16.mxu0 %v1798
  %1891 = vmatpush1.bf16.msra.mxu0 %v1797
  %1892 = vmatprep.subr.bf16.mxu0 %v1794
  %1893 = vmatpush1.bf16.msra.mxu0 %v1793
  %1894 = vmatprep.subr.bf16.mxu0 %v1790
  %1895 = vmatpush1.bf16.msra.mxu0 %v1789
  %1896 = vmatprep.subr.bf16.mxu0 %v1786
  %1897 = vmatpush1.bf16.msra.mxu0 %v1785
  %1898 = vmatprep.subr.bf16.mxu0 %v1782
  %1899 = vmatpush1.bf16.msra.mxu0 %v1781
  %1900 = vmatprep.subr.bf16.mxu0 0
  %1901 = vmatpush2.bf16.msra.mxu0 0
  %1902 = vmatprep.subr.bf16.mxu0 0
  %1903 = vmatpush2.bf16.msra.mxu0 0
  %1904 = vmatprep.subr.bf16.mxu0 0
  %1905 = vmatpush2.bf16.msra.mxu0 0
  %1906 = vmatprep.subr.bf16.mxu0 0
  %1907 = vmatpush2.bf16.msra.mxu0 0
  %1908 = vmatprep.subr.bf16.mxu0 0
  %1909 = vmatpush2.bf16.msra.mxu0 0
  %1910 = vmatprep.subr.bf16.mxu0 0
  %1911 = vmatpush2.bf16.msra.mxu0 0
  %1912 = vmatprep.subr.bf16.mxu0 0
  %1913 = vmatpush2.bf16.msra.mxu0 0
  %1914 = vmatprep.subr.bf16.mxu0 0
  %1915 = vmatpush2.bf16.msra.mxu0 0
  %1916 = vmatprep.mubr.bf16.mxu0 0
  %1917 = vmatmul.mubr.bf16.gmra.mxu0 %v1628
  %v1918 = vpop.f32.mrf.mxu0
  %v1919 = vadd.f32 %v1674, %v1918
  %v1920 = vpop.f32.mrf.mxu0
  %v1921 = vadd.f32 %v1678, %v1920
  %v1922 = vpop.f32.mrf.mxu0
  %v1923 = vpop.f32.mrf.mxu0
  %1924 = vdwg.mxu0
  %1925 = vst [vmem:[#allocation4] sm:$0xff] %v1878
  %1926 = vst [vmem:[#allocation4 + $0x8] sm:$0xff] %v1880
  %1927 = vst [vmem:[#allocation4 + $0x10] sm:$0xff] %v1919
  %1928 = vst [vmem:[#allocation4 + $0x18] sm:$0xff] %v1921
  %v1929 = vld [vmem:[#allocation4] sm:$0xff]
  %v1930 = vld [vmem:[#allocation4 + $0x8] sm:$0xff]
  %v1931 = vld [vmem:[#allocation4 + $0x10] sm:$0xff]
  %v1932 = vld [vmem:[#allocation4 + $0x18] sm:$0xff]
  %v1933 = vld [vmem:[%s7] sm:$0xff]
  %v1934 = vld [vmem:[%s7 + $0x8] sm:$0xff]
  %v1935 = vld [vmem:[%s7 + $0x10] sm:$0xff]
  %v1936 = vld [vmem:[%s7 + $0x18] sm:$0xff]
  %v1937 = vld [vmem:[%s7 + $0x20] sm:$0xff]
  %v1938 = vld [vmem:[%s7 + $0x28] sm:$0xff]
  %v1939 = vld [vmem:[%s7 + $0x30] sm:$0xff]
  %v1940 = vld [vmem:[%s7 + $0x38] sm:$0xff]
  %v1941 = vld [vmem:[%s7 + $0x40] sm:$0xff]
  %v1942 = vld [vmem:[%s7 + $0x48] sm:$0xff]
  %v1943 = vld [vmem:[%s7 + $0x50] sm:$0xff]
  %v1944 = vld [vmem:[%s7 + $0x58] sm:$0xff]
  %v1945 = vld [vmem:[%s7 + $0x60] sm:$0xff]
  %v1946 = vld [vmem:[%s7 + $0x68] sm:$0xff]
  %v1947 = vld [vmem:[%s7 + $0x70] sm:$0xff]
  %v1948 = vld [vmem:[%s7 + $0x78] sm:$0xff]
  %v1949 = vld [vmem:[%s7 + $0x80] sm:$0xff]
  %v1950 = vld [vmem:[%s7 + $0x88] sm:$0xff]
  %v1951 = vld [vmem:[%s7 + $0x90] sm:$0xff]
  %v1952 = vld [vmem:[%s7 + $0x98] sm:$0xff]
  %v1953 = vld [vmem:[%s7 + $0xa0] sm:$0xff]
  %v1954 = vld [vmem:[%s7 + $0xa8] sm:$0xff]
  %v1955 = vld [vmem:[%s7 + $0xb0] sm:$0xff]
  %v1956 = vld [vmem:[%s7 + $0xb8] sm:$0xff]
  %v1957 = vld [vmem:[%s7 + $0xc0] sm:$0xff]
  %v1958 = vld [vmem:[%s7 + $0xc8] sm:$0xff]
  %v1959 = vld [vmem:[%s7 + $0xd0] sm:$0xff]
  %v1960 = vld [vmem:[%s7 + $0xd8] sm:$0xff]
  %v1961 = vld [vmem:[%s7 + $0xe0] sm:$0xff]
  %v1962 = vld [vmem:[%s7 + $0xe8] sm:$0xff]
  %v1963 = vld [vmem:[%s7 + $0xf0] sm:$0xff]
  %v1964 = vld [vmem:[%s7 + $0xf8] sm:$0xff]
  %v1997 = vunpack.c.l.b16 %v1933
  %v1998 = vunpack.c.h.b16 %v1933
  %v1999 = vunpack.c.l.b16 %v1934
  %v2000 = vunpack.c.h.b16 %v1934
  %v2001 = vunpack.c.l.b16 %v1935
  %v2002 = vunpack.c.h.b16 %v1935
  %v2003 = vunpack.c.l.b16 %v1936
  %v2004 = vunpack.c.h.b16 %v1936
  %v2005 = vunpack.c.l.b16 %v1937
  %v2006 = vunpack.c.h.b16 %v1937
  %v2007 = vunpack.c.l.b16 %v1938
  %v2008 = vunpack.c.h.b16 %v1938
  %v2009 = vunpack.c.l.b16 %v1939
  %v2010 = vunpack.c.h.b16 %v1939
  %v2011 = vunpack.c.l.b16 %v1940
  %v2012 = vunpack.c.h.b16 %v1940
  %v2013 = vunpack.c.l.b16 %v1941
  %v2014 = vunpack.c.h.b16 %v1941
  %v2015 = vunpack.c.l.b16 %v1942
  %v2016 = vunpack.c.h.b16 %v1942
  %v2017 = vunpack.c.l.b16 %v1943
  %v2018 = vunpack.c.h.b16 %v1943
  %v2019 = vunpack.c.l.b16 %v1944
  %v2020 = vunpack.c.h.b16 %v1944
  %v2021 = vunpack.c.l.b16 %v1945
  %v2022 = vunpack.c.h.b16 %v1945
  %v2023 = vunpack.c.l.b16 %v1946
  %v2024 = vunpack.c.h.b16 %v1946
  %v2025 = vunpack.c.l.b16 %v1947
  %v2026 = vunpack.c.h.b16 %v1947
  %v2027 = vunpack.c.l.b16 %v1948
  %v2028 = vunpack.c.h.b16 %v1948
  %v2029 = vunpack.c.l.b16 %v1949
  %v2030 = vunpack.c.h.b16 %v1949
  %v2031 = vunpack.c.l.b16 %v1950
  %v2032 = vunpack.c.h.b16 %v1950
  %v2033 = vunpack.c.l.b16 %v1951
  %v2034 = vunpack.c.h.b16 %v1951
  %v2035 = vunpack.c.l.b16 %v1952
  %v2036 = vunpack.c.h.b16 %v1952
  %v2037 = vunpack.c.l.b16 %v1953
  %v2038 = vunpack.c.h.b16 %v1953
  %v2039 = vunpack.c.l.b16 %v1954
  %v2040 = vunpack.c.h.b16 %v1954
  %v2041 = vunpack.c.l.b16 %v1955
  %v2042 = vunpack.c.h.b16 %v1955
  %v2043 = vunpack.c.l.b16 %v1956
  %v2044 = vunpack.c.h.b16 %v1956
  %v2045 = vunpack.c.l.b16 %v1957
  %v2046 = vunpack.c.h.b16 %v1957
  %v2047 = vunpack.c.l.b16 %v1958
  %v2048 = vunpack.c.h.b16 %v1958
  %v2049 = vunpack.c.l.b16 %v1959
  %v2050 = vunpack.c.h.b16 %v1959
  %v2051 = vunpack.c.l.b16 %v1960
  %v2052 = vunpack.c.h.b16 %v1960
  %v2053 = vunpack.c.l.b16 %v1961
  %v2054 = vunpack.c.h.b16 %v1961
  %v2055 = vunpack.c.l.b16 %v1962
  %v2056 = vunpack.c.h.b16 %v1962
  %v2057 = vunpack.c.l.b16 %v1963
  %v2058 = vunpack.c.h.b16 %v1963
  %v2059 = vunpack.c.l.b16 %v1964
  %v2060 = vunpack.c.h.b16 %v1964
  %v2061 = vpack.c.b16 %v2001, %v1997
  %v2062 = vpack.c.b16 %v2002, %v1998
  %v2063 = vpack.c.b16 %v2003, %v1999
  %v2064 = vpack.c.b16 %v2004, %v2000
  %v2065 = vpack.c.b16 %v2009, %v2005
  %v2066 = vpack.c.b16 %v2010, %v2006
  %v2067 = vpack.c.b16 %v2011, %v2007
  %v2068 = vpack.c.b16 %v2012, %v2008
  %v2069 = vpack.c.b16 %v2017, %v2013
  %v2070 = vpack.c.b16 %v2018, %v2014
  %v2071 = vpack.c.b16 %v2019, %v2015
  %v2072 = vpack.c.b16 %v2020, %v2016
  %v2073 = vpack.c.b16 %v2025, %v2021
  %v2074 = vpack.c.b16 %v2026, %v2022
  %v2075 = vpack.c.b16 %v2027, %v2023
  %v2076 = vpack.c.b16 %v2028, %v2024
  %v2077 = vpack.c.b16 %v2033, %v2029
  %v2078 = vpack.c.b16 %v2034, %v2030
  %v2079 = vpack.c.b16 %v2035, %v2031
  %v2080 = vpack.c.b16 %v2036, %v2032
  %v2081 = vpack.c.b16 %v2041, %v2037
  %v2082 = vpack.c.b16 %v2042, %v2038
  %v2083 = vpack.c.b16 %v2043, %v2039
  %v2084 = vpack.c.b16 %v2044, %v2040
  %v2085 = vpack.c.b16 %v2049, %v2045
  %v2086 = vpack.c.b16 %v2050, %v2046
  %v2087 = vpack.c.b16 %v2051, %v2047
  %v2088 = vpack.c.b16 %v2052, %v2048
  %v2089 = vpack.c.b16 %v2057, %v2053
  %v2090 = vpack.c.b16 %v2058, %v2054
  %v2091 = vpack.c.b16 %v2059, %v2055
  %v2092 = vpack.c.b16 %v2060, %v2056
  %2125 = vmatprep.subr.bf16.mxu0 %v2090
  %2126 = vmatpush1.bf16.msra.mxu0 %v2089
  %2127 = vmatprep.subr.bf16.mxu0 %v2086
  %2128 = vmatpush1.bf16.msra.mxu0 %v2085
  %2129 = vmatprep.subr.bf16.mxu0 %v2082
  %2130 = vmatpush1.bf16.msra.mxu0 %v2081
  %2131 = vmatprep.subr.bf16.mxu0 %v2078
  %2132 = vmatpush1.bf16.msra.mxu0 %v2077
  %2133 = vmatprep.subr.bf16.mxu0 %v2074
  %2134 = vmatpush1.bf16.msra.mxu0 %v2073
  %2135 = vmatprep.subr.bf16.mxu0 %v2070
  %2136 = vmatpush1.bf16.msra.mxu0 %v2069
  %2137 = vmatprep.subr.bf16.mxu0 %v2066
  %2138 = vmatpush1.bf16.msra.mxu0 %v2065
  %2139 = vmatprep.subr.bf16.mxu0 %v2062
  %2140 = vmatpush1.bf16.msra.mxu0 %v2061
  %2141 = vmatprep.subr.bf16.mxu0 0
  %2142 = vmatpush2.bf16.msra.mxu0 0
  %2143 = vmatprep.subr.bf16.mxu0 0
  %2144 = vmatpush2.bf16.msra.mxu0 0
  %2145 = vmatprep.subr.bf16.mxu0 0
  %2146 = vmatpush2.bf16.msra.mxu0 0
  %2147 = vmatprep.subr.bf16.mxu0 0
  %2148 = vmatpush2.bf16.msra.mxu0 0
  %2149 = vmatprep.subr.bf16.mxu0 0
  %2150 = vmatpush2.bf16.msra.mxu0 0
  %2151 = vmatprep.subr.bf16.mxu0 0
  %2152 = vmatpush2.bf16.msra.mxu0 0
  %2153 = vmatprep.subr.bf16.mxu0 0
  %2154 = vmatpush2.bf16.msra.mxu0 0
  %2155 = vmatprep.subr.bf16.mxu0 0
  %2156 = vmatpush2.bf16.msra.mxu0 0
  %2157 = vmatprep.mubr.bf16.mxu0 0
  %2158 = vmatmul.mubr.bf16.gmra.mxu0 0
  %v2159 = vpop.f32.mrf.mxu0
  %v2160 = vadd.f32 0.0, %v2159
  %v2161 = vpop.f32.mrf.mxu0
  %v2162 = vadd.f32 0.0, %v2161
  %v2163 = vpop.f32.mrf.mxu0
  %v2164 = vpop.f32.mrf.mxu0
  %2165 = vdwg.mxu0
  %2166 = vmatprep.subr.bf16.mxu0 %v2092
  %2167 = vmatpush1.bf16.msra.mxu0 %v2091
  %2168 = vmatprep.subr.bf16.mxu0 %v2088
  %2169 = vmatpush1.bf16.msra.mxu0 %v2087
  %2170 = vmatprep.subr.bf16.mxu0 %v2084
  %2171 = vmatpush1.bf16.msra.mxu0 %v2083
  %2172 = vmatprep.subr.bf16.mxu0 %v2080
  %2173 = vmatpush1.bf16.msra.mxu0 %v2079
  %2174 = vmatprep.subr.bf16.mxu0 %v2076
  %2175 = vmatpush1.bf16.msra.mxu0 %v2075
  %2176 = vmatprep.subr.bf16.mxu0 %v2072
  %2177 = vmatpush1.bf16.msra.mxu0 %v2071
  %2178 = vmatprep.subr.bf16.mxu0 %v2068
  %2179 = vmatpush1.bf16.msra.mxu0 %v2067
  %2180 = vmatprep.subr.bf16.mxu0 %v2064
  %2181 = vmatpush1.bf16.msra.mxu0 %v2063
  %2182 = vmatprep.subr.bf16.mxu0 0
  %2183 = vmatpush2.bf16.msra.mxu0 0
  %2184 = vmatprep.subr.bf16.mxu0 0
  %2185 = vmatpush2.bf16.msra.mxu0 0
  %2186 = vmatprep.subr.bf16.mxu0 0
  %2187 = vmatpush2.bf16.msra.mxu0 0
  %2188 = vmatprep.subr.bf16.mxu0 0
  %2189 = vmatpush2.bf16.msra.mxu0 0
  %2190 = vmatprep.subr.bf16.mxu0 0
  %2191 = vmatpush2.bf16.msra.mxu0 0
  %2192 = vmatprep.subr.bf16.mxu0 0
  %2193 = vmatpush2.bf16.msra.mxu0 0
  %2194 = vmatprep.subr.bf16.mxu0 0
  %2195 = vmatpush2.bf16.msra.mxu0 0
  %2196 = vmatprep.subr.bf16.mxu0 0
  %2197 = vmatpush2.bf16.msra.mxu0 0
  %2198 = vmatprep.mubr.bf16.mxu0 0
  %2199 = vmatmul.mubr.bf16.gmra.mxu0 0
  %v2200 = vpop.f32.mrf.mxu0
  %v2201 = vadd.f32 0.0, %v2200
  %v2202 = vpop.f32.mrf.mxu0
  %v2203 = vadd.f32 0.0, %v2202
  %v2204 = vpop.f32.mrf.mxu0
  %v2205 = vpop.f32.mrf.mxu0
  %2206 = vdwg.mxu0
  %v2207 = vadd.f32 %v1929, %v2160
  %v2208 = vadd.f32 %v1930, %v2162
  %v2209 = vadd.f32 %v1931, %v2201
  %v2210 = vadd.f32 %v1932, %v2203
  %v2211 = vmul.f32 %v2207, 0.5
  %v2212 = vtanh.pop %v2211
  %v2213 = vmul.f32 %v2212, 0.5
  %v2214 = vadd.f32 %v2213, 0.5
  %v2215 = vmul.f32 %v2208, 0.5
  %v2216 = vtanh.pop %v2215
  %v2217 = vmul.f32 %v2216, 0.5
  %v2218 = vadd.f32 %v2217, 0.5
  %v2219 = vtanh.pop %v2209
  %v2220 = vmul.f32 %v2210, 0.5
  %v2221 = vtanh.pop %v2220
  %v2222 = vmul.f32 %v2221, 0.5
  %v2223 = vadd.f32 %v2222, 0.5
  %v2224 = vmul.f32 %v2218, 0.0
  %v2225 = vmul.f32 %v2214, %v2219
  %v2226 = vadd.f32 %v2224, %v2225
  %v2227 = vtanh.pop %v2226
  %v2228 = vmul.f32 %v2223, %v2227
  %2229 = vst [vmem:[#allocation3] sm:$0xff] %v2228
  %v2230 = vld [vmem:[#allocation4] sm:$0xff]
  %v2231 = vld [vmem:[#allocation4 + $0x8] sm:$0xff]
  %v2232 = vld [vmem:[#allocation4 + $0x10] sm:$0xff]
  %v2233 = vld [vmem:[#allocation4 + $0x18] sm:$0xff]
  %v2234 = vpack.c.bf16 %v2228, %v2228
  %v2235 = vld [vmem:[%s7] sm:$0xff]
  %v2236 = vld [vmem:[%s7 + $0x8] sm:$0xff]
  %v2237 = vld [vmem:[%s7 + $0x10] sm:$0xff]
  %v2238 = vld [vmem:[%s7 + $0x18] sm:$0xff]
  %v2239 = vld [vmem:[%s7 + $0x20] sm:$0xff]
  %v2240 = vld [vmem:[%s7 + $0x28] sm:$0xff]
  %v2241 = vld [vmem:[%s7 + $0x30] sm:$0xff]
  %v2242 = vld [vmem:[%s7 + $0x38] sm:$0xff]
  %v2243 = vld [vmem:[%s7 + $0x40] sm:$0xff]
  %v2244 = vld [vmem:[%s7 + $0x48] sm:$0xff]
  %v2245 = vld [vmem:[%s7 + $0x50] sm:$0xff]
  %v2246 = vld [vmem:[%s7 + $0x58] sm:$0xff]
  %v2247 = vld [vmem:[%s7 + $0x60] sm:$0xff]
  %v2248 = vld [vmem:[%s7 + $0x68] sm:$0xff]
  %v2249 = vld [vmem:[%s7 + $0x70] sm:$0xff]
  %v2250 = vld [vmem:[%s7 + $0x78] sm:$0xff]
  %v2251 = vld [vmem:[%s7 + $0x80] sm:$0xff]
  %v2252 = vld [vmem:[%s7 + $0x88] sm:$0xff]
  %v2253 = vld [vmem:[%s7 + $0x90] sm:$0xff]
  %v2254 = vld [vmem:[%s7 + $0x98] sm:$0xff]
  %v2255 = vld [vmem:[%s7 + $0xa0] sm:$0xff]
  %v2256 = vld [vmem:[%s7 + $0xa8] sm:$0xff]
  %v2257 = vld [vmem:[%s7 + $0xb0] sm:$0xff]
  %v2258 = vld [vmem:[%s7 + $0xb8] sm:$0xff]
  %v2259 = vld [vmem:[%s7 + $0xc0] sm:$0xff]
  %v2260 = vld [vmem:[%s7 + $0xc8] sm:$0xff]
  %v2261 = vld [vmem:[%s7 + $0xd0] sm:$0xff]
  %v2262 = vld [vmem:[%s7 + $0xd8] sm:$0xff]
  %v2263 = vld [vmem:[%s7 + $0xe0] sm:$0xff]
  %v2264 = vld [vmem:[%s7 + $0xe8] sm:$0xff]
  %v2265 = vld [vmem:[%s7 + $0xf0] sm:$0xff]
  %v2266 = vld [vmem:[%s7 + $0xf8] sm:$0xff]
  %v2299 = vunpack.c.l.b16 %v2235
  %v2300 = vunpack.c.h.b16 %v2235
  %v2301 = vunpack.c.l.b16 %v2236
  %v2302 = vunpack.c.h.b16 %v2236
  %v2303 = vunpack.c.l.b16 %v2237
  %v2304 = vunpack.c.h.b16 %v2237
  %v2305 = vunpack.c.l.b16 %v2238
  %v2306 = vunpack.c.h.b16 %v2238
  %v2307 = vunpack.c.l.b16 %v2239
  %v2308 = vunpack.c.h.b16 %v2239
  %v2309 = vunpack.c.l.b16 %v2240
  %v2310 = vunpack.c.h.b16 %v2240
  %v2311 = vunpack.c.l.b16 %v2241
  %v2312 = vunpack.c.h.b16 %v2241
  %v2313 = vunpack.c.l.b16 %v2242
  %v2314 = vunpack.c.h.b16 %v2242
  %v2315 = vunpack.c.l.b16 %v2243
  %v2316 = vunpack.c.h.b16 %v2243
  %v2317 = vunpack.c.l.b16 %v2244
  %v2318 = vunpack.c.h.b16 %v2244
  %v2319 = vunpack.c.l.b16 %v2245
  %v2320 = vunpack.c.h.b16 %v2245
  %v2321 = vunpack.c.l.b16 %v2246
  %v2322 = vunpack.c.h.b16 %v2246
  %v2323 = vunpack.c.l.b16 %v2247
  %v2324 = vunpack.c.h.b16 %v2247
  %v2325 = vunpack.c.l.b16 %v2248
  %v2326 = vunpack.c.h.b16 %v2248
  %v2327 = vunpack.c.l.b16 %v2249
  %v2328 = vunpack.c.h.b16 %v2249
  %v2329 = vunpack.c.l.b16 %v2250
  %v2330 = vunpack.c.h.b16 %v2250
  %v2331 = vunpack.c.l.b16 %v2251
  %v2332 = vunpack.c.h.b16 %v2251
  %v2333 = vunpack.c.l.b16 %v2252
  %v2334 = vunpack.c.h.b16 %v2252
  %v2335 = vunpack.c.l.b16 %v2253
  %v2336 = vunpack.c.h.b16 %v2253
  %v2337 = vunpack.c.l.b16 %v2254
  %v2338 = vunpack.c.h.b16 %v2254
  %v2339 = vunpack.c.l.b16 %v2255
  %v2340 = vunpack.c.h.b16 %v2255
  %v2341 = vunpack.c.l.b16 %v2256
  %v2342 = vunpack.c.h.b16 %v2256
  %v2343 = vunpack.c.l.b16 %v2257
  %v2344 = vunpack.c.h.b16 %v2257
  %v2345 = vunpack.c.l.b16 %v2258
  %v2346 = vunpack.c.h.b16 %v2258
  %v2347 = vunpack.c.l.b16 %v2259
  %v2348 = vunpack.c.h.b16 %v2259
  %v2349 = vunpack.c.l.b16 %v2260
  %v2350 = vunpack.c.h.b16 %v2260
  %v2351 = vunpack.c.l.b16 %v2261
  %v2352 = vunpack.c.h.b16 %v2261
  %v2353 = vunpack.c.l.b16 %v2262
  %v2354 = vunpack.c.h.b16 %v2262
  %v2355 = vunpack.c.l.b16 %v2263
  %v2356 = vunpack.c.h.b16 %v2263
  %v2357 = vunpack.c.l.b16 %v2264
  %v2358 = vunpack.c.h.b16 %v2264
  %v2359 = vunpack.c.l.b16 %v2265
  %v2360 = vunpack.c.h.b16 %v2265
  %v2361 = vunpack.c.l.b16 %v2266
  %v2362 = vunpack.c.h.b16 %v2266
  %v2363 = vpack.c.b16 %v2303, %v2299
  %v2364 = vpack.c.b16 %v2304, %v2300
  %v2365 = vpack.c.b16 %v2305, %v2301
  %v2366 = vpack.c.b16 %v2306, %v2302
  %v2367 = vpack.c.b16 %v2311, %v2307
  %v2368 = vpack.c.b16 %v2312, %v2308
  %v2369 = vpack.c.b16 %v2313, %v2309
  %v2370 = vpack.c.b16 %v2314, %v2310
  %v2371 = vpack.c.b16 %v2319, %v2315
  %v2372 = vpack.c.b16 %v2320, %v2316
  %v2373 = vpack.c.b16 %v2321, %v2317
  %v2374 = vpack.c.b16 %v2322, %v2318
  %v2375 = vpack.c.b16 %v2327, %v2323
  %v2376 = vpack.c.b16 %v2328, %v2324
  %v2377 = vpack.c.b16 %v2329, %v2325
  %v2378 = vpack.c.b16 %v2330, %v2326
  %v2379 = vpack.c.b16 %v2335, %v2331
  %v2380 = vpack.c.b16 %v2336, %v2332
  %v2381 = vpack.c.b16 %v2337, %v2333
  %v2382 = vpack.c.b16 %v2338, %v2334
  %v2383 = vpack.c.b16 %v2343, %v2339
  %v2384 = vpack.c.b16 %v2344, %v2340
  %v2385 = vpack.c.b16 %v2345, %v2341
  %v2386 = vpack.c.b16 %v2346, %v2342
  %v2387 = vpack.c.b16 %v2351, %v2347
  %v2388 = vpack.c.b16 %v2352, %v2348
  %v2389 = vpack.c.b16 %v2353, %v2349
  %v2390 = vpack.c.b16 %v2354, %v2350
  %v2391 = vpack.c.b16 %v2359, %v2355
  %v2392 = vpack.c.b16 %v2360, %v2356
  %v2393 = vpack.c.b16 %v2361, %v2357
  %v2394 = vpack.c.b16 %v2362, %v2358
  %2427 = vmatprep.subr.bf16.mxu0 %v2392
  %2428 = vmatpush1.bf16.msra.mxu0 %v2391
  %2429 = vmatprep.subr.bf16.mxu0 %v2388
  %2430 = vmatpush1.bf16.msra.mxu0 %v2387
  %2431 = vmatprep.subr.bf16.mxu0 %v2384
  %2432 = vmatpush1.bf16.msra.mxu0 %v2383
  %2433 = vmatprep.subr.bf16.mxu0 %v2380
  %2434 = vmatpush1.bf16.msra.mxu0 %v2379
  %2435 = vmatprep.subr.bf16.mxu0 %v2376
  %2436 = vmatpush1.bf16.msra.mxu0 %v2375
  %2437 = vmatprep.subr.bf16.mxu0 %v2372
  %2438 = vmatpush1.bf16.msra.mxu0 %v2371
  %2439 = vmatprep.subr.bf16.mxu0 %v2368
  %2440 = vmatpush1.bf16.msra.mxu0 %v2367
  %2441 = vmatprep.subr.bf16.mxu0 %v2364
  %2442 = vmatpush1.bf16.msra.mxu0 %v2363
  %2443 = vmatprep.subr.bf16.mxu0 0
  %2444 = vmatpush2.bf16.msra.mxu0 0
  %2445 = vmatprep.subr.bf16.mxu0 0
  %2446 = vmatpush2.bf16.msra.mxu0 0
  %2447 = vmatprep.subr.bf16.mxu0 0
  %2448 = vmatpush2.bf16.msra.mxu0 0
  %2449 = vmatprep.subr.bf16.mxu0 0
  %2450 = vmatpush2.bf16.msra.mxu0 0
  %2451 = vmatprep.subr.bf16.mxu0 0
  %2452 = vmatpush2.bf16.msra.mxu0 0
  %2453 = vmatprep.subr.bf16.mxu0 0
  %2454 = vmatpush2.bf16.msra.mxu0 0
  %2455 = vmatprep.subr.bf16.mxu0 0
  %2456 = vmatpush2.bf16.msra.mxu0 0
  %2457 = vmatprep.subr.bf16.mxu0 0
  %2458 = vmatpush2.bf16.msra.mxu0 0
  %2459 = vmatprep.mubr.bf16.mxu0 0
  %2460 = vmatmul.mubr.bf16.gmra.mxu0 %v2234
  %v2461 = vpop.f32.mrf.mxu0
  %v2462 = vadd.f32 0.0, %v2461
  %v2463 = vpop.f32.mrf.mxu0
  %v2464 = vadd.f32 0.0, %v2463
  %v2465 = vpop.f32.mrf.mxu0
  %v2466 = vpop.f32.mrf.mxu0
  %2467 = vdwg.mxu0
  %2468 = vmatprep.subr.bf16.mxu0 %v2394
  %2469 = vmatpush1.bf16.msra.mxu0 %v2393
  %2470 = vmatprep.subr.bf16.mxu0 %v2390
  %2471 = vmatpush1.bf16.msra.mxu0 %v2389
  %2472 = vmatprep.subr.bf16.mxu0 %v2386
  %2473 = vmatpush1.bf16.msra.mxu0 %v2385
  %2474 = vmatprep.subr.bf16.mxu0 %v2382
  %2475 = vmatpush1.bf16.msra.mxu0 %v2381
  %2476 = vmatprep.subr.bf16.mxu0 %v2378
  %2477 = vmatpush1.bf16.msra.mxu0 %v2377
  %2478 = vmatprep.subr.bf16.mxu0 %v2374
  %2479 = vmatpush1.bf16.msra.mxu0 %v2373
  %2480 = vmatprep.subr.bf16.mxu0 %v2370
  %2481 = vmatpush1.bf16.msra.mxu0 %v2369
  %2482 = vmatprep.subr.bf16.mxu0 %v2366
  %2483 = vmatpush1.bf16.msra.mxu0 %v2365
  %2484 = vmatprep.subr.bf16.mxu0 0
  %2485 = vmatpush2.bf16.msra.mxu0 0
  %2486 = vmatprep.subr.bf16.mxu0 0
  %2487 = vmatpush2.bf16.msra.mxu0 0
  %2488 = vmatprep.subr.bf16.mxu0 0
  %2489 = vmatpush2.bf16.msra.mxu0 0
  %2490 = vmatprep.subr.bf16.mxu0 0
  %2491 = vmatpush2.bf16.msra.mxu0 0
  %2492 = vmatprep.subr.bf16.mxu0 0
  %2493 = vmatpush2.bf16.msra.mxu0 0
  %2494 = vmatprep.subr.bf16.mxu0 0
  %2495 = vmatpush2.bf16.msra.mxu0 0
  %2496 = vmatprep.subr.bf16.mxu0 0
  %2497 = vmatpush2.bf16.msra.mxu0 0
  %2498 = vmatprep.subr.bf16.mxu0 0
  %2499 = vmatpush2.bf16.msra.mxu0 0
  %2500 = vmatprep.mubr.bf16.mxu0 0
  %2501 = vmatmul.mubr.bf16.gmra.mxu0 %v2234
  %v2502 = vpop.f32.mrf.mxu0
  %v2503 = vadd.f32 0.0, %v2502
  %v2504 = vpop.f32.mrf.mxu0
  %v2505 = vadd.f32 0.0, %v2504
  %v2506 = vpop.f32.mrf.mxu0
  %v2507 = vpop.f32.mrf.mxu0
  %2508 = vdwg.mxu0
  %v2509 = vadd.f32 %v2230, %v2462
  %v2510 = vadd.f32 %v2231, %v2464
  %v2511 = vadd.f32 %v2232, %v2503
  %v2512 = vadd.f32 %v2233, %v2505
  %v2513 = vmul.f32 %v2509, 0.5
  %v2514 = vtanh.pop %v2513
  %v2515 = vmul.f32 %v2514, 0.5
  %v2516 = vadd.f32 %v2515, 0.5
  %v2517 = vmul.f32 %v2510, 0.5
  %v2518 = vtanh.pop %v2517
  %v2519 = vmul.f32 %v2518, 0.5
  %v2520 = vadd.f32 %v2519, 0.5
  %v2521 = vtanh.pop %v2511
  %v2522 = vmul.f32 %v2512, 0.5
  %v2523 = vtanh.pop %v2522
  %v2524 = vmul.f32 %v2523, 0.5
  %v2525 = vadd.f32 %v2524, 0.5
  %v2526 = vmul.f32 %v2520, %v2226
  %v2527 = vmul.f32 %v2516, %v2521
  %v2528 = vadd.f32 %v2526, %v2527
  %v2529 = vtanh.pop %v2528
  %v2530 = vmul.f32 %v2525, %v2529
  %s2531 = scalar_lea.vmem [#allocation3], 8
  %2532 = vst [vmem:[%s2531] sm:$0xff] %v2530
  %v2533 = vld [vmem:[#allocation4] sm:$0xff]
  %v2534 = vld [vmem:[#allocation4 + $0x8] sm:$0xff]
  %v2535 = vld [vmem:[#allocation4 + $0x10] sm:$0xff]
  %v2536 = vld [vmem:[#allocation4 + $0x18] sm:$0xff]
  %v2537 = vpack.c.bf16 %v2530, %v2530
  %v2538 = vld [vmem:[%s7] sm:$0xff]
  %v2539 = vld [vmem:[%s7 + $0x8] sm:$0xff]
  %v2540 = vld [vmem:[%s7 + $0x10] sm:$0xff]
  %v2541 = vld [vmem:[%s7 + $0x18] sm:$0xff]
  %v2542 = vld [vmem:[%s7 + $0x20] sm:$0xff]
  %v2543 = vld [vmem:[%s7 + $0x28] sm:$0xff]
  %v2544 = vld [vmem:[%s7 + $0x30] sm:$0xff]
  %v2545 = vld [vmem:[%s7 + $0x38] sm:$0xff]
  %v2546 = vld [vmem:[%s7 + $0x40] sm:$0xff]
  %v2547 = vld [vmem:[%s7 + $0x48] sm:$0xff]
  %v2548 = vld [vmem:[%s7 + $0x50] sm:$0xff]
  %v2549 = vld [vmem:[%s7 + $0x58] sm:$0xff]
  %v2550 = vld [vmem:[%s7 + $0x60] sm:$0xff]
  %v2551 = vld [vmem:[%s7 + $0x68] sm:$0xff]
  %v2552 = vld [vmem:[%s7 + $0x70] sm:$0xff]
  %v2553 = vld [vmem:[%s7 + $0x78] sm:$0xff]
  %v2554 = vld [vmem:[%s7 + $0x80] sm:$0xff]
  %v2555 = vld [vmem:[%s7 + $0x88] sm:$0xff]
  %v2556 = vld [vmem:[%s7 + $0x90] sm:$0xff]
  %v2557 = vld [vmem:[%s7 + $0x98] sm:$0xff]
  %v2558 = vld [vmem:[%s7 + $0xa0] sm:$0xff]
  %v2559 = vld [vmem:[%s7 + $0xa8] sm:$0xff]
  %v2560 = vld [vmem:[%s7 + $0xb0] sm:$0xff]
  %v2561 = vld [vmem:[%s7 + $0xb8] sm:$0xff]
  %v2562 = vld [vmem:[%s7 + $0xc0] sm:$0xff]
  %v2563 = vld [vmem:[%s7 + $0xc8] sm:$0xff]
  %v2564 = vld [vmem:[%s7 + $0xd0] sm:$0xff]
  %v2565 = vld [vmem:[%s7 + $0xd8] sm:$0xff]
  %v2566 = vld [vmem:[%s7 + $0xe0] sm:$0xff]
  %v2567 = vld [vmem:[%s7 + $0xe8] sm:$0xff]
  %v2568 = vld [vmem:[%s7 + $0xf0] sm:$0xff]
  %v2569 = vld [vmem:[%s7 + $0xf8] sm:$0xff]
  %v2602 = vunpack.c.l.b16 %v2538
  %v2603 = vunpack.c.h.b16 %v2538
  %v2604 = vunpack.c.l.b16 %v2539
  %v2605 = vunpack.c.h.b16 %v2539
  %v2606 = vunpack.c.l.b16 %v2540
  %v2607 = vunpack.c.h.b16 %v2540
  %v2608 = vunpack.c.l.b16 %v2541
  %v2609 = vunpack.c.h.b16 %v2541
  %v2610 = vunpack.c.l.b16 %v2542
  %v2611 = vunpack.c.h.b16 %v2542
  %v2612 = vunpack.c.l.b16 %v2543
  %v2613 = vunpack.c.h.b16 %v2543
  %v2614 = vunpack.c.l.b16 %v2544
  %v2615 = vunpack.c.h.b16 %v2544
  %v2616 = vunpack.c.l.b16 %v2545
  %v2617 = vunpack.c.h.b16 %v2545
  %v2618 = vunpack.c.l.b16 %v2546
  %v2619 = vunpack.c.h.b16 %v2546
  %v2620 = vunpack.c.l.b16 %v2547
  %v2621 = vunpack.c.h.b16 %v2547
  %v2622 = vunpack.c.l.b16 %v2548
  %v2623 = vunpack.c.h.b16 %v2548
  %v2624 = vunpack.c.l.b16 %v2549
  %v2625 = vunpack.c.h.b16 %v2549
  %v2626 = vunpack.c.l.b16 %v2550
  %v2627 = vunpack.c.h.b16 %v2550
  %v2628 = vunpack.c.l.b16 %v2551
  %v2629 = vunpack.c.h.b16 %v2551
  %v2630 = vunpack.c.l.b16 %v2552
  %v2631 = vunpack.c.h.b16 %v2552
  %v2632 = vunpack.c.l.b16 %v2553
  %v2633 = vunpack.c.h.b16 %v2553
  %v2634 = vunpack.c.l.b16 %v2554
  %v2635 = vunpack.c.h.b16 %v2554
  %v2636 = vunpack.c.l.b16 %v2555
  %v2637 = vunpack.c.h.b16 %v2555
  %v2638 = vunpack.c.l.b16 %v2556
  %v2639 = vunpack.c.h.b16 %v2556
  %v2640 = vunpack.c.l.b16 %v2557
  %v2641 = vunpack.c.h.b16 %v2557
  %v2642 = vunpack.c.l.b16 %v2558
  %v2643 = vunpack.c.h.b16 %v2558
  %v2644 = vunpack.c.l.b16 %v2559
  %v2645 = vunpack.c.h.b16 %v2559
  %v2646 = vunpack.c.l.b16 %v2560
  %v2647 = vunpack.c.h.b16 %v2560
  %v2648 = vunpack.c.l.b16 %v2561
  %v2649 = vunpack.c.h.b16 %v2561
  %v2650 = vunpack.c.l.b16 %v2562
  %v2651 = vunpack.c.h.b16 %v2562
  %v2652 = vunpack.c.l.b16 %v2563
  %v2653 = vunpack.c.h.b16 %v2563
  %v2654 = vunpack.c.l.b16 %v2564
  %v2655 = vunpack.c.h.b16 %v2564
  %v2656 = vunpack.c.l.b16 %v2565
  %v2657 = vunpack.c.h.b16 %v2565
  %v2658 = vunpack.c.l.b16 %v2566
  %v2659 = vunpack.c.h.b16 %v2566
  %v2660 = vunpack.c.l.b16 %v2567
  %v2661 = vunpack.c.h.b16 %v2567
  %v2662 = vunpack.c.l.b16 %v2568
  %v2663 = vunpack.c.h.b16 %v2568
  %v2664 = vunpack.c.l.b16 %v2569
  %v2665 = vunpack.c.h.b16 %v2569
  %v2666 = vpack.c.b16 %v2606, %v2602
  %v2667 = vpack.c.b16 %v2607, %v2603
  %v2668 = vpack.c.b16 %v2608, %v2604
  %v2669 = vpack.c.b16 %v2609, %v2605
  %v2670 = vpack.c.b16 %v2614, %v2610
  %v2671 = vpack.c.b16 %v2615, %v2611
  %v2672 = vpack.c.b16 %v2616, %v2612
  %v2673 = vpack.c.b16 %v2617, %v2613
  %v2674 = vpack.c.b16 %v2622, %v2618
  %v2675 = vpack.c.b16 %v2623, %v2619
  %v2676 = vpack.c.b16 %v2624, %v2620
  %v2677 = vpack.c.b16 %v2625, %v2621
  %v2678 = vpack.c.b16 %v2630, %v2626
  %v2679 = vpack.c.b16 %v2631, %v2627
  %v2680 = vpack.c.b16 %v2632, %v2628
  %v2681 = vpack.c.b16 %v2633, %v2629
  %v2682 = vpack.c.b16 %v2638, %v2634
  %v2683 = vpack.c.b16 %v2639, %v2635
  %v2684 = vpack.c.b16 %v2640, %v2636
  %v2685 = vpack.c.b16 %v2641, %v2637
  %v2686 = vpack.c.b16 %v2646, %v2642
  %v2687 = vpack.c.b16 %v2647, %v2643
  %v2688 = vpack.c.b16 %v2648, %v2644
  %v2689 = vpack.c.b16 %v2649, %v2645
  %v2690 = vpack.c.b16 %v2654, %v2650
  %v2691 = vpack.c.b16 %v2655, %v2651
  %v2692 = vpack.c.b16 %v2656, %v2652
  %v2693 = vpack.c.b16 %v2657, %v2653
  %v2694 = vpack.c.b16 %v2662, %v2658
  %v2695 = vpack.c.b16 %v2663, %v2659
  %v2696 = vpack.c.b16 %v2664, %v2660
  %v2697 = vpack.c.b16 %v2665, %v2661
  %2730 = vmatprep.subr.bf16.mxu0 %v2695
  %2731 = vmatpush1.bf16.msra.mxu0 %v2694
  %2732 = vmatprep.subr.bf16.mxu0 %v2691
  %2733 = vmatpush1.bf16.msra.mxu0 %v2690
  %2734 = vmatprep.subr.bf16.mxu0 %v2687
  %2735 = vmatpush1.bf16.msra.mxu0 %v2686
  %2736 = vmatprep.subr.bf16.mxu0 %v2683
  %2737 = vmatpush1.bf16.msra.mxu0 %v2682
  %2738 = vmatprep.subr.bf16.mxu0 %v2679
  %2739 = vmatpush1.bf16.msra.mxu0 %v2678
  %2740 = vmatprep.subr.bf16.mxu0 %v2675
  %2741 = vmatpush1.bf16.msra.mxu0 %v2674
  %2742 = vmatprep.subr.bf16.mxu0 %v2671
  %2743 = vmatpush1.bf16.msra.mxu0 %v2670
  %2744 = vmatprep.subr.bf16.mxu0 %v2667
  %2745 = vmatpush1.bf16.msra.mxu0 %v2666
  %2746 = vmatprep.subr.bf16.mxu0 0
  %2747 = vmatpush2.bf16.msra.mxu0 0
  %2748 = vmatprep.subr.bf16.mxu0 0
  %2749 = vmatpush2.bf16.msra.mxu0 0
  %2750 = vmatprep.subr.bf16.mxu0 0
  %2751 = vmatpush2.bf16.msra.mxu0 0
  %2752 = vmatprep.subr.bf16.mxu0 0
  %2753 = vmatpush2.bf16.msra.mxu0 0
  %2754 = vmatprep.subr.bf16.mxu0 0
  %2755 = vmatpush2.bf16.msra.mxu0 0
  %2756 = vmatprep.subr.bf16.mxu0 0
  %2757 = vmatpush2.bf16.msra.mxu0 0
  %2758 = vmatprep.subr.bf16.mxu0 0
  %2759 = vmatpush2.bf16.msra.mxu0 0
  %2760 = vmatprep.subr.bf16.mxu0 0
  %2761 = vmatpush2.bf16.msra.mxu0 0
  %2762 = vmatprep.mubr.bf16.mxu0 0
  %2763 = vmatmul.mubr.bf16.gmra.mxu0 %v2537
  %v2764 = vpop.f32.mrf.mxu0
  %v2765 = vadd.f32 0.0, %v2764
  %v2766 = vpop.f32.mrf.mxu0
  %v2767 = vadd.f32 0.0, %v2766
  %v2768 = vpop.f32.mrf.mxu0
  %v2769 = vpop.f32.mrf.mxu0
  %2770 = vdwg.mxu0
  %2771 = vmatprep.subr.bf16.mxu0 %v2697
  %2772 = vmatpush1.bf16.msra.mxu0 %v2696
  %2773 = vmatprep.subr.bf16.mxu0 %v2693
  %2774 = vmatpush1.bf16.msra.mxu0 %v2692
  %2775 = vmatprep.subr.bf16.mxu0 %v2689
  %2776 = vmatpush1.bf16.msra.mxu0 %v2688
  %2777 = vmatprep.subr.bf16.mxu0 %v2685
  %2778 = vmatpush1.bf16.msra.mxu0 %v2684
  %2779 = vmatprep.subr.bf16.mxu0 %v2681
  %2780 = vmatpush1.bf16.msra.mxu0 %v2680
  %2781 = vmatprep.subr.bf16.mxu0 %v2677
  %2782 = vmatpush1.bf16.msra.mxu0 %v2676
  %2783 = vmatprep.subr.bf16.mxu0 %v2673
  %2784 = vmatpush1.bf16.msra.mxu0 %v2672
  %2785 = vmatprep.subr.bf16.mxu0 %v2669
  %2786 = vmatpush1.bf16.msra.mxu0 %v2668
  %2787 = vmatprep.subr.bf16.mxu0 0
  %2788 = vmatpush2.bf16.msra.mxu0 0
  %2789 = vmatprep.subr.bf16.mxu0 0
  %2790 = vmatpush2.bf16.msra.mxu0 0
  %2791 = vmatprep.subr.bf16.mxu0 0
  %2792 = vmatpush2.bf16.msra.mxu0 0
  %2793 = vmatprep.subr.bf16.mxu0 0
  %2794 = vmatpush2.bf16.msra.mxu0 0
  %2795 = vmatprep.subr.bf16.mxu0 0
  %2796 = vmatpush2.bf16.msra.mxu0 0
  %2797 = vmatprep.subr.bf16.mxu0 0
  %2798 = vmatpush2.bf16.msra.mxu0 0
  %2799 = vmatprep.subr.bf16.mxu0 0
  %2800 = vmatpush2.bf16.msra.mxu0 0
  %2801 = vmatprep.subr.bf16.mxu0 0
  %2802 = vmatpush2.bf16.msra.mxu0 0
  %2803 = vmatprep.mubr.bf16.mxu0 0
  %2804 = vmatmul.mubr.bf16.gmra.mxu0 %v2537
  %v2805 = vpop.f32.mrf.mxu0
  %v2806 = vadd.f32 0.0, %v2805
  %v2807 = vpop.f32.mrf.mxu0
  %v2808 = vadd.f32 0.0, %v2807
  %v2809 = vpop.f32.mrf.mxu0
  %v2810 = vpop.f32.mrf.mxu0
  %2811 = vdwg.mxu0
  %v2812 = vadd.f32 %v2533, %v2765
  %v2813 = vadd.f32 %v2534, %v2767
  %v2814 = vadd.f32 %v2535, %v2806
  %v2815 = vadd.f32 %v2536, %v2808
  %v2816 = vmul.f32 %v2812, 0.5
  %v2817 = vtanh.pop %v2816
  %v2818 = vmul.f32 %v2817, 0.5
  %v2819 = vadd.f32 %v2818, 0.5
  %v2820 = vmul.f32 %v2813, 0.5
  %v2821 = vtanh.pop %v2820
  %v2822 = vmul.f32 %v2821, 0.5
  %v2823 = vadd.f32 %v2822, 0.5
  %v2824 = vtanh.pop %v2814
  %v2825 = vmul.f32 %v2815, 0.5
  %v2826 = vtanh.pop %v2825
  %v2827 = vmul.f32 %v2826, 0.5
  %v2828 = vadd.f32 %v2827, 0.5
  %v2829 = vmul.f32 %v2823, %v2528
  %v2830 = vmul.f32 %v2819, %v2824
  %v2831 = vadd.f32 %v2829, %v2830
  %v2832 = vtanh.pop %v2831
  %v2833 = vmul.f32 %v2828, %v2832
  %s2834 = scalar_lea.vmem [#allocation3], 16
  %2835 = vst [vmem:[%s2834] sm:$0xff] %v2833
  %v2836 = vld [vmem:[#allocation4] sm:$0xff]
  %v2837 = vld [vmem:[#allocation4 + $0x8] sm:$0xff]
  %v2838 = vld [vmem:[#allocation4 + $0x10] sm:$0xff]
  %v2839 = vld [vmem:[#allocation4 + $0x18] sm:$0xff]
  %v2840 = vpack.c.bf16 %v2833, %v2833
  %v2841 = vld [vmem:[%s7] sm:$0xff]
  %v2842 = vld [vmem:[%s7 + $0x8] sm:$0xff]
  %v2843 = vld [vmem:[%s7 + $0x10] sm:$0xff]
  %v2844 = vld [vmem:[%s7 + $0x18] sm:$0xff]
  %v2845 = vld [vmem:[%s7 + $0x20] sm:$0xff]
  %v2846 = vld [vmem:[%s7 + $0x28] sm:$0xff]
  %v2847 = vld [vmem:[%s7 + $0x30] sm:$0xff]
  %v2848 = vld [vmem:[%s7 + $0x38] sm:$0xff]
  %v2849 = vld [vmem:[%s7 + $0x40] sm:$0xff]
  %v2850 = vld [vmem:[%s7 + $0x48] sm:$0xff]
  %v2851 = vld [vmem:[%s7 + $0x50] sm:$0xff]
  %v2852 = vld [vmem:[%s7 + $0x58] sm:$0xff]
  %v2853 = vld [vmem:[%s7 + $0x60] sm:$0xff]
  %v2854 = vld [vmem:[%s7 + $0x68] sm:$0xff]
  %v2855 = vld [vmem:[%s7 + $0x70] sm:$0xff]
  %v2856 = vld [vmem:[%s7 + $0x78] sm:$0xff]
  %v2857 = vld [vmem:[%s7 + $0x80] sm:$0xff]
  %v2858 = vld [vmem:[%s7 + $0x88] sm:$0xff]
  %v2859 = vld [vmem:[%s7 + $0x90] sm:$0xff]
  %v2860 = vld [vmem:[%s7 + $0x98] sm:$0xff]
  %v2861 = vld [vmem:[%s7 + $0xa0] sm:$0xff]
  %v2862 = vld [vmem:[%s7 + $0xa8] sm:$0xff]
  %v2863 = vld [vmem:[%s7 + $0xb0] sm:$0xff]
  %v2864 = vld [vmem:[%s7 + $0xb8] sm:$0xff]
  %v2865 = vld [vmem:[%s7 + $0xc0] sm:$0xff]
  %v2866 = vld [vmem:[%s7 + $0xc8] sm:$0xff]
  %v2867 = vld [vmem:[%s7 + $0xd0] sm:$0xff]
  %v2868 = vld [vmem:[%s7 + $0xd8] sm:$0xff]
  %v2869 = vld [vmem:[%s7 + $0xe0] sm:$0xff]
  %v2870 = vld [vmem:[%s7 + $0xe8] sm:$0xff]
  %v2871 = vld [vmem:[%s7 + $0xf0] sm:$0xff]
  %v2872 = vld [vmem:[%s7 + $0xf8] sm:$0xff]
  %v2905 = vunpack.c.l.b16 %v2841
  %v2906 = vunpack.c.h.b16 %v2841
  %v2907 = vunpack.c.l.b16 %v2842
  %v2908 = vunpack.c.h.b16 %v2842
  %v2909 = vunpack.c.l.b16 %v2843
  %v2910 = vunpack.c.h.b16 %v2843
  %v2911 = vunpack.c.l.b16 %v2844
  %v2912 = vunpack.c.h.b16 %v2844
  %v2913 = vunpack.c.l.b16 %v2845
  %v2914 = vunpack.c.h.b16 %v2845
  %v2915 = vunpack.c.l.b16 %v2846
  %v2916 = vunpack.c.h.b16 %v2846
  %v2917 = vunpack.c.l.b16 %v2847
  %v2918 = vunpack.c.h.b16 %v2847
  %v2919 = vunpack.c.l.b16 %v2848
  %v2920 = vunpack.c.h.b16 %v2848
  %v2921 = vunpack.c.l.b16 %v2849
  %v2922 = vunpack.c.h.b16 %v2849
  %v2923 = vunpack.c.l.b16 %v2850
  %v2924 = vunpack.c.h.b16 %v2850
  %v2925 = vunpack.c.l.b16 %v2851
  %v2926 = vunpack.c.h.b16 %v2851
  %v2927 = vunpack.c.l.b16 %v2852
  %v2928 = vunpack.c.h.b16 %v2852
  %v2929 = vunpack.c.l.b16 %v2853
  %v2930 = vunpack.c.h.b16 %v2853
  %v2931 = vunpack.c.l.b16 %v2854
  %v2932 = vunpack.c.h.b16 %v2854
  %v2933 = vunpack.c.l.b16 %v2855
  %v2934 = vunpack.c.h.b16 %v2855
  %v2935 = vunpack.c.l.b16 %v2856
  %v2936 = vunpack.c.h.b16 %v2856
  %v2937 = vunpack.c.l.b16 %v2857
  %v2938 = vunpack.c.h.b16 %v2857
  %v2939 = vunpack.c.l.b16 %v2858
  %v2940 = vunpack.c.h.b16 %v2858
  %v2941 = vunpack.c.l.b16 %v2859
  %v2942 = vunpack.c.h.b16 %v2859
  %v2943 = vunpack.c.l.b16 %v2860
  %v2944 = vunpack.c.h.b16 %v2860
  %v2945 = vunpack.c.l.b16 %v2861
  %v2946 = vunpack.c.h.b16 %v2861
  %v2947 = vunpack.c.l.b16 %v2862
  %v2948 = vunpack.c.h.b16 %v2862
  %v2949 = vunpack.c.l.b16 %v2863
  %v2950 = vunpack.c.h.b16 %v2863
  %v2951 = vunpack.c.l.b16 %v2864
  %v2952 = vunpack.c.h.b16 %v2864
  %v2953 = vunpack.c.l.b16 %v2865
  %v2954 = vunpack.c.h.b16 %v2865
  %v2955 = vunpack.c.l.b16 %v2866
  %v2956 = vunpack.c.h.b16 %v2866
  %v2957 = vunpack.c.l.b16 %v2867
  %v2958 = vunpack.c.h.b16 %v2867
  %v2959 = vunpack.c.l.b16 %v2868
  %v2960 = vunpack.c.h.b16 %v2868
  %v2961 = vunpack.c.l.b16 %v2869
  %v2962 = vunpack.c.h.b16 %v2869
  %v2963 = vunpack.c.l.b16 %v2870
  %v2964 = vunpack.c.h.b16 %v2870
  %v2965 = vunpack.c.l.b16 %v2871
  %v2966 = vunpack.c.h.b16 %v2871
  %v2967 = vunpack.c.l.b16 %v2872
  %v2968 = vunpack.c.h.b16 %v2872
  %v2969 = vpack.c.b16 %v2909, %v2905
  %v2970 = vpack.c.b16 %v2910, %v2906
  %v2971 = vpack.c.b16 %v2911, %v2907
  %v2972 = vpack.c.b16 %v2912, %v2908
  %v2973 = vpack.c.b16 %v2917, %v2913
  %v2974 = vpack.c.b16 %v2918, %v2914
  %v2975 = vpack.c.b16 %v2919, %v2915
  %v2976 = vpack.c.b16 %v2920, %v2916
  %v2977 = vpack.c.b16 %v2925, %v2921
  %v2978 = vpack.c.b16 %v2926, %v2922
  %v2979 = vpack.c.b16 %v2927, %v2923
  %v2980 = vpack.c.b16 %v2928, %v2924
  %v2981 = vpack.c.b16 %v2933, %v2929
  %v2982 = vpack.c.b16 %v2934, %v2930
  %v2983 = vpack.c.b16 %v2935, %v2931
  %v2984 = vpack.c.b16 %v2936, %v2932
  %v2985 = vpack.c.b16 %v2941, %v2937
  %v2986 = vpack.c.b16 %v2942, %v2938
  %v2987 = vpack.c.b16 %v2943, %v2939
  %v2988 = vpack.c.b16 %v2944, %v2940
  %v2989 = vpack.c.b16 %v2949, %v2945
  %v2990 = vpack.c.b16 %v2950, %v2946
  %v2991 = vpack.c.b16 %v2951, %v2947
  %v2992 = vpack.c.b16 %v2952, %v2948
  %v2993 = vpack.c.b16 %v2957, %v2953
  %v2994 = vpack.c.b16 %v2958, %v2954
  %v2995 = vpack.c.b16 %v2959, %v2955
  %v2996 = vpack.c.b16 %v2960, %v2956
  %v2997 = vpack.c.b16 %v2965, %v2961
  %v2998 = vpack.c.b16 %v2966, %v2962
  %v2999 = vpack.c.b16 %v2967, %v2963
  %v3000 = vpack.c.b16 %v2968, %v2964
  %3033 = vmatprep.subr.bf16.mxu0 %v2998
  %3034 = vmatpush1.bf16.msra.mxu0 %v2997
  %3035 = vmatprep.subr.bf16.mxu0 %v2994
  %3036 = vmatpush1.bf16.msra.mxu0 %v2993
  %3037 = vmatprep.subr.bf16.mxu0 %v2990
  %3038 = vmatpush1.bf16.msra.mxu0 %v2989
  %3039 = vmatprep.subr.bf16.mxu0 %v2986
  %3040 = vmatpush1.bf16.msra.mxu0 %v2985
  %3041 = vmatprep.subr.bf16.mxu0 %v2982
  %3042 = vmatpush1.bf16.msra.mxu0 %v2981
  %3043 = vmatprep.subr.bf16.mxu0 %v2978
  %3044 = vmatpush1.bf16.msra.mxu0 %v2977
  %3045 = vmatprep.subr.bf16.mxu0 %v2974
  %3046 = vmatpush1.bf16.msra.mxu0 %v2973
  %3047 = vmatprep.subr.bf16.mxu0 %v2970
  %3048 = vmatpush1.bf16.msra.mxu0 %v2969
  %3049 = vmatprep.subr.bf16.mxu0 0
  %3050 = vmatpush2.bf16.msra.mxu0 0
  %3051 = vmatprep.subr.bf16.mxu0 0
  %3052 = vmatpush2.bf16.msra.mxu0 0
  %3053 = vmatprep.subr.bf16.mxu0 0
  %3054 = vmatpush2.bf16.msra.mxu0 0
  %3055 = vmatprep.subr.bf16.mxu0 0
  %3056 = vmatpush2.bf16.msra.mxu0 0
  %3057 = vmatprep.subr.bf16.mxu0 0
  %3058 = vmatpush2.bf16.msra.mxu0 0
  %3059 = vmatprep.subr.bf16.mxu0 0
  %3060 = vmatpush2.bf16.msra.mxu0 0
  %3061 = vmatprep.subr.bf16.mxu0 0
  %3062 = vmatpush2.bf16.msra.mxu0 0
  %3063 = vmatprep.subr.bf16.mxu0 0
  %3064 = vmatpush2.bf16.msra.mxu0 0
  %3065 = vmatprep.mubr.bf16.mxu0 0
  %3066 = vmatmul.mubr.bf16.gmra.mxu0 %v2840
  %v3067 = vpop.f32.mrf.mxu0
  %v3068 = vadd.f32 0.0, %v3067
  %v3069 = vpop.f32.mrf.mxu0
  %v3070 = vadd.f32 0.0, %v3069
  %v3071 = vpop.f32.mrf.mxu0
  %v3072 = vpop.f32.mrf.mxu0
  %3073 = vdwg.mxu0
  %3074 = vmatprep.subr.bf16.mxu0 %v3000
  %3075 = vmatpush1.bf16.msra.mxu0 %v2999
  %3076 = vmatprep.subr.bf16.mxu0 %v2996
  %3077 = vmatpush1.bf16.msra.mxu0 %v2995
  %3078 = vmatprep.subr.bf16.mxu0 %v2992
  %3079 = vmatpush1.bf16.msra.mxu0 %v2991
  %3080 = vmatprep.subr.bf16.mxu0 %v2988
  %3081 = vmatpush1.bf16.msra.mxu0 %v2987
  %3082 = vmatprep.subr.bf16.mxu0 %v2984
  %3083 = vmatpush1.bf16.msra.mxu0 %v2983
  %3084 = vmatprep.subr.bf16.mxu0 %v2980
  %3085 = vmatpush1.bf16.msra.mxu0 %v2979
  %3086 = vmatprep.subr.bf16.mxu0 %v2976
  %3087 = vmatpush1.bf16.msra.mxu0 %v2975
  %3088 = vmatprep.subr.bf16.mxu0 %v2972
  %3089 = vmatpush1.bf16.msra.mxu0 %v2971
  %3090 = vmatprep.subr.bf16.mxu0 0
  %3091 = vmatpush2.bf16.msra.mxu0 0
  %3092 = vmatprep.subr.bf16.mxu0 0
  %3093 = vmatpush2.bf16.msra.mxu0 0
  %3094 = vmatprep.subr.bf16.mxu0 0
  %3095 = vmatpush2.bf16.msra.mxu0 0
  %3096 = vmatprep.subr.bf16.mxu0 0
  %3097 = vmatpush2.bf16.msra.mxu0 0
  %3098 = vmatprep.subr.bf16.mxu0 0
  %3099 = vmatpush2.bf16.msra.mxu0 0
  %3100 = vmatprep.subr.bf16.mxu0 0
  %3101 = vmatpush2.bf16.msra.mxu0 0
  %3102 = vmatprep.subr.bf16.mxu0 0
  %3103 = vmatpush2.bf16.msra.mxu0 0
  %3104 = vmatprep.subr.bf16.mxu0 0
  %3105 = vmatpush2.bf16.msra.mxu0 0
  %3106 = vmatprep.mubr.bf16.mxu0 0
  %3107 = vmatmul.mubr.bf16.gmra.mxu0 %v2840
  %v3108 = vpop.f32.mrf.mxu0
  %v3109 = vadd.f32 0.0, %v3108
  %v3110 = vpop.f32.mrf.mxu0
  %v3111 = vadd.f32 0.0, %v3110
  %v3112 = vpop.f32.mrf.mxu0
  %v3113 = vpop.f32.mrf.mxu0
  %3114 = vdwg.mxu0
  %v3115 = vadd.f32 %v2836, %v3068
  %v3116 = vadd.f32 %v2837, %v3070
  %v3117 = vadd.f32 %v2838, %v3109
  %v3118 = vadd.f32 %v2839, %v3111
  %v3119 = vmul.f32 %v3115, 0.5
  %v3120 = vtanh.pop %v3119
  %v3121 = vmul.f32 %v3120, 0.5
  %v3122 = vadd.f32 %v3121, 0.5
  %v3123 = vmul.f32 %v3116, 0.5
  %v3124 = vtanh.pop %v3123
  %v3125 = vmul.f32 %v3124, 0.5
  %v3126 = vadd.f32 %v3125, 0.5
  %v3127 = vtanh.pop %v3117
  %v3128 = vmul.f32 %v3118, 0.5
  %v3129 = vtanh.pop %v3128
  %v3130 = vmul.f32 %v3129, 0.5
  %v3131 = vadd.f32 %v3130, 0.5
  %v3132 = vmul.f32 %v3126, %v2831
  %v3133 = vmul.f32 %v3122, %v3127
  %v3134 = vadd.f32 %v3132, %v3133
  %v3135 = vtanh.pop %v3134
  %v3136 = vmul.f32 %v3131, %v3135
  %s3137 = scalar_lea.vmem [#allocation3], 24
  %3138 = vst [vmem:[%s3137] sm:$0xff] %v3136
  %v3139 = vld [vmem:[#allocation4] sm:$0xff]
  %v3140 = vld [vmem:[#allocation4 + $0x8] sm:$0xff]
  %v3141 = vld [vmem:[#allocation4 + $0x10] sm:$0xff]
  %v3142 = vld [vmem:[#allocation4 + $0x18] sm:$0xff]
  %v3143 = vpack.c.bf16 %v3136, %v3136
  %v3144 = vld [vmem:[%s7] sm:$0xff]
  %v3145 = vld [vmem:[%s7 + $0x8] sm:$0xff]
  %v3146 = vld [vmem:[%s7 + $0x10] sm:$0xff]
  %v3147 = vld [vmem:[%s7 + $0x18] sm:$0xff]
  %v3148 = vld [vmem:[%s7 + $0x20] sm:$0xff]
  %v3149 = vld [vmem:[%s7 + $0x28] sm:$0xff]
  %v3150 = vld [vmem:[%s7 + $0x30] sm:$0xff]
  %v3151 = vld [vmem:[%s7 + $0x38] sm:$0xff]
  %v3152 = vld [vmem:[%s7 + $0x40] sm:$0xff]
  %v3153 = vld [vmem:[%s7 + $0x48] sm:$0xff]
  %v3154 = vld [vmem:[%s7 + $0x50] sm:$0xff]
  %v3155 = vld [vmem:[%s7 + $0x58] sm:$0xff]
  %v3156 = vld [vmem:[%s7 + $0x60] sm:$0xff]
  %v3157 = vld [vmem:[%s7 + $0x68] sm:$0xff]
  %v3158 = vld [vmem:[%s7 + $0x70] sm:$0xff]
  %v3159 = vld [vmem:[%s7 + $0x78] sm:$0xff]
  %v3160 = vld [vmem:[%s7 + $0x80] sm:$0xff]
  %v3161 = vld [vmem:[%s7 + $0x88] sm:$0xff]
  %v3162 = vld [vmem:[%s7 + $0x90] sm:$0xff]
  %v3163 = vld [vmem:[%s7 + $0x98] sm:$0xff]
  %v3164 = vld [vmem:[%s7 + $0xa0] sm:$0xff]
  %v3165 = vld [vmem:[%s7 + $0xa8] sm:$0xff]
  %v3166 = vld [vmem:[%s7 + $0xb0] sm:$0xff]
  %v3167 = vld [vmem:[%s7 + $0xb8] sm:$0xff]
  %v3168 = vld [vmem:[%s7 + $0xc0] sm:$0xff]
  %v3169 = vld [vmem:[%s7 + $0xc8] sm:$0xff]
  %v3170 = vld [vmem:[%s7 + $0xd0] sm:$0xff]
  %v3171 = vld [vmem:[%s7 + $0xd8] sm:$0xff]
  %v3172 = vld [vmem:[%s7 + $0xe0] sm:$0xff]
  %v3173 = vld [vmem:[%s7 + $0xe8] sm:$0xff]
  %v3174 = vld [vmem:[%s7 + $0xf0] sm:$0xff]
  %v3175 = vld [vmem:[%s7 + $0xf8] sm:$0xff]
  %v3208 = vunpack.c.l.b16 %v3144
  %v3209 = vunpack.c.h.b16 %v3144
  %v3210 = vunpack.c.l.b16 %v3145
  %v3211 = vunpack.c.h.b16 %v3145
  %v3212 = vunpack.c.l.b16 %v3146
  %v3213 = vunpack.c.h.b16 %v3146
  %v3214 = vunpack.c.l.b16 %v3147
  %v3215 = vunpack.c.h.b16 %v3147
  %v3216 = vunpack.c.l.b16 %v3148
  %v3217 = vunpack.c.h.b16 %v3148
  %v3218 = vunpack.c.l.b16 %v3149
  %v3219 = vunpack.c.h.b16 %v3149
  %v3220 = vunpack.c.l.b16 %v3150
  %v3221 = vunpack.c.h.b16 %v3150
  %v3222 = vunpack.c.l.b16 %v3151
  %v3223 = vunpack.c.h.b16 %v3151
  %v3224 = vunpack.c.l.b16 %v3152
  %v3225 = vunpack.c.h.b16 %v3152
  %v3226 = vunpack.c.l.b16 %v3153
  %v3227 = vunpack.c.h.b16 %v3153
  %v3228 = vunpack.c.l.b16 %v3154
  %v3229 = vunpack.c.h.b16 %v3154
  %v3230 = vunpack.c.l.b16 %v3155
  %v3231 = vunpack.c.h.b16 %v3155
  %v3232 = vunpack.c.l.b16 %v3156
  %v3233 = vunpack.c.h.b16 %v3156
  %v3234 = vunpack.c.l.b16 %v3157
  %v3235 = vunpack.c.h.b16 %v3157
  %v3236 = vunpack.c.l.b16 %v3158
  %v3237 = vunpack.c.h.b16 %v3158
  %v3238 = vunpack.c.l.b16 %v3159
  %v3239 = vunpack.c.h.b16 %v3159
  %v3240 = vunpack.c.l.b16 %v3160
  %v3241 = vunpack.c.h.b16 %v3160
  %v3242 = vunpack.c.l.b16 %v3161
  %v3243 = vunpack.c.h.b16 %v3161
  %v3244 = vunpack.c.l.b16 %v3162
  %v3245 = vunpack.c.h.b16 %v3162
  %v3246 = vunpack.c.l.b16 %v3163
  %v3247 = vunpack.c.h.b16 %v3163
  %v3248 = vunpack.c.l.b16 %v3164
  %v3249 = vunpack.c.h.b16 %v3164
  %v3250 = vunpack.c.l.b16 %v3165
  %v3251 = vunpack.c.h.b16 %v3165
  %v3252 = vunpack.c.l.b16 %v3166
  %v3253 = vunpack.c.h.b16 %v3166
  %v3254 = vunpack.c.l.b16 %v3167
  %v3255 = vunpack.c.h.b16 %v3167
  %v3256 = vunpack.c.l.b16 %v3168
  %v3257 = vunpack.c.h.b16 %v3168
  %v3258 = vunpack.c.l.b16 %v3169
  %v3259 = vunpack.c.h.b16 %v3169
  %v3260 = vunpack.c.l.b16 %v3170
  %v3261 = vunpack.c.h.b16 %v3170
  %v3262 = vunpack.c.l.b16 %v3171
  %v3263 = vunpack.c.h.b16 %v3171
  %v3264 = vunpack.c.l.b16 %v3172
  %v3265 = vunpack.c.h.b16 %v3172
  %v3266 = vunpack.c.l.b16 %v3173
  %v3267 = vunpack.c.h.b16 %v3173
  %v3268 = vunpack.c.l.b16 %v3174
  %v3269 = vunpack.c.h.b16 %v3174
  %v3270 = vunpack.c.l.b16 %v3175
  %v3271 = vunpack.c.h.b16 %v3175
  %v3272 = vpack.c.b16 %v3212, %v3208
  %v3273 = vpack.c.b16 %v3213, %v3209
  %v3274 = vpack.c.b16 %v3214, %v3210
  %v3275 = vpack.c.b16 %v3215, %v3211
  %v3276 = vpack.c.b16 %v3220, %v3216
  %v3277 = vpack.c.b16 %v3221, %v3217
  %v3278 = vpack.c.b16 %v3222, %v3218
  %v3279 = vpack.c.b16 %v3223, %v3219
  %v3280 = vpack.c.b16 %v3228, %v3224
  %v3281 = vpack.c.b16 %v3229, %v3225
  %v3282 = vpack.c.b16 %v3230, %v3226
  %v3283 = vpack.c.b16 %v3231, %v3227
  %v3284 = vpack.c.b16 %v3236, %v3232
  %v3285 = vpack.c.b16 %v3237, %v3233
  %v3286 = vpack.c.b16 %v3238, %v3234
  %v3287 = vpack.c.b16 %v3239, %v3235
  %v3288 = vpack.c.b16 %v3244, %v3240
  %v3289 = vpack.c.b16 %v3245, %v3241
  %v3290 = vpack.c.b16 %v3246, %v3242
  %v3291 = vpack.c.b16 %v3247, %v3243
  %v3292 = vpack.c.b16 %v3252, %v3248
  %v3293 = vpack.c.b16 %v3253, %v3249
  %v3294 = vpack.c.b16 %v3254, %v3250
  %v3295 = vpack.c.b16 %v3255, %v3251
  %v3296 = vpack.c.b16 %v3260, %v3256
  %v3297 = vpack.c.b16 %v3261, %v3257
  %v3298 = vpack.c.b16 %v3262, %v3258
  %v3299 = vpack.c.b16 %v3263, %v3259
  %v3300 = vpack.c.b16 %v3268, %v3264
  %v3301 = vpack.c.b16 %v3269, %v3265
  %v3302 = vpack.c.b16 %v3270, %v3266
  %v3303 = vpack.c.b16 %v3271, %v3267
  %3336 = vmatprep.subr.bf16.mxu0 %v3301
  %3337 = vmatpush1.bf16.msra.mxu0 %v3300
  %3338 = vmatprep.subr.bf16.mxu0 %v3297
  %3339 = vmatpush1.bf16.msra.mxu0 %v3296
  %3340 = vmatprep.subr.bf16.mxu0 %v3293
  %3341 = vmatpush1.bf16.msra.mxu0 %v3292
  %3342 = vmatprep.subr.bf16.mxu0 %v3289
  %3343 = vmatpush1.bf16.msra.mxu0 %v3288
  %3344 = vmatprep.subr.bf16.mxu0 %v3285
  %3345 = vmatpush1.bf16.msra.mxu0 %v3284
  %3346 = vmatprep.subr.bf16.mxu0 %v3281
  %3347 = vmatpush1.bf16.msra.mxu0 %v3280
  %3348 = vmatprep.subr.bf16.mxu0 %v3277
  %3349 = vmatpush1.bf16.msra.mxu0 %v3276
  %3350 = vmatprep.subr.bf16.mxu0 %v3273
  %3351 = vmatpush1.bf16.msra.mxu0 %v3272
  %3352 = vmatprep.subr.bf16.mxu0 0
  %3353 = vmatpush2.bf16.msra.mxu0 0
  %3354 = vmatprep.subr.bf16.mxu0 0
  %3355 = vmatpush2.bf16.msra.mxu0 0
  %3356 = vmatprep.subr.bf16.mxu0 0
  %3357 = vmatpush2.bf16.msra.mxu0 0
  %3358 = vmatprep.subr.bf16.mxu0 0
  %3359 = vmatpush2.bf16.msra.mxu0 0
  %3360 = vmatprep.subr.bf16.mxu0 0
  %3361 = vmatpush2.bf16.msra.mxu0 0
  %3362 = vmatprep.subr.bf16.mxu0 0
  %3363 = vmatpush2.bf16.msra.mxu0 0
  %3364 = vmatprep.subr.bf16.mxu0 0
  %3365 = vmatpush2.bf16.msra.mxu0 0
  %3366 = vmatprep.subr.bf16.mxu0 0
  %3367 = vmatpush2.bf16.msra.mxu0 0
  %3368 = vmatprep.mubr.bf16.mxu0 0
  %3369 = vmatmul.mubr.bf16.gmra.mxu0 %v3143
  %v3370 = vpop.f32.mrf.mxu0
  %v3371 = vadd.f32 0.0, %v3370
  %v3372 = vpop.f32.mrf.mxu0
  %v3373 = vadd.f32 0.0, %v3372
  %v3374 = vpop.f32.mrf.mxu0
  %v3375 = vpop.f32.mrf.mxu0
  %3376 = vdwg.mxu0
  %3377 = vmatprep.subr.bf16.mxu0 %v3303
  %3378 = vmatpush1.bf16.msra.mxu0 %v3302
  %3379 = vmatprep.subr.bf16.mxu0 %v3299
  %3380 = vmatpush1.bf16.msra.mxu0 %v3298
  %3381 = vmatprep.subr.bf16.mxu0 %v3295
  %3382 = vmatpush1.bf16.msra.mxu0 %v3294
  %3383 = vmatprep.subr.bf16.mxu0 %v3291
  %3384 = vmatpush1.bf16.msra.mxu0 %v3290
  %3385 = vmatprep.subr.bf16.mxu0 %v3287
  %3386 = vmatpush1.bf16.msra.mxu0 %v3286
  %3387 = vmatprep.subr.bf16.mxu0 %v3283
  %3388 = vmatpush1.bf16.msra.mxu0 %v3282
  %3389 = vmatprep.subr.bf16.mxu0 %v3279
  %3390 = vmatpush1.bf16.msra.mxu0 %v3278
  %3391 = vmatprep.subr.bf16.mxu0 %v3275
  %3392 = vmatpush1.bf16.msra.mxu0 %v3274
  %3393 = vmatprep.subr.bf16.mxu0 0
  %3394 = vmatpush2.bf16.msra.mxu0 0
  %3395 = vmatprep.subr.bf16.mxu0 0
  %3396 = vmatpush2.bf16.msra.mxu0 0
  %3397 = vmatprep.subr.bf16.mxu0 0
  %3398 = vmatpush2.bf16.msra.mxu0 0
  %3399 = vmatprep.subr.bf16.mxu0 0
  %3400 = vmatpush2.bf16.msra.mxu0 0
  %3401 = vmatprep.subr.bf16.mxu0 0
  %3402 = vmatpush2.bf16.msra.mxu0 0
  %3403 = vmatprep.subr.bf16.mxu0 0
  %3404 = vmatpush2.bf16.msra.mxu0 0
  %3405 = vmatprep.subr.bf16.mxu0 0
  %3406 = vmatpush2.bf16.msra.mxu0 0
  %3407 = vmatprep.subr.bf16.mxu0 0
  %3408 = vmatpush2.bf16.msra.mxu0 0
  %3409 = vmatprep.mubr.bf16.mxu0 0
  %3410 = vmatmul.mubr.bf16.gmra.mxu0 %v3143
  %v3411 = vpop.f32.mrf.mxu0
  %v3412 = vadd.f32 0.0, %v3411
  %v3413 = vpop.f32.mrf.mxu0
  %v3414 = vadd.f32 0.0, %v3413
  %v3415 = vpop.f32.mrf.mxu0
  %v3416 = vpop.f32.mrf.mxu0
  %3417 = vdwg.mxu0
  %v3418 = vadd.f32 %v3139, %v3371
  %v3419 = vadd.f32 %v3140, %v3373
  %v3420 = vadd.f32 %v3141, %v3412
  %v3421 = vadd.f32 %v3142, %v3414
  %v3422 = vmul.f32 %v3418, 0.5
  %v3423 = vtanh.pop %v3422
  %v3424 = vmul.f32 %v3423, 0.5
  %v3425 = vadd.f32 %v3424, 0.5
  %v3426 = vmul.f32 %v3419, 0.5
  %v3427 = vtanh.pop %v3426
  %v3428 = vmul.f32 %v3427, 0.5
  %v3429 = vadd.f32 %v3428, 0.5
  %v3430 = vtanh.pop %v3420
  %v3431 = vmul.f32 %v3421, 0.5
  %v3432 = vtanh.pop %v3431
  %v3433 = vmul.f32 %v3432, 0.5
  %v3434 = vadd.f32 %v3433, 0.5
  %v3435 = vmul.f32 %v3429, %v3134
  %v3436 = vmul.f32 %v3425, %v3430
  %v3437 = vadd.f32 %v3435, %v3436
  %v3438 = vtanh.pop %v3437
  %v3439 = vmul.f32 %v3434, %v3438
  %s3440 = scalar_lea.vmem [#allocation3], 32
  %3441 = vst [vmem:[%s3440] sm:$0xff] %v3439
  %v3442 = vld [vmem:[#allocation4] sm:$0xff]
  %v3443 = vld [vmem:[#allocation4 + $0x8] sm:$0xff]
  %v3444 = vld [vmem:[#allocation4 + $0x10] sm:$0xff]
  %v3445 = vld [vmem:[#allocation4 + $0x18] sm:$0xff]
  %v3446 = vpack.c.bf16 %v3439, %v3439
  %v3447 = vld [vmem:[%s7] sm:$0xff]
  %v3448 = vld [vmem:[%s7 + $0x8] sm:$0xff]
  %v3449 = vld [vmem:[%s7 + $0x10] sm:$0xff]
  %v3450 = vld [vmem:[%s7 + $0x18] sm:$0xff]
  %v3451 = vld [vmem:[%s7 + $0x20] sm:$0xff]
  %v3452 = vld [vmem:[%s7 + $0x28] sm:$0xff]
  %v3453 = vld [vmem:[%s7 + $0x30] sm:$0xff]
  %v3454 = vld [vmem:[%s7 + $0x38] sm:$0xff]
  %v3455 = vld [vmem:[%s7 + $0x40] sm:$0xff]
  %v3456 = vld [vmem:[%s7 + $0x48] sm:$0xff]
  %v3457 = vld [vmem:[%s7 + $0x50] sm:$0xff]
  %v3458 = vld [vmem:[%s7 + $0x58] sm:$0xff]
  %v3459 = vld [vmem:[%s7 + $0x60] sm:$0xff]
  %v3460 = vld [vmem:[%s7 + $0x68] sm:$0xff]
  %v3461 = vld [vmem:[%s7 + $0x70] sm:$0xff]
  %v3462 = vld [vmem:[%s7 + $0x78] sm:$0xff]
  %v3463 = vld [vmem:[%s7 + $0x80] sm:$0xff]
  %v3464 = vld [vmem:[%s7 + $0x88] sm:$0xff]
  %v3465 = vld [vmem:[%s7 + $0x90] sm:$0xff]
  %v3466 = vld [vmem:[%s7 + $0x98] sm:$0xff]
  %v3467 = vld [vmem:[%s7 + $0xa0] sm:$0xff]
  %v3468 = vld [vmem:[%s7 + $0xa8] sm:$0xff]
  %v3469 = vld [vmem:[%s7 + $0xb0] sm:$0xff]
  %v3470 = vld [vmem:[%s7 + $0xb8] sm:$0xff]
  %v3471 = vld [vmem:[%s7 + $0xc0] sm:$0xff]
  %v3472 = vld [vmem:[%s7 + $0xc8] sm:$0xff]
  %v3473 = vld [vmem:[%s7 + $0xd0] sm:$0xff]
  %v3474 = vld [vmem:[%s7 + $0xd8] sm:$0xff]
  %v3475 = vld [vmem:[%s7 + $0xe0] sm:$0xff]
  %v3476 = vld [vmem:[%s7 + $0xe8] sm:$0xff]
  %v3477 = vld [vmem:[%s7 + $0xf0] sm:$0xff]
  %v3478 = vld [vmem:[%s7 + $0xf8] sm:$0xff]
  %v3511 = vunpack.c.l.b16 %v3447
  %v3512 = vunpack.c.h.b16 %v3447
  %v3513 = vunpack.c.l.b16 %v3448
  %v3514 = vunpack.c.h.b16 %v3448
  %v3515 = vunpack.c.l.b16 %v3449
  %v3516 = vunpack.c.h.b16 %v3449
  %v3517 = vunpack.c.l.b16 %v3450
  %v3518 = vunpack.c.h.b16 %v3450
  %v3519 = vunpack.c.l.b16 %v3451
  %v3520 = vunpack.c.h.b16 %v3451
  %v3521 = vunpack.c.l.b16 %v3452
  %v3522 = vunpack.c.h.b16 %v3452
  %v3523 = vunpack.c.l.b16 %v3453
  %v3524 = vunpack.c.h.b16 %v3453
  %v3525 = vunpack.c.l.b16 %v3454
  %v3526 = vunpack.c.h.b16 %v3454
  %v3527 = vunpack.c.l.b16 %v3455
  %v3528 = vunpack.c.h.b16 %v3455
  %v3529 = vunpack.c.l.b16 %v3456
  %v3530 = vunpack.c.h.b16 %v3456
  %v3531 = vunpack.c.l.b16 %v3457
  %v3532 = vunpack.c.h.b16 %v3457
  %v3533 = vunpack.c.l.b16 %v3458
  %v3534 = vunpack.c.h.b16 %v3458
  %v3535 = vunpack.c.l.b16 %v3459
  %v3536 = vunpack.c.h.b16 %v3459
  %v3537 = vunpack.c.l.b16 %v3460
  %v3538 = vunpack.c.h.b16 %v3460
  %v3539 = vunpack.c.l.b16 %v3461
  %v3540 = vunpack.c.h.b16 %v3461
  %v3541 = vunpack.c.l.b16 %v3462
  %v3542 = vunpack.c.h.b16 %v3462
  %v3543 = vunpack.c.l.b16 %v3463
  %v3544 = vunpack.c.h.b16 %v3463
  %v3545 = vunpack.c.l.b16 %v3464
  %v3546 = vunpack.c.h.b16 %v3464
  %v3547 = vunpack.c.l.b16 %v3465
  %v3548 = vunpack.c.h.b16 %v3465
  %v3549 = vunpack.c.l.b16 %v3466
  %v3550 = vunpack.c.h.b16 %v3466
  %v3551 = vunpack.c.l.b16 %v3467
  %v3552 = vunpack.c.h.b16 %v3467
  %v3553 = vunpack.c.l.b16 %v3468
  %v3554 = vunpack.c.h.b16 %v3468
  %v3555 = vunpack.c.l.b16 %v3469
  %v3556 = vunpack.c.h.b16 %v3469
  %v3557 = vunpack.c.l.b16 %v3470
  %v3558 = vunpack.c.h.b16 %v3470
  %v3559 = vunpack.c.l.b16 %v3471
  %v3560 = vunpack.c.h.b16 %v3471
  %v3561 = vunpack.c.l.b16 %v3472
  %v3562 = vunpack.c.h.b16 %v3472
  %v3563 = vunpack.c.l.b16 %v3473
  %v3564 = vunpack.c.h.b16 %v3473
  %v3565 = vunpack.c.l.b16 %v3474
  %v3566 = vunpack.c.h.b16 %v3474
  %v3567 = vunpack.c.l.b16 %v3475
  %v3568 = vunpack.c.h.b16 %v3475
  %v3569 = vunpack.c.l.b16 %v3476
  %v3570 = vunpack.c.h.b16 %v3476
  %v3571 = vunpack.c.l.b16 %v3477
  %v3572 = vunpack.c.h.b16 %v3477
  %v3573 = vunpack.c.l.b16 %v3478
  %v3574 = vunpack.c.h.b16 %v3478
  %v3575 = vpack.c.b16 %v3515, %v3511
  %v3576 = vpack.c.b16 %v3516, %v3512
  %v3577 = vpack.c.b16 %v3517, %v3513
  %v3578 = vpack.c.b16 %v3518, %v3514
  %v3579 = vpack.c.b16 %v3523, %v3519
  %v3580 = vpack.c.b16 %v3524, %v3520
  %v3581 = vpack.c.b16 %v3525, %v3521
  %v3582 = vpack.c.b16 %v3526, %v3522
  %v3583 = vpack.c.b16 %v3531, %v3527
  %v3584 = vpack.c.b16 %v3532, %v3528
  %v3585 = vpack.c.b16 %v3533, %v3529
  %v3586 = vpack.c.b16 %v3534, %v3530
  %v3587 = vpack.c.b16 %v3539, %v3535
  %v3588 = vpack.c.b16 %v3540, %v3536
  %v3589 = vpack.c.b16 %v3541, %v3537
  %v3590 = vpack.c.b16 %v3542, %v3538
  %v3591 = vpack.c.b16 %v3547, %v3543
  %v3592 = vpack.c.b16 %v3548, %v3544
  %v3593 = vpack.c.b16 %v3549, %v3545
  %v3594 = vpack.c.b16 %v3550, %v3546
  %v3595 = vpack.c.b16 %v3555, %v3551
  %v3596 = vpack.c.b16 %v3556, %v3552
  %v3597 = vpack.c.b16 %v3557, %v3553
  %v3598 = vpack.c.b16 %v3558, %v3554
  %v3599 = vpack.c.b16 %v3563, %v3559
  %v3600 = vpack.c.b16 %v3564, %v3560
  %v3601 = vpack.c.b16 %v3565, %v3561
  %v3602 = vpack.c.b16 %v3566, %v3562
  %v3603 = vpack.c.b16 %v3571, %v3567
  %v3604 = vpack.c.b16 %v3572, %v3568
  %v3605 = vpack.c.b16 %v3573, %v3569
  %v3606 = vpack.c.b16 %v3574, %v3570
  %3639 = vmatprep.subr.bf16.mxu0 %v3604
  %3640 = vmatpush1.bf16.msra.mxu0 %v3603
  %3641 = vmatprep.subr.bf16.mxu0 %v3600
  %3642 = vmatpush1.bf16.msra.mxu0 %v3599
  %3643 = vmatprep.subr.bf16.mxu0 %v3596
  %3644 = vmatpush1.bf16.msra.mxu0 %v3595
  %3645 = vmatprep.subr.bf16.mxu0 %v3592
  %3646 = vmatpush1.bf16.msra.mxu0 %v3591
  %3647 = vmatprep.subr.bf16.mxu0 %v3588
  %3648 = vmatpush1.bf16.msra.mxu0 %v3587
  %3649 = vmatprep.subr.bf16.mxu0 %v3584
  %3650 = vmatpush1.bf16.msra.mxu0 %v3583
  %3651 = vmatprep.subr.bf16.mxu0 %v3580
  %3652 = vmatpush1.bf16.msra.mxu0 %v3579
  %3653 = vmatprep.subr.bf16.mxu0 %v3576
  %3654 = vmatpush1.bf16.msra.mxu0 %v3575
  %3655 = vmatprep.subr.bf16.mxu0 0
  %3656 = vmatpush2.bf16.msra.mxu0 0
  %3657 = vmatprep.subr.bf16.mxu0 0
  %3658 = vmatpush2.bf16.msra.mxu0 0
  %3659 = vmatprep.subr.bf16.mxu0 0
  %3660 = vmatpush2.bf16.msra.mxu0 0
  %3661 = vmatprep.subr.bf16.mxu0 0
  %3662 = vmatpush2.bf16.msra.mxu0 0
  %3663 = vmatprep.subr.bf16.mxu0 0
  %3664 = vmatpush2.bf16.msra.mxu0 0
  %3665 = vmatprep.subr.bf16.mxu0 0
  %3666 = vmatpush2.bf16.msra.mxu0 0
  %3667 = vmatprep.subr.bf16.mxu0 0
  %3668 = vmatpush2.bf16.msra.mxu0 0
  %3669 = vmatprep.subr.bf16.mxu0 0
  %3670 = vmatpush2.bf16.msra.mxu0 0
  %3671 = vmatprep.mubr.bf16.mxu0 0
  %3672 = vmatmul.mubr.bf16.gmra.mxu0 %v3446
  %v3673 = vpop.f32.mrf.mxu0
  %v3674 = vadd.f32 0.0, %v3673
  %v3675 = vpop.f32.mrf.mxu0
  %v3676 = vadd.f32 0.0, %v3675
  %v3677 = vpop.f32.mrf.mxu0
  %v3678 = vpop.f32.mrf.mxu0
  %3679 = vdwg.mxu0
  %3680 = vmatprep.subr.bf16.mxu0 %v3606
  %3681 = vmatpush1.bf16.msra.mxu0 %v3605
  %3682 = vmatprep.subr.bf16.mxu0 %v3602
  %3683 = vmatpush1.bf16.msra.mxu0 %v3601
  %3684 = vmatprep.subr.bf16.mxu0 %v3598
  %3685 = vmatpush1.bf16.msra.mxu0 %v3597
  %3686 = vmatprep.subr.bf16.mxu0 %v3594
  %3687 = vmatpush1.bf16.msra.mxu0 %v3593
  %3688 = vmatprep.subr.bf16.mxu0 %v3590
  %3689 = vmatpush1.bf16.msra.mxu0 %v3589
  %3690 = vmatprep.subr.bf16.mxu0 %v3586
  %3691 = vmatpush1.bf16.msra.mxu0 %v3585
  %3692 = vmatprep.subr.bf16.mxu0 %v3582
  %3693 = vmatpush1.bf16.msra.mxu0 %v3581
  %3694 = vmatprep.subr.bf16.mxu0 %v3578
  %3695 = vmatpush1.bf16.msra.mxu0 %v3577
  %3696 = vmatprep.subr.bf16.mxu0 0
  %3697 = vmatpush2.bf16.msra.mxu0 0
  %3698 = vmatprep.subr.bf16.mxu0 0
  %3699 = vmatpush2.bf16.msra.mxu0 0
  %3700 = vmatprep.subr.bf16.mxu0 0
  %3701 = vmatpush2.bf16.msra.mxu0 0
  %3702 = vmatprep.subr.bf16.mxu0 0
  %3703 = vmatpush2.bf16.msra.mxu0 0
  %3704 = vmatprep.subr.bf16.mxu0 0
  %3705 = vmatpush2.bf16.msra.mxu0 0
  %3706 = vmatprep.subr.bf16.mxu0 0
  %3707 = vmatpush2.bf16.msra.mxu0 0
  %3708 = vmatprep.subr.bf16.mxu0 0
  %3709 = vmatpush2.bf16.msra.mxu0 0
  %3710 = vmatprep.subr.bf16.mxu0 0
  %3711 = vmatpush2.bf16.msra.mxu0 0
  %3712 = vmatprep.mubr.bf16.mxu0 0
  %3713 = vmatmul.mubr.bf16.gmra.mxu0 %v3446
  %v3714 = vpop.f32.mrf.mxu0
  %v3715 = vadd.f32 0.0, %v3714
  %v3716 = vpop.f32.mrf.mxu0
  %v3717 = vadd.f32 0.0, %v3716
  %v3718 = vpop.f32.mrf.mxu0
  %v3719 = vpop.f32.mrf.mxu0
  %3720 = vdwg.mxu0
  %v3721 = vadd.f32 %v3442, %v3674
  %v3722 = vadd.f32 %v3443, %v3676
  %v3723 = vadd.f32 %v3444, %v3715
  %v3724 = vadd.f32 %v3445, %v3717
  %v3725 = vmul.f32 %v3721, 0.5
  %v3726 = vtanh.pop %v3725
  %v3727 = vmul.f32 %v3726, 0.5
  %v3728 = vadd.f32 %v3727, 0.5
  %v3729 = vmul.f32 %v3722, 0.5
  %v3730 = vtanh.pop %v3729
  %v3731 = vmul.f32 %v3730, 0.5
  %v3732 = vadd.f32 %v3731, 0.5
  %v3733 = vtanh.pop %v3723
  %v3734 = vmul.f32 %v3724, 0.5
  %v3735 = vtanh.pop %v3734
  %v3736 = vmul.f32 %v3735, 0.5
  %v3737 = vadd.f32 %v3736, 0.5
  %v3738 = vmul.f32 %v3732, %v3437
  %v3739 = vmul.f32 %v3728, %v3733
  %v3740 = vadd.f32 %v3738, %v3739
  %v3741 = vtanh.pop %v3740
  %v3742 = vmul.f32 %v3737, %v3741
  %s3743 = scalar_lea.vmem [#allocation3], 40
  %3744 = vst [vmem:[%s3743] sm:$0xff] %v3742
  %v3745 = vld [vmem:[#allocation4] sm:$0xff]
  %v3746 = vld [vmem:[#allocation4 + $0x8] sm:$0xff]
  %v3747 = vld [vmem:[#allocation4 + $0x10] sm:$0xff]
  %v3748 = vld [vmem:[#allocation4 + $0x18] sm:$0xff]
  %v3749 = vpack.c.bf16 %v3742, %v3742
  %v3750 = vld [vmem:[%s7] sm:$0xff]
  %v3751 = vld [vmem:[%s7 + $0x8] sm:$0xff]
  %v3752 = vld [vmem:[%s7 + $0x10] sm:$0xff]
  %v3753 = vld [vmem:[%s7 + $0x18] sm:$0xff]
  %v3754 = vld [vmem:[%s7 + $0x20] sm:$0xff]
  %v3755 = vld [vmem:[%s7 + $0x28] sm:$0xff]
  %v3756 = vld [vmem:[%s7 + $0x30] sm:$0xff]
  %v3757 = vld [vmem:[%s7 + $0x38] sm:$0xff]
  %v3758 = vld [vmem:[%s7 + $0x40] sm:$0xff]
  %v3759 = vld [vmem:[%s7 + $0x48] sm:$0xff]
  %v3760 = vld [vmem:[%s7 + $0x50] sm:$0xff]
  %v3761 = vld [vmem:[%s7 + $0x58] sm:$0xff]
  %v3762 = vld [vmem:[%s7 + $0x60] sm:$0xff]
  %v3763 = vld [vmem:[%s7 + $0x68] sm:$0xff]
  %v3764 = vld [vmem:[%s7 + $0x70] sm:$0xff]
  %v3765 = vld [vmem:[%s7 + $0x78] sm:$0xff]
  %v3766 = vld [vmem:[%s7 + $0x80] sm:$0xff]
  %v3767 = vld [vmem:[%s7 + $0x88] sm:$0xff]
  %v3768 = vld [vmem:[%s7 + $0x90] sm:$0xff]
  %v3769 = vld [vmem:[%s7 + $0x98] sm:$0xff]
  %v3770 = vld [vmem:[%s7 + $0xa0] sm:$0xff]
  %v3771 = vld [vmem:[%s7 + $0xa8] sm:$0xff]
  %v3772 = vld [vmem:[%s7 + $0xb0] sm:$0xff]
  %v3773 = vld [vmem:[%s7 + $0xb8] sm:$0xff]
  %v3774 = vld [vmem:[%s7 + $0xc0] sm:$0xff]
  %v3775 = vld [vmem:[%s7 + $0xc8] sm:$0xff]
  %v3776 = vld [vmem:[%s7 + $0xd0] sm:$0xff]
  %v3777 = vld [vmem:[%s7 + $0xd8] sm:$0xff]
  %v3778 = vld [vmem:[%s7 + $0xe0] sm:$0xff]
  %v3779 = vld [vmem:[%s7 + $0xe8] sm:$0xff]
  %v3780 = vld [vmem:[%s7 + $0xf0] sm:$0xff]
  %v3781 = vld [vmem:[%s7 + $0xf8] sm:$0xff]
  %v3814 = vunpack.c.l.b16 %v3750
  %v3815 = vunpack.c.h.b16 %v3750
  %v3816 = vunpack.c.l.b16 %v3751
  %v3817 = vunpack.c.h.b16 %v3751
  %v3818 = vunpack.c.l.b16 %v3752
  %v3819 = vunpack.c.h.b16 %v3752
  %v3820 = vunpack.c.l.b16 %v3753
  %v3821 = vunpack.c.h.b16 %v3753
  %v3822 = vunpack.c.l.b16 %v3754
  %v3823 = vunpack.c.h.b16 %v3754
  %v3824 = vunpack.c.l.b16 %v3755
  %v3825 = vunpack.c.h.b16 %v3755
  %v3826 = vunpack.c.l.b16 %v3756
  %v3827 = vunpack.c.h.b16 %v3756
  %v3828 = vunpack.c.l.b16 %v3757
  %v3829 = vunpack.c.h.b16 %v3757
  %v3830 = vunpack.c.l.b16 %v3758
  %v3831 = vunpack.c.h.b16 %v3758
  %v3832 = vunpack.c.l.b16 %v3759
  %v3833 = vunpack.c.h.b16 %v3759
  %v3834 = vunpack.c.l.b16 %v3760
  %v3835 = vunpack.c.h.b16 %v3760
  %v3836 = vunpack.c.l.b16 %v3761
  %v3837 = vunpack.c.h.b16 %v3761
  %v3838 = vunpack.c.l.b16 %v3762
  %v3839 = vunpack.c.h.b16 %v3762
  %v3840 = vunpack.c.l.b16 %v3763
  %v3841 = vunpack.c.h.b16 %v3763
  %v3842 = vunpack.c.l.b16 %v3764
  %v3843 = vunpack.c.h.b16 %v3764
  %v3844 = vunpack.c.l.b16 %v3765
  %v3845 = vunpack.c.h.b16 %v3765
  %v3846 = vunpack.c.l.b16 %v3766
  %v3847 = vunpack.c.h.b16 %v3766
  %v3848 = vunpack.c.l.b16 %v3767
  %v3849 = vunpack.c.h.b16 %v3767
  %v3850 = vunpack.c.l.b16 %v3768
  %v3851 = vunpack.c.h.b16 %v3768
  %v3852 = vunpack.c.l.b16 %v3769
  %v3853 = vunpack.c.h.b16 %v3769
  %v3854 = vunpack.c.l.b16 %v3770
  %v3855 = vunpack.c.h.b16 %v3770
  %v3856 = vunpack.c.l.b16 %v3771
  %v3857 = vunpack.c.h.b16 %v3771
  %v3858 = vunpack.c.l.b16 %v3772
  %v3859 = vunpack.c.h.b16 %v3772
  %v3860 = vunpack.c.l.b16 %v3773
  %v3861 = vunpack.c.h.b16 %v3773
  %v3862 = vunpack.c.l.b16 %v3774
  %v3863 = vunpack.c.h.b16 %v3774
  %v3864 = vunpack.c.l.b16 %v3775
  %v3865 = vunpack.c.h.b16 %v3775
  %v3866 = vunpack.c.l.b16 %v3776
  %v3867 = vunpack.c.h.b16 %v3776
  %v3868 = vunpack.c.l.b16 %v3777
  %v3869 = vunpack.c.h.b16 %v3777
  %v3870 = vunpack.c.l.b16 %v3778
  %v3871 = vunpack.c.h.b16 %v3778
  %v3872 = vunpack.c.l.b16 %v3779
  %v3873 = vunpack.c.h.b16 %v3779
  %v3874 = vunpack.c.l.b16 %v3780
  %v3875 = vunpack.c.h.b16 %v3780
  %v3876 = vunpack.c.l.b16 %v3781
  %v3877 = vunpack.c.h.b16 %v3781
  %v3878 = vpack.c.b16 %v3818, %v3814
  %v3879 = vpack.c.b16 %v3819, %v3815
  %v3880 = vpack.c.b16 %v3820, %v3816
  %v3881 = vpack.c.b16 %v3821, %v3817
  %v3882 = vpack.c.b16 %v3826, %v3822
  %v3883 = vpack.c.b16 %v3827, %v3823
  %v3884 = vpack.c.b16 %v3828, %v3824
  %v3885 = vpack.c.b16 %v3829, %v3825
  %v3886 = vpack.c.b16 %v3834, %v3830
  %v3887 = vpack.c.b16 %v3835, %v3831
  %v3888 = vpack.c.b16 %v3836, %v3832
  %v3889 = vpack.c.b16 %v3837, %v3833
  %v3890 = vpack.c.b16 %v3842, %v3838
  %v3891 = vpack.c.b16 %v3843, %v3839
  %v3892 = vpack.c.b16 %v3844, %v3840
  %v3893 = vpack.c.b16 %v3845, %v3841
  %v3894 = vpack.c.b16 %v3850, %v3846
  %v3895 = vpack.c.b16 %v3851, %v3847
  %v3896 = vpack.c.b16 %v3852, %v3848
  %v3897 = vpack.c.b16 %v3853, %v3849
  %v3898 = vpack.c.b16 %v3858, %v3854
  %v3899 = vpack.c.b16 %v3859, %v3855
  %v3900 = vpack.c.b16 %v3860, %v3856
  %v3901 = vpack.c.b16 %v3861, %v3857
  %v3902 = vpack.c.b16 %v3866, %v3862
  %v3903 = vpack.c.b16 %v3867, %v3863
  %v3904 = vpack.c.b16 %v3868, %v3864
  %v3905 = vpack.c.b16 %v3869, %v3865
  %v3906 = vpack.c.b16 %v3874, %v3870
  %v3907 = vpack.c.b16 %v3875, %v3871
  %v3908 = vpack.c.b16 %v3876, %v3872
  %v3909 = vpack.c.b16 %v3877, %v3873
  %3942 = vmatprep.subr.bf16.mxu0 %v3907
  %3943 = vmatpush1.bf16.msra.mxu0 %v3906
  %3944 = vmatprep.subr.bf16.mxu0 %v3903
  %3945 = vmatpush1.bf16.msra.mxu0 %v3902
  %3946 = vmatprep.subr.bf16.mxu0 %v3899
  %3947 = vmatpush1.bf16.msra.mxu0 %v3898
  %3948 = vmatprep.subr.bf16.mxu0 %v3895
  %3949 = vmatpush1.bf16.msra.mxu0 %v3894
  %3950 = vmatprep.subr.bf16.mxu0 %v3891
  %3951 = vmatpush1.bf16.msra.mxu0 %v3890
  %3952 = vmatprep.subr.bf16.mxu0 %v3887
  %3953 = vmatpush1.bf16.msra.mxu0 %v3886
  %3954 = vmatprep.subr.bf16.mxu0 %v3883
  %3955 = vmatpush1.bf16.msra.mxu0 %v3882
  %3956 = vmatprep.subr.bf16.mxu0 %v3879
  %3957 = vmatpush1.bf16.msra.mxu0 %v3878
  %3958 = vmatprep.subr.bf16.mxu0 0
  %3959 = vmatpush2.bf16.msra.mxu0 0
  %3960 = vmatprep.subr.bf16.mxu0 0
  %3961 = vmatpush2.bf16.msra.mxu0 0
  %3962 = vmatprep.subr.bf16.mxu0 0
  %3963 = vmatpush2.bf16.msra.mxu0 0
  %3964 = vmatprep.subr.bf16.mxu0 0
  %3965 = vmatpush2.bf16.msra.mxu0 0
  %3966 = vmatprep.subr.bf16.mxu0 0
  %3967 = vmatpush2.bf16.msra.mxu0 0
  %3968 = vmatprep.subr.bf16.mxu0 0
  %3969 = vmatpush2.bf16.msra.mxu0 0
  %3970 = vmatprep.subr.bf16.mxu0 0
  %3971 = vmatpush2.bf16.msra.mxu0 0
  %3972 = vmatprep.subr.bf16.mxu0 0
  %3973 = vmatpush2.bf16.msra.mxu0 0
  %3974 = vmatprep.mubr.bf16.mxu0 0
  %3975 = vmatmul.mubr.bf16.gmra.mxu0 %v3749
  %v3976 = vpop.f32.mrf.mxu0
  %v3977 = vadd.f32 0.0, %v3976
  %v3978 = vpop.f32.mrf.mxu0
  %v3979 = vadd.f32 0.0, %v3978
  %v3980 = vpop.f32.mrf.mxu0
  %v3981 = vpop.f32.mrf.mxu0
  %3982 = vdwg.mxu0
  %3983 = vmatprep.subr.bf16.mxu0 %v3909
  %3984 = vmatpush1.bf16.msra.mxu0 %v3908
  %3985 = vmatprep.subr.bf16.mxu0 %v3905
  %3986 = vmatpush1.bf16.msra.mxu0 %v3904
  %3987 = vmatprep.subr.bf16.mxu0 %v3901
  %3988 = vmatpush1.bf16.msra.mxu0 %v3900
  %3989 = vmatprep.subr.bf16.mxu0 %v3897
  %3990 = vmatpush1.bf16.msra.mxu0 %v3896
  %3991 = vmatprep.subr.bf16.mxu0 %v3893
  %3992 = vmatpush1.bf16.msra.mxu0 %v3892
  %3993 = vmatprep.subr.bf16.mxu0 %v3889
  %3994 = vmatpush1.bf16.msra.mxu0 %v3888
  %3995 = vmatprep.subr.bf16.mxu0 %v3885
  %3996 = vmatpush1.bf16.msra.mxu0 %v3884
  %3997 = vmatprep.subr.bf16.mxu0 %v3881
  %3998 = vmatpush1.bf16.msra.mxu0 %v3880
  %3999 = vmatprep.subr.bf16.mxu0 0
  %4000 = vmatpush2.bf16.msra.mxu0 0
  %4001 = vmatprep.subr.bf16.mxu0 0
  %4002 = vmatpush2.bf16.msra.mxu0 0
  %4003 = vmatprep.subr.bf16.mxu0 0
  %4004 = vmatpush2.bf16.msra.mxu0 0
  %4005 = vmatprep.subr.bf16.mxu0 0
  %4006 = vmatpush2.bf16.msra.mxu0 0
  %4007 = vmatprep.subr.bf16.mxu0 0
  %4008 = vmatpush2.bf16.msra.mxu0 0
  %4009 = vmatprep.subr.bf16.mxu0 0
  %4010 = vmatpush2.bf16.msra.mxu0 0
  %4011 = vmatprep.subr.bf16.mxu0 0
  %4012 = vmatpush2.bf16.msra.mxu0 0
  %4013 = vmatprep.subr.bf16.mxu0 0
  %4014 = vmatpush2.bf16.msra.mxu0 0
  %4015 = vmatprep.mubr.bf16.mxu0 0
  %4016 = vmatmul.mubr.bf16.gmra.mxu0 %v3749
  %v4017 = vpop.f32.mrf.mxu0
  %v4018 = vadd.f32 0.0, %v4017
  %v4019 = vpop.f32.mrf.mxu0
  %v4020 = vadd.f32 0.0, %v4019
  %v4021 = vpop.f32.mrf.mxu0
  %v4022 = vpop.f32.mrf.mxu0
  %4023 = vdwg.mxu0
  %v4024 = vadd.f32 %v3745, %v3977
  %v4025 = vadd.f32 %v3746, %v3979
  %v4026 = vadd.f32 %v3747, %v4018
  %v4027 = vadd.f32 %v3748, %v4020
  %v4028 = vmul.f32 %v4024, 0.5
  %v4029 = vtanh.pop %v4028
  %v4030 = vmul.f32 %v4029, 0.5
  %v4031 = vadd.f32 %v4030, 0.5
  %v4032 = vmul.f32 %v4025, 0.5
  %v4033 = vtanh.pop %v4032
  %v4034 = vmul.f32 %v4033, 0.5
  %v4035 = vadd.f32 %v4034, 0.5
  %v4036 = vtanh.pop %v4026
  %v4037 = vmul.f32 %v4027, 0.5
  %v4038 = vtanh.pop %v4037
  %v4039 = vmul.f32 %v4038, 0.5
  %v4040 = vadd.f32 %v4039, 0.5
  %v4041 = vmul.f32 %v4035, %v3740
  %v4042 = vmul.f32 %v4031, %v4036
  %v4043 = vadd.f32 %v4041, %v4042
  %v4044 = vtanh.pop %v4043
  %v4045 = vmul.f32 %v4040, %v4044
  %s4046 = scalar_lea.vmem [#allocation3], 48
  %4047 = vst [vmem:[%s4046] sm:$0xff] %v4045
  %v4048 = vld [vmem:[#allocation4] sm:$0xff]
  %v4049 = vld [vmem:[#allocation4 + $0x8] sm:$0xff]
  %v4050 = vld [vmem:[#allocation4 + $0x10] sm:$0xff]
  %v4051 = vld [vmem:[#allocation4 + $0x18] sm:$0xff]
  %v4052 = vpack.c.bf16 %v4045, %v4045
  %v4053 = vld [vmem:[%s7] sm:$0xff]
  %v4054 = vld [vmem:[%s7 + $0x8] sm:$0xff]
  %v4055 = vld [vmem:[%s7 + $0x10] sm:$0xff]
  %v4056 = vld [vmem:[%s7 + $0x18] sm:$0xff]
  %v4057 = vld [vmem:[%s7 + $0x20] sm:$0xff]
  %v4058 = vld [vmem:[%s7 + $0x28] sm:$0xff]
  %v4059 = vld [vmem:[%s7 + $0x30] sm:$0xff]
  %v4060 = vld [vmem:[%s7 + $0x38] sm:$0xff]
  %v4061 = vld [vmem:[%s7 + $0x40] sm:$0xff]
  %v4062 = vld [vmem:[%s7 + $0x48] sm:$0xff]
  %v4063 = vld [vmem:[%s7 + $0x50] sm:$0xff]
  %v4064 = vld [vmem:[%s7 + $0x58] sm:$0xff]
  %v4065 = vld [vmem:[%s7 + $0x60] sm:$0xff]
  %v4066 = vld [vmem:[%s7 + $0x68] sm:$0xff]
  %v4067 = vld [vmem:[%s7 + $0x70] sm:$0xff]
  %v4068 = vld [vmem:[%s7 + $0x78] sm:$0xff]
  %v4069 = vld [vmem:[%s7 + $0x80] sm:$0xff]
  %v4070 = vld [vmem:[%s7 + $0x88] sm:$0xff]
  %v4071 = vld [vmem:[%s7 + $0x90] sm:$0xff]
  %v4072 = vld [vmem:[%s7 + $0x98] sm:$0xff]
  %v4073 = vld [vmem:[%s7 + $0xa0] sm:$0xff]
  %v4074 = vld [vmem:[%s7 + $0xa8] sm:$0xff]
  %v4075 = vld [vmem:[%s7 + $0xb0] sm:$0xff]
  %v4076 = vld [vmem:[%s7 + $0xb8] sm:$0xff]
  %v4077 = vld [vmem:[%s7 + $0xc0] sm:$0xff]
  %v4078 = vld [vmem:[%s7 + $0xc8] sm:$0xff]
  %v4079 = vld [vmem:[%s7 + $0xd0] sm:$0xff]
  %v4080 = vld [vmem:[%s7 + $0xd8] sm:$0xff]
  %v4081 = vld [vmem:[%s7 + $0xe0] sm:$0xff]
  %v4082 = vld [vmem:[%s7 + $0xe8] sm:$0xff]
  %v4083 = vld [vmem:[%s7 + $0xf0] sm:$0xff]
  %v4084 = vld [vmem:[%s7 + $0xf8] sm:$0xff]
  %v4117 = vunpack.c.l.b16 %v4053
  %v4118 = vunpack.c.h.b16 %v4053
  %v4119 = vunpack.c.l.b16 %v4054
  %v4120 = vunpack.c.h.b16 %v4054
  %v4121 = vunpack.c.l.b16 %v4055
  %v4122 = vunpack.c.h.b16 %v4055
  %v4123 = vunpack.c.l.b16 %v4056
  %v4124 = vunpack.c.h.b16 %v4056
  %v4125 = vunpack.c.l.b16 %v4057
  %v4126 = vunpack.c.h.b16 %v4057
  %v4127 = vunpack.c.l.b16 %v4058
  %v4128 = vunpack.c.h.b16 %v4058
  %v4129 = vunpack.c.l.b16 %v4059
  %v4130 = vunpack.c.h.b16 %v4059
  %v4131 = vunpack.c.l.b16 %v4060
  %v4132 = vunpack.c.h.b16 %v4060
  %v4133 = vunpack.c.l.b16 %v4061
  %v4134 = vunpack.c.h.b16 %v4061
  %v4135 = vunpack.c.l.b16 %v4062
  %v4136 = vunpack.c.h.b16 %v4062
  %v4137 = vunpack.c.l.b16 %v4063
  %v4138 = vunpack.c.h.b16 %v4063
  %v4139 = vunpack.c.l.b16 %v4064
  %v4140 = vunpack.c.h.b16 %v4064
  %v4141 = vunpack.c.l.b16 %v4065
  %v4142 = vunpack.c.h.b16 %v4065
  %v4143 = vunpack.c.l.b16 %v4066
  %v4144 = vunpack.c.h.b16 %v4066
  %v4145 = vunpack.c.l.b16 %v4067
  %v4146 = vunpack.c.h.b16 %v4067
  %v4147 = vunpack.c.l.b16 %v4068
  %v4148 = vunpack.c.h.b16 %v4068
  %v4149 = vunpack.c.l.b16 %v4069
  %v4150 = vunpack.c.h.b16 %v4069
  %v4151 = vunpack.c.l.b16 %v4070
  %v4152 = vunpack.c.h.b16 %v4070
  %v4153 = vunpack.c.l.b16 %v4071
  %v4154 = vunpack.c.h.b16 %v4071
  %v4155 = vunpack.c.l.b16 %v4072
  %v4156 = vunpack.c.h.b16 %v4072
  %v4157 = vunpack.c.l.b16 %v4073
  %v4158 = vunpack.c.h.b16 %v4073
  %v4159 = vunpack.c.l.b16 %v4074
  %v4160 = vunpack.c.h.b16 %v4074
  %v4161 = vunpack.c.l.b16 %v4075
  %v4162 = vunpack.c.h.b16 %v4075
  %v4163 = vunpack.c.l.b16 %v4076
  %v4164 = vunpack.c.h.b16 %v4076
  %v4165 = vunpack.c.l.b16 %v4077
  %v4166 = vunpack.c.h.b16 %v4077
  %v4167 = vunpack.c.l.b16 %v4078
  %v4168 = vunpack.c.h.b16 %v4078
  %v4169 = vunpack.c.l.b16 %v4079
  %v4170 = vunpack.c.h.b16 %v4079
  %v4171 = vunpack.c.l.b16 %v4080
  %v4172 = vunpack.c.h.b16 %v4080
  %v4173 = vunpack.c.l.b16 %v4081
  %v4174 = vunpack.c.h.b16 %v4081
  %v4175 = vunpack.c.l.b16 %v4082
  %v4176 = vunpack.c.h.b16 %v4082
  %v4177 = vunpack.c.l.b16 %v4083
  %v4178 = vunpack.c.h.b16 %v4083
  %v4179 = vunpack.c.l.b16 %v4084
  %v4180 = vunpack.c.h.b16 %v4084
  %v4181 = vpack.c.b16 %v4121, %v4117
  %v4182 = vpack.c.b16 %v4122, %v4118
  %v4183 = vpack.c.b16 %v4123, %v4119
  %v4184 = vpack.c.b16 %v4124, %v4120
  %v4185 = vpack.c.b16 %v4129, %v4125
  %v4186 = vpack.c.b16 %v4130, %v4126
  %v4187 = vpack.c.b16 %v4131, %v4127
  %v4188 = vpack.c.b16 %v4132, %v4128
  %v4189 = vpack.c.b16 %v4137, %v4133
  %v4190 = vpack.c.b16 %v4138, %v4134
  %v4191 = vpack.c.b16 %v4139, %v4135
  %v4192 = vpack.c.b16 %v4140, %v4136
  %v4193 = vpack.c.b16 %v4145, %v4141
  %v4194 = vpack.c.b16 %v4146, %v4142
  %v4195 = vpack.c.b16 %v4147, %v4143
  %v4196 = vpack.c.b16 %v4148, %v4144
  %v4197 = vpack.c.b16 %v4153, %v4149
  %v4198 = vpack.c.b16 %v4154, %v4150
  %v4199 = vpack.c.b16 %v4155, %v4151
  %v4200 = vpack.c.b16 %v4156, %v4152
  %v4201 = vpack.c.b16 %v4161, %v4157
  %v4202 = vpack.c.b16 %v4162, %v4158
  %v4203 = vpack.c.b16 %v4163, %v4159
  %v4204 = vpack.c.b16 %v4164, %v4160
  %v4205 = vpack.c.b16 %v4169, %v4165
  %v4206 = vpack.c.b16 %v4170, %v4166
  %v4207 = vpack.c.b16 %v4171, %v4167
  %v4208 = vpack.c.b16 %v4172, %v4168
  %v4209 = vpack.c.b16 %v4177, %v4173
  %v4210 = vpack.c.b16 %v4178, %v4174
  %v4211 = vpack.c.b16 %v4179, %v4175
  %v4212 = vpack.c.b16 %v4180, %v4176
  %4245 = vmatprep.subr.bf16.mxu0 %v4210
  %4246 = vmatpush1.bf16.msra.mxu0 %v4209
  %4247 = vmatprep.subr.bf16.mxu0 %v4206
  %4248 = vmatpush1.bf16.msra.mxu0 %v4205
  %4249 = vmatprep.subr.bf16.mxu0 %v4202
  %4250 = vmatpush1.bf16.msra.mxu0 %v4201
  %4251 = vmatprep.subr.bf16.mxu0 %v4198
  %4252 = vmatpush1.bf16.msra.mxu0 %v4197
  %4253 = vmatprep.subr.bf16.mxu0 %v4194
  %4254 = vmatpush1.bf16.msra.mxu0 %v4193
  %4255 = vmatprep.subr.bf16.mxu0 %v4190
  %4256 = vmatpush1.bf16.msra.mxu0 %v4189
  %4257 = vmatprep.subr.bf16.mxu0 %v4186
  %4258 = vmatpush1.bf16.msra.mxu0 %v4185
  %4259 = vmatprep.subr.bf16.mxu0 %v4182
  %4260 = vmatpush1.bf16.msra.mxu0 %v4181
  %4261 = vmatprep.subr.bf16.mxu0 0
  %4262 = vmatpush2.bf16.msra.mxu0 0
  %4263 = vmatprep.subr.bf16.mxu0 0
  %4264 = vmatpush2.bf16.msra.mxu0 0
  %4265 = vmatprep.subr.bf16.mxu0 0
  %4266 = vmatpush2.bf16.msra.mxu0 0
  %4267 = vmatprep.subr.bf16.mxu0 0
  %4268 = vmatpush2.bf16.msra.mxu0 0
  %4269 = vmatprep.subr.bf16.mxu0 0
  %4270 = vmatpush2.bf16.msra.mxu0 0
  %4271 = vmatprep.subr.bf16.mxu0 0
  %4272 = vmatpush2.bf16.msra.mxu0 0
  %4273 = vmatprep.subr.bf16.mxu0 0
  %4274 = vmatpush2.bf16.msra.mxu0 0
  %4275 = vmatprep.subr.bf16.mxu0 0
  %4276 = vmatpush2.bf16.msra.mxu0 0
  %4277 = vmatprep.mubr.bf16.mxu0 0
  %4278 = vmatmul.mubr.bf16.gmra.mxu0 %v4052
  %v4279 = vpop.f32.mrf.mxu0
  %v4280 = vadd.f32 0.0, %v4279
  %v4281 = vpop.f32.mrf.mxu0
  %v4282 = vadd.f32 0.0, %v4281
  %v4283 = vpop.f32.mrf.mxu0
  %v4284 = vpop.f32.mrf.mxu0
  %4285 = vdwg.mxu0
  %4286 = vmatprep.subr.bf16.mxu0 %v4212
  %4287 = vmatpush1.bf16.msra.mxu0 %v4211
  %4288 = vmatprep.subr.bf16.mxu0 %v4208
  %4289 = vmatpush1.bf16.msra.mxu0 %v4207
  %4290 = vmatprep.subr.bf16.mxu0 %v4204
  %4291 = vmatpush1.bf16.msra.mxu0 %v4203
  %4292 = vmatprep.subr.bf16.mxu0 %v4200
  %4293 = vmatpush1.bf16.msra.mxu0 %v4199
  %4294 = vmatprep.subr.bf16.mxu0 %v4196
  %4295 = vmatpush1.bf16.msra.mxu0 %v4195
  %4296 = vmatprep.subr.bf16.mxu0 %v4192
  %4297 = vmatpush1.bf16.msra.mxu0 %v4191
  %4298 = vmatprep.subr.bf16.mxu0 %v4188
  %4299 = vmatpush1.bf16.msra.mxu0 %v4187
  %4300 = vmatprep.subr.bf16.mxu0 %v4184
  %4301 = vmatpush1.bf16.msra.mxu0 %v4183
  %4302 = vmatprep.subr.bf16.mxu0 0
  %4303 = vmatpush2.bf16.msra.mxu0 0
  %4304 = vmatprep.subr.bf16.mxu0 0
  %4305 = vmatpush2.bf16.msra.mxu0 0
  %4306 = vmatprep.subr.bf16.mxu0 0
  %4307 = vmatpush2.bf16.msra.mxu0 0
  %4308 = vmatprep.subr.bf16.mxu0 0
  %4309 = vmatpush2.bf16.msra.mxu0 0
  %4310 = vmatprep.subr.bf16.mxu0 0
  %4311 = vmatpush2.bf16.msra.mxu0 0
  %4312 = vmatprep.subr.bf16.mxu0 0
  %4313 = vmatpush2.bf16.msra.mxu0 0
  %4314 = vmatprep.subr.bf16.mxu0 0
  %4315 = vmatpush2.bf16.msra.mxu0 0
  %4316 = vmatprep.subr.bf16.mxu0 0
  %4317 = vmatpush2.bf16.msra.mxu0 0
  %4318 = vmatprep.mubr.bf16.mxu0 0
  %4319 = vmatmul.mubr.bf16.gmra.mxu0 %v4052
  %v4320 = vpop.f32.mrf.mxu0
  %v4321 = vadd.f32 0.0, %v4320
  %v4322 = vpop.f32.mrf.mxu0
  %v4323 = vadd.f32 0.0, %v4322
  %v4324 = vpop.f32.mrf.mxu0
  %v4325 = vpop.f32.mrf.mxu0
  %4326 = vdwg.mxu0
  %v4327 = vadd.f32 %v4048, %v4280
  %v4328 = vadd.f32 %v4049, %v4282
  %v4329 = vadd.f32 %v4050, %v4321
  %v4330 = vadd.f32 %v4051, %v4323
  %v4331 = vmul.f32 %v4327, 0.5
  %v4332 = vtanh.pop %v4331
  %v4333 = vmul.f32 %v4332, 0.5
  %v4334 = vadd.f32 %v4333, 0.5
  %v4335 = vmul.f32 %v4328, 0.5
  %v4336 = vtanh.pop %v4335
  %v4337 = vmul.f32 %v4336, 0.5
  %v4338 = vadd.f32 %v4337, 0.5
  %v4339 = vtanh.pop %v4329
  %v4340 = vmul.f32 %v4330, 0.5
  %v4341 = vtanh.pop %v4340
  %v4342 = vmul.f32 %v4341, 0.5
  %v4343 = vadd.f32 %v4342, 0.5
  %v4344 = vmul.f32 %v4338, %v4043
  %v4345 = vmul.f32 %v4334, %v4339
  %v4346 = vadd.f32 %v4344, %v4345
  %v4347 = vtanh.pop %v4346
  %v4348 = vmul.f32 %v4343, %v4347
  %s4349 = scalar_lea.vmem [#allocation3], 56
  %4350 = vst [vmem:[%s4349] sm:$0xff] %v4348
  %v4351 = vld [vmem:[#allocation3] sm:$0xff]
  %v4352 = vld [vmem:[#allocation3 + $0x8] sm:$0xff]
  %v4353 = vld [vmem:[#allocation3 + $0x10] sm:$0xff]
  %v4354 = vld [vmem:[#allocation3 + $0x18] sm:$0xff]
  %v4355 = vld [vmem:[#allocation3 + $0x20] sm:$0xff]
  %v4356 = vld [vmem:[#allocation3 + $0x28] sm:$0xff]
  %v4357 = vld [vmem:[#allocation3 + $0x30] sm:$0xff]
  %v4358 = vld [vmem:[#allocation3 + $0x38] sm:$0xff]
  %v4359 = vpack.c.bf16 %v4352, %v4351
  %v4360 = vpack.c.bf16 %v4354, %v4353
  %v4361 = vpack.c.bf16 %v4356, %v4355
  %v4362 = vpack.c.bf16 %v4358, %v4357
  %v4363 = vld [vmem:[%s9] sm:$0xf]
  %v4364 = vld [vmem:[%s9 + $0x4] sm:$0xf]
  %v4365 = vld [vmem:[%s9 + $0x8] sm:$0xf]
  %v4366 = vld [vmem:[%s9 + $0xc] sm:$0xf]
  %v4367 = vld [vmem:[%s9 + $0x10] sm:$0xf]
  %v4368 = vld [vmem:[%s9 + $0x14] sm:$0xf]
  %v4369 = vld [vmem:[%s9 + $0x18] sm:$0xf]
  %v4370 = vld [vmem:[%s9 + $0x1c] sm:$0xf]
  %v4371 = vld [vmem:[%s9 + $0x20] sm:$0xf]
  %v4372 = vld [vmem:[%s9 + $0x24] sm:$0xf]
  %v4373 = vld [vmem:[%s9 + $0x28] sm:$0xf]
  %v4374 = vld [vmem:[%s9 + $0x2c] sm:$0xf]
  %v4375 = vld [vmem:[%s9 + $0x30] sm:$0xf]
  %v4376 = vld [vmem:[%s9 + $0x34] sm:$0xf]
  %v4377 = vld [vmem:[%s9 + $0x38] sm:$0xf]
  %v4378 = vld [vmem:[%s9 + $0x3c] sm:$0xf]
  %v4379 = vld [vmem:[%s10] sm:$0x1]
  %v4381 = vlaneseq
  %v4382 = vshrl.u32 %v4381, 7
  %v4383 = vsub.s32 0, %v4382
  %v4384 = vrot.slane %v4379, %v4383
  %v4402 = vunpack.c.l.b16 %v4363
  %v4403 = vunpack.c.l.b16 %v4364
  %v4404 = vunpack.c.l.b16 %v4365
  %v4405 = vunpack.c.l.b16 %v4366
  %v4406 = vunpack.c.l.b16 %v4367
  %v4407 = vunpack.c.l.b16 %v4368
  %v4408 = vunpack.c.l.b16 %v4369
  %v4409 = vunpack.c.l.b16 %v4370
  %v4410 = vunpack.c.l.b16 %v4371
  %v4411 = vunpack.c.l.b16 %v4372
  %v4412 = vunpack.c.l.b16 %v4373
  %v4413 = vunpack.c.l.b16 %v4374
  %v4414 = vunpack.c.l.b16 %v4375
  %v4415 = vunpack.c.l.b16 %v4376
  %v4416 = vunpack.c.l.b16 %v4377
  %v4417 = vunpack.c.l.b16 %v4378
  %v4418 = vpack.c.b16 %v4403, %v4402
  %v4419 = vpack.c.b16 %v4405, %v4404
  %v4420 = vpack.c.b16 %v4407, %v4406
  %v4421 = vpack.c.b16 %v4409, %v4408
  %v4422 = vpack.c.b16 %v4411, %v4410
  %v4423 = vpack.c.b16 %v4413, %v4412
  %v4424 = vpack.c.b16 %v4415, %v4414
  %v4425 = vpack.c.b16 %v4417, %v4416
  %4434 = vmatprep.subr.bf16.mxu0 0
  %4435 = vmatpush1.bf16.msra.mxu0 %v4425
  %4436 = vmatprep.subr.bf16.mxu0 0
  %4437 = vmatpush1.bf16.msra.mxu0 %v4424
  %4438 = vmatprep.subr.bf16.mxu0 0
  %4439 = vmatpush1.bf16.msra.mxu0 %v4423
  %4440 = vmatprep.subr.bf16.mxu0 0
  %4441 = vmatpush1.bf16.msra.mxu0 %v4422
  %4442 = vmatprep.subr.bf16.mxu0 0
  %4443 = vmatpush1.bf16.msra.mxu0 %v4421
  %4444 = vmatprep.subr.bf16.mxu0 0
  %4445 = vmatpush1.bf16.msra.mxu0 %v4420
  %4446 = vmatprep.subr.bf16.mxu0 0
  %4447 = vmatpush1.bf16.msra.mxu0 %v4419
  %4448 = vmatprep.subr.bf16.mxu0 0
  %4449 = vmatpush1.bf16.msra.mxu0 %v4418
  %4450 = vmatprep.subr.bf16.mxu0 0
  %4451 = vmatpush2.bf16.msra.mxu0 0
  %4452 = vmatprep.subr.bf16.mxu0 0
  %4453 = vmatpush2.bf16.msra.mxu0 0
  %4454 = vmatprep.subr.bf16.mxu0 0
  %4455 = vmatpush2.bf16.msra.mxu0 0
  %4456 = vmatprep.subr.bf16.mxu0 0
  %4457 = vmatpush2.bf16.msra.mxu0 0
  %4458 = vmatprep.subr.bf16.mxu0 0
  %4459 = vmatpush2.bf16.msra.mxu0 0
  %4460 = vmatprep.subr.bf16.mxu0 0
  %4461 = vmatpush2.bf16.msra.mxu0 0
  %4462 = vmatprep.subr.bf16.mxu0 0
  %4463 = vmatpush2.bf16.msra.mxu0 0
  %4464 = vmatprep.subr.bf16.mxu0 0
  %4465 = vmatpush2.bf16.msra.mxu0 0
  %4466 = vmatprep.mubr.bf16.mxu0 0
  %4467 = vmatmul.mubr.bf16.gmra.mxu0 %v4359
  %v4468 = vpop.f32.mrf.mxu0
  %v4469 = vadd.f32 %v4384, %v4468
  %v4470 = vpop.f32.mrf.mxu0
  %v4471 = vpop.f32.mrf.mxu0
  %v4472 = vadd.f32 %v4384, %v4471
  %v4473 = vpop.f32.mrf.mxu0
  %4474 = vmatprep.mubr.bf16.mxu0 0
  %4475 = vmatmul.mubr.bf16.gmra.mxu0 %v4360
  %v4476 = vpop.f32.mrf.mxu0
  %v4477 = vadd.f32 %v4384, %v4476
  %v4478 = vpop.f32.mrf.mxu0
  %v4479 = vpop.f32.mrf.mxu0
  %v4480 = vadd.f32 %v4384, %v4479
  %v4481 = vpop.f32.mrf.mxu0
  %4482 = vmatprep.mubr.bf16.mxu0 0
  %4483 = vmatmul.mubr.bf16.gmra.mxu0 %v4361
  %v4484 = vpop.f32.mrf.mxu0
  %v4485 = vadd.f32 %v4384, %v4484
  %v4486 = vpop.f32.mrf.mxu0
  %v4487 = vpop.f32.mrf.mxu0
  %v4488 = vadd.f32 %v4384, %v4487
  %v4489 = vpop.f32.mrf.mxu0
  %4490 = vmatprep.mubr.bf16.mxu0 0
  %4491 = vmatmul.mubr.bf16.gmra.mxu0 %v4362
  %v4492 = vpop.f32.mrf.mxu0
  %v4493 = vadd.f32 %v4384, %v4492
  %v4494 = vpop.f32.mrf.mxu0
  %v4495 = vpop.f32.mrf.mxu0
  %v4496 = vadd.f32 %v4384, %v4495
  %v4497 = vpop.f32.mrf.mxu0
  %4498 = vdwg.mxu0
  %4499 = vst [vmem:[%s11] sm:$0xff] %v4469
  %4500 = vst [vmem:[%s11 + $0x8] sm:$0xff] %v4472
  %4501 = vst [vmem:[%s11 + $0x10] sm:$0xff] %v4477
  %4502 = vst [vmem:[%s11 + $0x18] sm:$0xff] %v4480
  %4503 = vst [vmem:[%s11 + $0x20] sm:$0xff] %v4485
  %4504 = vst [vmem:[%s11 + $0x28] sm:$0xff] %v4488
  %4505 = vst [vmem:[%s11 + $0x30] sm:$0xff] %v4493
  %4506 = vst [vmem:[%s11 + $0x38] sm:$0xff] %v4496
  // Predicated region
  $region46: #{lstm_autoencoder_forward.1} parent=0 // pred_check
    _
  $region47: #{lstm_autoencoder_forward.1} parent=0 // pred_check_branch
    %4508 = sbr.rel (0) target = $region49
  $region48: #{lstm_autoencoder_forward.1} parent=0 // pred_region
    _
  $region49: #{lstm_autoencoder_forward.1} parent=0 // pred_fallthru
    _
  // Predicated region
  $region50: #{lstm_autoencoder_forward.1} parent=0 // pred_check
    _
  $region51: #{lstm_autoencoder_forward.1} parent=0 // pred_check_branch
    %4510 = sbr.rel (0) target = $region53
  $region52: #{lstm_autoencoder_forward.1} parent=0 // pred_region
    _
  $region53: #{lstm_autoencoder_forward.1} parent=0 // pred_fallthru
    _
  // Predicated region
  $region54: #{lstm_autoencoder_forward.1} parent=0 // pred_check
    _
  $region55: #{lstm_autoencoder_forward.1} parent=0 // pred_check_branch
    %4512 = sbr.rel (0) target = $region57
  $region56: #{lstm_autoencoder_forward.1} parent=0 // pred_region
    _
  $region57: #{lstm_autoencoder_forward.1} parent=0 // pred_fallthru
    _
  // Predicated region
  $region58: #{lstm_autoencoder_forward.1} parent=0 // pred_check
    _
  $region59: #{lstm_autoencoder_forward.1} parent=0 // pred_check_branch
    %4514 = sbr.rel (0) target = $region61
  $region60: #{lstm_autoencoder_forward.1} parent=0 // pred_region
    _
  $region61: #{lstm_autoencoder_forward.1} parent=0 // pred_fallthru
    _

</llo_original>
